<compile_context>
chip_gen: v5e
topology: v5e:2x2
jax: 0.10.0
libtpu: 0.0.40
codegen_flags: <defaults>
</compile_context>

<pallas_src>
import jax
import jax.numpy as jnp
from jax.experimental import pallas as pl
from jax.experimental.pallas import tpu as pltpu

LEAKY_SLOPE = 0.1
BN_EPS = 1e-5


# ---------------------------------------------------------------- helpers ----


def _rup(n, m):
    return -(-n // m) * m


def _largest_divisor_leq(n, limit):
    for c in range(min(n, limit), 0, -1):
        if n % c == 0:
            return c
    return 1


def _choose_row_tile(m, target=1024):
    """Largest divisor of m <= target (prefer multiples of 16/8, prefer >=2 grid steps)."""
    for mult in (16, 8):
        cands = [c for c in range(mult, min(m, target) + 1, mult) if m % c == 0]
        if cands:
            tm = max(cands)
            if m // tm < 2:
                smaller = [c for c in cands if m // c >= 2 and c >= 128]
                if smaller:
                    tm = max(smaller)
            return tm
    if m <= target:
        return m
    return _largest_divisor_leq(m, target)


def _choose_h_tile(h, w, target_rows=1024):
    """Row-band height for pass 2: TH*W ~ up to ~1024 MXU rows, TH | H."""
    cands = [c for c in range(1, h + 1) if h % c == 0 and c * w <= target_rows]
    if not cands:
        return 1
    th = max(cands)
    if h // th < 2:
        multi = [c for c in cands if h // c >= 2 and c * w >= 128]
        if multi:
            th = max(multi)
    return th


def _vmem_limit_bytes():
    """Generation-aware VMEM budget: ~96 MiB on v5e/v6e, ~48 MiB on v7x."""
    try:
        cap = pltpu.get_tpu_info().vmem_capacity_bytes
    except Exception:
        cap = 64 * 1024 * 1024
    return int(cap * 3 // 4)


def _tile_stats(y):
    """(rows, C) f32 -> (2, C): row0 = sum, row1 = centered sum-of-squares (Welford)."""
    n = y.shape[0]
    s = jnp.sum(y, axis=0, keepdims=True)
    d = y - s * (1.0 / n)
    m2 = jnp.sum(d * d, axis=0, keepdims=True)
    return jnp.concatenate([s, m2], axis=0)


def _finalize_bn(st, gamma, beta, rows_per_tile):
    """Chan-combine per-tile (sum, centered-SS) partials; fold gamma/beta into scale/bias."""
    st = st.astype(jnp.float32)
    g = st.shape[0]
    m = g * rows_per_tile
    sums = st[:, 0, :]                                      # (G, C)
    m2s = st[:, 1, :]                                       # (G, C)
    mean = jnp.sum(sums, axis=0) / m
    tile_mean = sums / rows_per_tile
    var = (jnp.sum(m2s, axis=0)
           + rows_per_tile * jnp.sum(jnp.square(tile_mean - mean[None, :]), axis=0)) / m
    var = jnp.maximum(var, 0.0)
    scale = gamma * jax.lax.rsqrt(var + BN_EPS)
    bias = beta - mean * scale
    return (scale.reshape(1, -1).astype(jnp.float32),
            bias.reshape(1, -1).astype(jnp.float32))


# ---------------------------------------------------------------- kernels ----


def _conv1x1_stats_kernel(x_ref, w_ref, y_ref, st_ref):
    # x: (TM, Cpad) f32   w: (Cpad, Fpad) bf16   y: (TM, Fpad) bf16   st: (1, 2, Fpad) f32
    y = jnp.dot(x_ref[...].astype(jnp.bfloat16), w_ref[...],
                preferred_element_type=jnp.float32)
    y_ref[...] = y.astype(y_ref.dtype)
    st_ref[0] = _tile_stats(y)                      # BN1 partials from the f32 accumulator


def _conv3x3_stats_kernel(y1_ref, y1_hbm, w2_ref, s1_ref, b1_ref,
                          y2_ref, st2_ref, a1_ref, halo_ref, sem):
    # y1_ref : (1, TH, W, Fpad) bf16  auto-pipelined interior row band of conv1 output
    # y1_hbm : (N, H, W, Fpad)  bf16  raw HBM ref (halo rows fetched manually)
    # w2_ref : (3, 3*Fpad, F2pad) bf16  per-kh weight slabs (kw folded into K)
    # s1/b1  : (1, Fpad) f32  folded BN1 scale/bias
    # y2_ref : (1, TH, W, F2pad) bf16 raw conv2 output
    # st2_ref: (1, 1, 2, F2pad) f32   BN2 partials
    # a1_ref : (TH+2, W+2, Fpad) bf16 activated halo'd band (zero borders = conv2 padding)
    # halo   : (2, W, Fpad) bf16      DMA landing buffer (row above / row below)
    n = pl.program_id(0)
    r = pl.program_id(1)
    nrow = pl.num_programs(1)
    th = y1_ref.shape[1]
    w = y1_ref.shape[2]
    fpad = y1_ref.shape[3]
    f2pad = y2_ref.shape[3]

    # Kick off the 1-row halo DMAs early; they overlap with the band's BN1+LeakyReLU.
    @pl.when(r > 0)
    def _():
        pltpu.make_async_copy(y1_hbm.at[n, pl.ds(r * th - 1, 1), :, :],
                              halo_ref.at[0:1], sem.at[0]).start()

    @pl.when(r < nrow - 1)
    def _():
        pltpu.make_async_copy(y1_hbm.at[n, pl.ds(r * th + th, 1), :, :],
                              halo_ref.at[1:2], sem.at[1]).start()

    def bn1_act(v):
        z = v.astype(jnp.float32) * s1_ref[...] + b1_ref[...]
        return jnp.where(z > 0, z, LEAKY_SLOPE * z).astype(jnp.bfloat16)

    # conv2's zero padding in W: border columns stay physically zero.
    zcol = jnp.zeros((th + 2, 1, fpad), jnp.bfloat16)
    a1_ref[:, 0:1, :] = zcol
    a1_ref[:, w + 1:w + 2, :] = zcol

    # Interior rows: BN1 affine + LeakyReLU on the auto-pipelined band.
    a1_ref[1:th + 1, 1:w + 1, :] = bn1_act(y1_ref[0])

    # Top halo row: neighbor row (DMA) or zeros at the image boundary.
    @pl.when(r > 0)
    def _():
        pltpu.make_async_copy(y1_hbm.at[n, pl.ds(r * th - 1, 1), :, :],
                              halo_ref.at[0:1], sem.at[0]).wait()
        a1_ref[0:1, 1:w + 1, :] = bn1_act(halo_ref[0:1])

    @pl.when(r == 0)
    def _():
        a1_ref[0:1, 1:w + 1, :] = jnp.zeros((1, w, fpad), jnp.bfloat16)

    # Bottom halo row.
    @pl.when(r < nrow - 1)
    def _():
        pltpu.make_async_copy(y1_hbm.at[n, pl.ds(r * th + th, 1), :, :],
                              halo_ref.at[1:2], sem.at[1]).wait()
        a1_ref[th + 1:th + 2, 1:w + 1, :] = bn1_act(halo_ref[1:2])

    @pl.when(r == nrow - 1)
    def _():
        a1_ref[th + 1:th + 2, 1:w + 1, :] = jnp.zeros((1, w, fpad), jnp.bfloat16)

    # 3x3 conv = 3 accumulated MXU matmuls, kw taps folded into the contraction (K=3*Fpad).
    acc = jnp.zeros((th * w, f2pad), jnp.float32)
    for kh in range(3):
        patch = jnp.concatenate(
            [a1_ref[kh:kh + th, 0:w, :],
             a1_ref[kh:kh + th, 1:w + 1, :],
             a1_ref[kh:kh + th, 2:w + 2, :]], axis=-1).reshape(th * w, 3 * fpad)
        acc = acc + jnp.dot(patch, w2_ref[kh], preferred_element_type=jnp.float32)

    y2_ref[0] = acc.reshape(th, w, f2pad).astype(y2_ref.dtype)
    st2_ref[0, 0] = _tile_stats(acc)                # BN2 partials from the f32 accumulator


def _bn_lrelu_res_kernel(y_ref, s_ref, b_ref, res_ref, o_ref):
    # y: (TM, F2pad) bf16 raw conv2   s/b: (1, F2pad) f32   res: (TM, F2pad) f32 input
    z = y_ref[...].astype(jnp.float32) * s_ref[...] + b_ref[...]
    z = jnp.where(z > 0, z, LEAKY_SLOPE * z)
    o_ref[...] = (z + res_ref[...]).astype(o_ref.dtype)


# ------------------------------------------------- ResidualBlock forward ----


def residual_block_forward(x_nchw, params):
    N, Cin, H, W = x_nchw.shape
    F = params["w1"].shape[0]          # torch conv1 weight: (F, Cin, 1, 1)
    F2 = params["w2"].shape[0]         # torch conv2 weight: (2F, F, 3, 3)
    assert F2 == Cin, "residual add requires input_dim == 2 * filters"
    M = N * H * W

    Cpad = _rup(Cin, 128)
    Fpad = _rup(F, 128)
    F2pad = _rup(F2, 128)              # == Cpad since F2 == Cin
    vmem_limit = _vmem_limit_bytes()

    # TODO(synk): if this block is stacked repeatedly, keep the surrounding graph NHWC so
    # the two full-array NCHW<->NHWC transposes below (XLA HBM round trips) disappear.
    x_nhwc = jnp.transpose(x_nchw, (0, 2, 3, 1)).astype(jnp.float32)
    x_flat = jnp.pad(x_nhwc.reshape(M, Cin), ((0, 0), (0, Cpad - Cin)))   # f32 residual

    # Weights / BN params, lane-padded, MXU layout.
    w1 = params["w1"].reshape(F, Cin).T                                   # (Cin, F)
    w1p = jnp.pad(w1, ((0, Cpad - Cin), (0, Fpad - F))).astype(jnp.bfloat16)
    g1 = jnp.pad(params["bn1_gamma"], (0, Fpad - F)).astype(jnp.float32)
    b1 = jnp.pad(params["bn1_beta"], (0, Fpad - F)).astype(jnp.float32)

    w2 = jnp.transpose(params["w2"], (2, 3, 1, 0))                        # (kh, kw, F, F2)
    w2 = jnp.pad(w2, ((0, 0), (0, 0), (0, Fpad - F), (0, F2pad - F2)))
    w2_slab = w2.reshape(3, 3 * Fpad, F2pad).astype(jnp.bfloat16)         # per-kh K=3*Fpad
    g2 = jnp.pad(params["bn2_gamma"], (0, F2pad - F2)).astype(jnp.float32)
    b2 = jnp.pad(params["bn2_beta"], (0, F2pad - F2)).astype(jnp.float32)

    # ---------- pass 1: 1x1 conv + per-tile BN1 partials (tiled over M) ----------
    TM = _choose_row_tile(M)
    G1 = M // TM
    y1_flat, st1 = pl.pallas_call(
        _conv1x1_stats_kernel,
        grid=(G1,),
        in_specs=[pl.BlockSpec((TM, Cpad), lambda i: (i, 0)),
                  pl.BlockSpec((Cpad, Fpad), lambda i: (0, 0))],
        out_specs=[pl.BlockSpec((TM, Fpad), lambda i: (i, 0)),
                   pl.BlockSpec((1, 2, Fpad), lambda i: (i, 0, 0))],
        out_shape=[jax.ShapeDtypeStruct((M, Fpad), jnp.bfloat16),
                   jax.ShapeDtypeStruct((G1, 2, Fpad), jnp.float32)],
        compiler_params=pltpu.CompilerParams(
            dimension_semantics=("parallel",), vmem_limit_bytes=vmem_limit),
    )(x_flat, w1p)

    scale1, bias1 = _finalize_bn(st1, g1, b1, TM)

    y1_nhwc = y1_flat.reshape(N, H, W, Fpad)     # layout-preserving (free) reshape

    # ---------- pass 2: fused BN1+LReLU + 3x3 conv (halo row bands) + BN2 partials ----
    TH = _choose_h_tile(H, W)
    R = H // TH
    y2, st2 = pl.pallas_call(
        _conv3x3_stats_kernel,
        grid=(N, R),
        in_specs=[pl.BlockSpec((1, TH, W, Fpad), lambda n, r: (n, r, 0, 0)),
                  pl.BlockSpec(memory_space=pl.ANY),   # same y1 array, raw HBM for halo DMA
                  pl.BlockSpec((3, 3 * Fpad, F2pad), lambda n, r: (0, 0, 0)),
                  pl.BlockSpec((1, Fpad), lambda n, r: (0, 0)),
                  pl.BlockSpec((1, Fpad), lambda n, r: (0, 0))],
        out_specs=[pl.BlockSpec((1, TH, W, F2pad), lambda n, r: (n, r, 0, 0)),
                   pl.BlockSpec((1, 1, 2, F2pad), lambda n, r: (n, r, 0, 0))],
        out_shape=[jax.ShapeDtypeStruct((N, H, W, F2pad), jnp.bfloat16),
                   jax.ShapeDtypeStruct((N, R, 2, F2pad), jnp.float32)],
        scratch_shapes=[pltpu.VMEM((TH + 2, W + 2, Fpad), jnp.bfloat16),
                        pltpu.VMEM((2, W, Fpad), jnp.bfloat16),
                        pltpu.SemaphoreType.DMA((2,))],
        compiler_params=pltpu.CompilerParams(
            dimension_semantics=("parallel", "parallel"),
            vmem_limit_bytes=vmem_limit),
    )(y1_nhwc, y1_nhwc, w2_slab, scale1, bias1)

    scale2, bias2 = _finalize_bn(st2.reshape(N * R, 2, F2pad), g2, b2, TH * W)

    # ---------- pass 3: BN2 + LeakyReLU + residual add (tiled over M) -----------------
    y2_flat = y2.reshape(M, F2pad)
    out_flat = pl.pallas_call(
        _bn_lrelu_res_kernel,
        grid=(G1,),
        in_specs=[pl.BlockSpec((TM, F2pad), lambda i: (i, 0)),
                  pl.BlockSpec((1, F2pad), lambda i: (0, 0)),
                  pl.BlockSpec((1, F2pad), lambda i: (0, 0)),
                  pl.BlockSpec((TM, F2pad), lambda i: (i, 0))],
        out_specs=pl.BlockSpec((TM, F2pad), lambda i: (i, 0)),
        out_shape=jax.ShapeDtypeStruct((M, F2pad), jnp.float32),
        compiler_params=pltpu.CompilerParams(
            dimension_semantics=("parallel",), vmem_limit_bytes=vmem_limit),
    )(y2_flat, scale2, bias2, x_flat)

    out = out_flat[:, :F2].reshape(N, H, W, F2)
    return jnp.transpose(out, (0, 3, 1, 2))


# ------------------------------------- deterministic synthetic parameters ----


def init_params(input_dim, filters, key):
    ks = jax.random.split(key, 6)
    s = 0.01
    return {
        "w1": s * jax.random.normal(ks[0], (filters, input_dim, 1, 1), jnp.float32),
        "bn1_gamma": s * jax.random.normal(ks[1], (filters,), jnp.float32),
        "bn1_beta": s * jax.random.normal(ks[2], (filters,), jnp.float32),
        "w2": s * jax.random.normal(ks[3], (2 * filters, filters, 3, 3), jnp.float32),
        "bn2_gamma": s * jax.random.normal(ks[4], (2 * filters,), jnp.float32),
        "bn2_beta": s * jax.random.normal(ks[5], (2 * filters,), jnp.float32),
        # running_mean / running_var are unused by the training-mode forward pass.
    }


if __name__ == "__main__":
    N, Cin, H, W = 2, 8, 16, 16
    filters = Cin // 2                        # 2*filters == Cin (residual add)

    key = jax.random.PRNGKey(0)
    kx, kp = jax.random.split(key)
    x = jax.random.normal(kx, (N, Cin, H, W), jnp.float32)
    params = init_params(Cin, filters, kp)

    out = jax.jit(residual_block_forward)(x, params)
    out = jax.block_until_ready(out)
    assert out.shape == (N, Cin, H, W) and out.dtype == jnp.float32
    assert bool(jnp.all(jnp.isfinite(out)))
    # Weights/BN params ~ N(0, 0.01): the BN'd conv branch is tiny, so the output must
    # stay close to the residual input (loose sanity check of the residual wiring).
    assert float(jnp.max(jnp.abs(out - x))) < 0.5
    print("KERNEL_OK")
</pallas_src>

<mosaic_0001>
module attributes {stable_mosaic.version = 11 : i64} {
  func.func @_conv1x1_stats_kernel(%arg0: i32, %arg1: memref<256x128xf32, #tpu.memory_space<vmem>>, %arg2: memref<128x128xbf16, #tpu.memory_space<vmem>>, %arg3: memref<256x128xbf16, #tpu.memory_space<vmem>>, %arg4: memref<1x2x128xf32, #tpu.memory_space<vmem>>) attributes {dimension_semantics = [#tpu.dimension_semantics<parallel>], iteration_bounds = array<i64: 2>, scalar_prefetch = 0 : i64, scratch_operands = 0 : i64, tpu.core_type = #tpu.core_type<tc>, window_params = [{transform_indices = @transform_0, window_bounds = array<i64: 256, 128>}, {pipeline_mode = #tpu.pipeline_mode<synchronous>, transform_indices = @transform_1, window_bounds = array<i64: 128, 128>}, {transform_indices = @transform_2, window_bounds = array<i64: 256, 128>}, {transform_indices = @transform_3, window_bounds = array<i64: 1, 2, 128>}]} {
    %c0 = arith.constant 0 : index
    %c0_0 = arith.constant 0 : index
    %0 = vector.load %arg1[%c0, %c0_0] : memref<256x128xf32, #tpu.memory_space<vmem>>, vector<256x128xf32>
    %1 = arith.truncf %0 : vector<256x128xf32> to vector<256x128xbf16>
    %c0_1 = arith.constant 0 : index
    %c0_2 = arith.constant 0 : index
    %2 = vector.load %arg2[%c0_1, %c0_2] : memref<128x128xbf16, #tpu.memory_space<vmem>>, vector<128x128xbf16>
    %cst = arith.constant dense<0.000000e+00> : vector<256x128xf32>
    %3 = tpu.matmul %1, %2, %cst {dimension_numbers = #tpu.dot_dimension_numbers<[1], [0], [0], [1], [0, 0, 1, 1], [], []>} : vector<256x128xbf16>, vector<128x128xbf16>, vector<256x128xf32> -> vector<256x128xf32>
    %4 = arith.truncf %3 : vector<256x128xf32> to vector<256x128xbf16>
    %c0_3 = arith.constant 0 : index
    %c0_4 = arith.constant 0 : index
    %5 = vector.load %arg3[%c0_3, %c0_4] : memref<256x128xbf16, #tpu.memory_space<vmem>>, vector<256x128xbf16>
    tpu.vector_store %arg3[%c0_3, %c0_4], %4 {strides = array<i32>} : memref<256x128xbf16, #tpu.memory_space<vmem>>, vector<256x128xbf16>,
    %cst_5 = arith.constant dense<0.000000e+00> : vector<128xf32>
    %6 = vector.multi_reduction <add>, %3, %cst_5 [0] : vector<256x128xf32> to vector<128xf32>
    %7 = vector.shape_cast %6 : vector<128xf32> to vector<1x128xf32>
    %cst_6 = arith.constant 3.906250e-03 : f32
    %8 = vector.broadcast %cst_6 : f32 to vector<1x128xf32>
    %9 = arith.mulf %7, %8 : vector<1x128xf32>
    %10 = vector.broadcast %9 : vector<1x128xf32> to vector<256x128xf32>
    %11 = arith.subf %3, %10 : vector<256x128xf32>
    %12 = arith.mulf %11, %11 : vector<256x128xf32>
    %cst_7 = arith.constant dense<0.000000e+00> : vector<128xf32>
    %13 = vector.multi_reduction <add>, %12, %cst_7 [0] : vector<256x128xf32> to vector<128xf32>
    %14 = vector.shape_cast %13 : vector<128xf32> to vector<1x128xf32>
    %15 = tpu.concatenate %7, %14 in 0 : vector<1x128xf32>, vector<1x128xf32> -> vector<2x128xf32>
    %c0_8 = arith.constant 0 : index
    %c0_9 = arith.constant 0 : index
    %c0_10 = arith.constant 0 : index
    %16 = vector.load %arg4[%c0_8, %c0_9, %c0_10] : memref<1x2x128xf32, #tpu.memory_space<vmem>>, vector<1x2x128xf32>
    %17 = vector.shape_cast %16 : vector<1x2x128xf32> to vector<2x128xf32>
    %18 = vector.shape_cast %15 : vector<2x128xf32> to vector<1x2x128xf32>
    tpu.vector_store %arg4[%c0_8, %c0_9, %c0_10], %18 {strides = array<i32>} : memref<1x2x128xf32, #tpu.memory_space<vmem>>, vector<1x2x128xf32>,
    return
  }
  func.func @transform_0(%arg0: i32) -> (i32, i32) {
    %c0_i32 = arith.constant 0 : i32
    %c0_i32_0 = arith.constant 0 : i32
    return %arg0, %c0_i32 : i32, i32
  }
  func.func @transform_1(%arg0: i32) -> (i32, i32) {
    %c0_i32 = arith.constant 0 : i32
    %c0_i32_0 = arith.constant 0 : i32
    %c0_i32_1 = arith.constant 0 : i32
    return %c0_i32, %c0_i32_0 : i32, i32
  }
  func.func @transform_2(%arg0: i32) -> (i32, i32) {
    %c0_i32 = arith.constant 0 : i32
    %c0_i32_0 = arith.constant 0 : i32
    return %arg0, %c0_i32 : i32, i32
  }
  func.func @transform_3(%arg0: i32) -> (i32, i32, i32) {
    %c0_i32 = arith.constant 0 : i32
    %c0_i32_0 = arith.constant 0 : i32
    %c0_i32_1 = arith.constant 0 : i32
    return %arg0, %c0_i32, %c0_i32_0 : i32, i32, i32
  }
}

module attributes {stable_mosaic.version = 11 : i64} {
  func.func @_conv3x3_stats_kernel(%arg0: i32, %arg1: i32, %arg2: memref<1x8x16x128xbf16, #tpu.memory_space<vmem>>, %arg3: memref<2x16x16x128xbf16, #tpu.memory_space<any>>, %arg4: memref<3x384x128xbf16, #tpu.memory_space<vmem>>, %arg5: memref<1x128xf32, #tpu.memory_space<vmem>>, %arg6: memref<1x128xf32, #tpu.memory_space<vmem>>, %arg7: memref<1x8x16x128xbf16, #tpu.memory_space<vmem>>, %arg8: memref<1x1x2x128xf32, #tpu.memory_space<vmem>>, %arg9: memref<10x18x128xbf16, #tpu.memory_space<vmem>>, %arg10: memref<2x16x128xbf16, #tpu.memory_space<vmem>>, %arg11: memref<2x!tpu.dma_semaphore, #tpu.memory_space<semaphore_mem>>) attributes {dimension_semantics = [#tpu.dimension_semantics<parallel>, #tpu.dimension_semantics<parallel>], iteration_bounds = array<i64: 2, 2>, scalar_prefetch = 0 : i64, scratch_operands = 3 : i64, tpu.core_type = #tpu.core_type<tc>, window_params = [{transform_indices = @transform_0, window_bounds = array<i64: 1, 8, 16, 128>}, {}, {pipeline_mode = #tpu.pipeline_mode<synchronous>, transform_indices = @transform_2, window_bounds = array<i64: 3, 384, 128>}, {pipeline_mode = #tpu.pipeline_mode<synchronous>, transform_indices = @transform_3, window_bounds = array<i64: 1, 128>}, {pipeline_mode = #tpu.pipeline_mode<synchronous>, transform_indices = @transform_4, window_bounds = array<i64: 1, 128>}, {transform_indices = @transform_5, window_bounds = array<i64: 1, 8, 16, 128>}, {transform_indices = @transform_6, window_bounds = array<i64: 1, 1, 2, 128>}]} {
    %c0_i32 = arith.constant 0 : i32
    %0 = arith.cmpi sgt, %arg1, %c0_i32 : i32
    %1 = arith.extui %0 : i1 to i32
    %c0_i32_0 = arith.constant 0 : i32
    %2 = arith.cmpi ne, %1, %c0_i32_0 : i32
    scf.if %2 {
      %c8_i32 = arith.constant 8 : i32
      %85 = arith.muli %arg1, %c8_i32 : i32
      %c1_i32_76 = arith.constant 1 : i32
      %86 = arith.subi %85, %c1_i32_76 : i32
      %c0_i32_77 = arith.constant 0 : i32
      %c0_i32_78 = arith.constant 0 : i32
      %c0_i32_79 = arith.constant 0 : i32
      %87 = tpu.memref_slice %arg3[%arg0, %86, %c0_i32_78, %c0_i32_79] : memref<2x16x16x128xbf16, #tpu.memory_space<any>> -> memref<1x1x16x128xbf16, #tpu.memory_space<any>>
      %88 = tpu.memref_squeeze %87 : memref<1x1x16x128xbf16, #tpu.memory_space<any>> -> memref<1x16x128xbf16, #tpu.memory_space<any>>
      %c0_i32_80 = arith.constant 0 : i32
      %c0_i32_81 = arith.constant 0 : i32
      %c0_i32_82 = arith.constant 0 : i32
      %89 = tpu.memref_slice %arg10[%c0_i32_80, %c0_i32_81, %c0_i32_82] : memref<2x16x128xbf16, #tpu.memory_space<vmem>> -> memref<1x16x128xbf16, #tpu.memory_space<vmem>>
      %90 = tpu.memref_slice %arg11[%c0_i32_77] : memref<2x!tpu.dma_semaphore, #tpu.memory_space<semaphore_mem>> -> memref<1x!tpu.dma_semaphore, #tpu.memory_space<semaphore_mem>>
      %91 = tpu.memref_squeeze %90 : memref<1x!tpu.dma_semaphore, #tpu.memory_space<semaphore_mem>> -> memref<!tpu.dma_semaphore, #tpu.memory_space<semaphore_mem>>
      tpu.enqueue_dma source(%88 : memref<1x16x128xbf16, #tpu.memory_space<any>>) target(%89 : memref<1x16x128xbf16, #tpu.memory_space<vmem>>) target_semaphore(%91 : memref<!tpu.dma_semaphore, #tpu.memory_space<semaphore_mem>>)
    } else {
    }
    %c1_i32 = arith.constant 1 : i32
    %3 = arith.cmpi slt, %arg1, %c1_i32 : i32
    %4 = arith.extui %3 : i1 to i32
    %c0_i32_1 = arith.constant 0 : i32
    %5 = arith.cmpi ne, %4, %c0_i32_1 : i32
    scf.if %5 {
      %c8_i32 = arith.constant 8 : i32
      %85 = arith.muli %arg1, %c8_i32 : i32
      %c8_i32_76 = arith.constant 8 : i32
      %86 = arith.addi %85, %c8_i32_76 : i32
      %c1_i32_77 = arith.constant 1 : i32
      %c0_i32_78 = arith.constant 0 : i32
      %c0_i32_79 = arith.constant 0 : i32
      %87 = tpu.memref_slice %arg3[%arg0, %86, %c0_i32_78, %c0_i32_79] : memref<2x16x16x128xbf16, #tpu.memory_space<any>> -> memref<1x1x16x128xbf16, #tpu.memory_space<any>>
      %88 = tpu.memref_squeeze %87 : memref<1x1x16x128xbf16, #tpu.memory_space<any>> -> memref<1x16x128xbf16, #tpu.memory_space<any>>
      %c1_i32_80 = arith.constant 1 : i32
      %c0_i32_81 = arith.constant 0 : i32
      %c0_i32_82 = arith.constant 0 : i32
      %89 = tpu.memref_slice %arg10[%c1_i32_80, %c0_i32_81, %c0_i32_82] : memref<2x16x128xbf16, #tpu.memory_space<vmem>> -> memref<1x16x128xbf16, #tpu.memory_space<vmem>>
      %90 = tpu.memref_slice %arg11[%c1_i32_77] : memref<2x!tpu.dma_semaphore, #tpu.memory_space<semaphore_mem>> -> memref<1x!tpu.dma_semaphore, #tpu.memory_space<semaphore_mem>>
      %91 = tpu.memref_squeeze %90 : memref<1x!tpu.dma_semaphore, #tpu.memory_space<semaphore_mem>> -> memref<!tpu.dma_semaphore, #tpu.memory_space<semaphore_mem>>
      tpu.enqueue_dma source(%88 : memref<1x16x128xbf16, #tpu.memory_space<any>>) target(%89 : memref<1x16x128xbf16, #tpu.memory_space<vmem>>) target_semaphore(%91 : memref<!tpu.dma_semaphore, #tpu.memory_space<semaphore_mem>>)
    } else {
    }
    %cst = arith.constant 0.000000e+00 : bf16
    %6 = vector.broadcast %cst : bf16 to vector<10x1x128xbf16>
    %c0 = arith.constant 0 : index
    %c0_2 = arith.constant 0 : index
    %c0_3 = arith.constant 0 : index
    %7 = vector.load %arg9[%c0, %c0_2, %c0_3] : memref<10x18x128xbf16, #tpu.memory_space<vmem>>, vector<10x1x128xbf16>
    tpu.vector_store %arg9[%c0, %c0_2, %c0_3], %6 {strides = array<i32>} : memref<10x18x128xbf16, #tpu.memory_space<vmem>>, vector<10x1x128xbf16>,
    %c0_4 = arith.constant 0 : index
    %c17 = arith.constant 17 : index
    %c0_5 = arith.constant 0 : index
    %8 = vector.load %arg9[%c0_4, %c17, %c0_5] : memref<10x18x128xbf16, #tpu.memory_space<vmem>>, vector<10x1x128xbf16>
    tpu.vector_store %arg9[%c0_4, %c17, %c0_5], %6 {strides = array<i32>} : memref<10x18x128xbf16, #tpu.memory_space<vmem>>, vector<10x1x128xbf16>,
    %c0_6 = arith.constant 0 : index
    %c0_7 = arith.constant 0 : index
    %c0_8 = arith.constant 0 : index
    %c0_9 = arith.constant 0 : index
    %9 = vector.load %arg2[%c0_6, %c0_7, %c0_8, %c0_9] : memref<1x8x16x128xbf16, #tpu.memory_space<vmem>>, vector<1x8x16x128xbf16>
    %10 = vector.shape_cast %9 : vector<1x8x16x128xbf16> to vector<8x16x128xbf16>
    %11 = arith.extf %10 : vector<8x16x128xbf16> to vector<8x16x128xf32>
    %c0_10 = arith.constant 0 : index
    %c0_11 = arith.constant 0 : index
    %12 = vector.load %arg5[%c0_10, %c0_11] : memref<1x128xf32, #tpu.memory_space<vmem>>, vector<1x128xf32>
    %13 = vector.shape_cast %12 : vector<1x128xf32> to vector<1x1x128xf32>
    %14 = vector.broadcast %13 : vector<1x1x128xf32> to vector<8x16x128xf32>
    %15 = arith.mulf %11, %14 : vector<8x16x128xf32>
    %c0_12 = arith.constant 0 : index
    %c0_13 = arith.constant 0 : index
    %16 = vector.load %arg6[%c0_12, %c0_13] : memref<1x128xf32, #tpu.memory_space<vmem>>, vector<1x128xf32>
    %17 = vector.shape_cast %16 : vector<1x128xf32> to vector<1x1x128xf32>
    %18 = vector.broadcast %17 : vector<1x1x128xf32> to vector<8x16x128xf32>
    %19 = arith.addf %15, %18 : vector<8x16x128xf32>
    %cst_14 = arith.constant 0.000000e+00 : f32
    %20 = vector.broadcast %cst_14 : f32 to vector<8x16x128xf32>
    %21 = arith.cmpf ogt, %19, %20 : vector<8x16x128xf32>
    %cst_15 = arith.constant 1.000000e-01 : f32
    %22 = vector.broadcast %cst_15 : f32 to vector<8x16x128xf32>
    %23 = arith.mulf %22, %19 : vector<8x16x128xf32>
    %24 = arith.select %21, %19, %23 : vector<8x16x128xi1>, vector<8x16x128xf32>
    %25 = arith.truncf %24 : vector<8x16x128xf32> to vector<8x16x128xbf16>
    %c1 = arith.constant 1 : index
    %c1_16 = arith.constant 1 : index
    %c0_17 = arith.constant 0 : index
    %26 = vector.load %arg9[%c1, %c1_16, %c0_17] : memref<10x18x128xbf16, #tpu.memory_space<vmem>>, vector<8x16x128xbf16>
    tpu.vector_store %arg9[%c1, %c1_16, %c0_17], %25 {strides = array<i32>} : memref<10x18x128xbf16, #tpu.memory_space<vmem>>, vector<8x16x128xbf16>,
    %c0_i32_18 = arith.constant 0 : i32
    %27 = arith.cmpi sgt, %arg1, %c0_i32_18 : i32
    %28 = arith.extui %27 : i1 to i32
    %c0_i32_19 = arith.constant 0 : i32
    %29 = arith.cmpi ne, %28, %c0_i32_19 : i32
    scf.if %29 {
      %c8_i32 = arith.constant 8 : i32
      %85 = arith.muli %arg1, %c8_i32 : i32
      %c1_i32_76 = arith.constant 1 : i32
      %86 = arith.subi %85, %c1_i32_76 : i32
      %c0_i32_77 = arith.constant 0 : i32
      %c0_i32_78 = arith.constant 0 : i32
      %c0_i32_79 = arith.constant 0 : i32
      %87 = tpu.memref_slice %arg3[%arg0, %86, %c0_i32_78, %c0_i32_79] : memref<2x16x16x128xbf16, #tpu.memory_space<any>> -> memref<1x1x16x128xbf16, #tpu.memory_space<any>>
      %88 = tpu.memref_squeeze %87 : memref<1x1x16x128xbf16, #tpu.memory_space<any>> -> memref<1x16x128xbf16, #tpu.memory_space<any>>
      %c0_i32_80 = arith.constant 0 : i32
      %c0_i32_81 = arith.constant 0 : i32
      %c0_i32_82 = arith.constant 0 : i32
      %89 = tpu.memref_slice %arg10[%c0_i32_80, %c0_i32_81, %c0_i32_82] : memref<2x16x128xbf16, #tpu.memory_space<vmem>> -> memref<1x16x128xbf16, #tpu.memory_space<vmem>>
      %90 = tpu.memref_slice %arg11[%c0_i32_77] : memref<2x!tpu.dma_semaphore, #tpu.memory_space<semaphore_mem>> -> memref<1x!tpu.dma_semaphore, #tpu.memory_space<semaphore_mem>>
      %91 = tpu.memref_squeeze %90 : memref<1x!tpu.dma_semaphore, #tpu.memory_space<semaphore_mem>> -> memref<!tpu.dma_semaphore, #tpu.memory_space<semaphore_mem>>
      tpu.wait_dma2 semaphore(%91 : memref<!tpu.dma_semaphore, #tpu.memory_space<semaphore_mem>>) src(%88 : memref<1x16x128xbf16, #tpu.memory_space<any>>) dst(%89 : memref<1x16x128xbf16, #tpu.memory_space<vmem>>)
      %c0_83 = arith.constant 0 : index
      %c0_84 = arith.constant 0 : index
      %c0_85 = arith.constant 0 : index
      %92 = vector.load %arg10[%c0_83, %c0_84, %c0_85] : memref<2x16x128xbf16, #tpu.memory_space<vmem>>, vector<1x16x128xbf16>
      %93 = arith.extf %92 : vector<1x16x128xbf16> to vector<1x16x128xf32>
      %c0_86 = arith.constant 0 : index
      %c0_87 = arith.constant 0 : index
      %94 = vector.load %arg5[%c0_86, %c0_87] : memref<1x128xf32, #tpu.memory_space<vmem>>, vector<1x128xf32>
      %95 = vector.shape_cast %94 : vector<1x128xf32> to vector<1x1x128xf32>
      %96 = vector.broadcast %95 : vector<1x1x128xf32> to vector<1x16x128xf32>
      %97 = arith.mulf %93, %96 : vector<1x16x128xf32>
      %c0_88 = arith.constant 0 : index
      %c0_89 = arith.constant 0 : index
      %98 = vector.load %arg6[%c0_88, %c0_89] : memref<1x128xf32, #tpu.memory_space<vmem>>, vector<1x128xf32>
      %99 = vector.shape_cast %98 : vector<1x128xf32> to vector<1x1x128xf32>
      %100 = vector.broadcast %99 : vector<1x1x128xf32> to vector<1x16x128xf32>
      %101 = arith.addf %97, %100 : vector<1x16x128xf32>
      %cst_90 = arith.constant 0.000000e+00 : f32
      %102 = vector.broadcast %cst_90 : f32 to vector<1x16x128xf32>
      %103 = arith.cmpf ogt, %101, %102 : vector<1x16x128xf32>
      %cst_91 = arith.constant 1.000000e-01 : f32
      %104 = vector.broadcast %cst_91 : f32 to vector<1x16x128xf32>
      %105 = arith.mulf %104, %101 : vector<1x16x128xf32>
      %106 = arith.select %103, %101, %105 : vector<1x16x128xi1>, vector<1x16x128xf32>
      %107 = arith.truncf %106 : vector<1x16x128xf32> to vector<1x16x128xbf16>
      %c0_92 = arith.constant 0 : index
      %c1_93 = arith.constant 1 : index
      %c0_94 = arith.constant 0 : index
      %108 = vector.load %arg9[%c0_92, %c1_93, %c0_94] : memref<10x18x128xbf16, #tpu.memory_space<vmem>>, vector<1x16x128xbf16>
      tpu.vector_store %arg9[%c0_92, %c1_93, %c0_94], %107 {strides = array<i32>} : memref<10x18x128xbf16, #tpu.memory_space<vmem>>, vector<1x16x128xbf16>,
    } else {
    }
    %c0_i32_20 = arith.constant 0 : i32
    %30 = arith.cmpi eq, %arg1, %c0_i32_20 : i32
    %31 = arith.extui %30 : i1 to i32
    %c0_i32_21 = arith.constant 0 : i32
    %32 = arith.cmpi ne, %31, %c0_i32_21 : i32
    scf.if %32 {
      %cst_76 = arith.constant 0.000000e+00 : bf16
      %85 = vector.broadcast %cst_76 : bf16 to vector<1x16x128xbf16>
      %c0_77 = arith.constant 0 : index
      %c1_78 = arith.constant 1 : index
      %c0_79 = arith.constant 0 : index
      %86 = vector.load %arg9[%c0_77, %c1_78, %c0_79] : memref<10x18x128xbf16, #tpu.memory_space<vmem>>, vector<1x16x128xbf16>
      tpu.vector_store %arg9[%c0_77, %c1_78, %c0_79], %85 {strides = array<i32>} : memref<10x18x128xbf16, #tpu.memory_space<vmem>>, vector<1x16x128xbf16>,
    } else {
    }
    %c1_i32_22 = arith.constant 1 : i32
    %33 = arith.cmpi slt, %arg1, %c1_i32_22 : i32
    %34 = arith.extui %33 : i1 to i32
    %c0_i32_23 = arith.constant 0 : i32
    %35 = arith.cmpi ne, %34, %c0_i32_23 : i32
    scf.if %35 {
      %c8_i32 = arith.constant 8 : i32
      %85 = arith.muli %arg1, %c8_i32 : i32
      %c8_i32_76 = arith.constant 8 : i32
      %86 = arith.addi %85, %c8_i32_76 : i32
      %c1_i32_77 = arith.constant 1 : i32
      %c0_i32_78 = arith.constant 0 : i32
      %c0_i32_79 = arith.constant 0 : i32
      %87 = tpu.memref_slice %arg3[%arg0, %86, %c0_i32_78, %c0_i32_79] : memref<2x16x16x128xbf16, #tpu.memory_space<any>> -> memref<1x1x16x128xbf16, #tpu.memory_space<any>>
      %88 = tpu.memref_squeeze %87 : memref<1x1x16x128xbf16, #tpu.memory_space<any>> -> memref<1x16x128xbf16, #tpu.memory_space<any>>
      %c1_i32_80 = arith.constant 1 : i32
      %c0_i32_81 = arith.constant 0 : i32
      %c0_i32_82 = arith.constant 0 : i32
      %89 = tpu.memref_slice %arg10[%c1_i32_80, %c0_i32_81, %c0_i32_82] : memref<2x16x128xbf16, #tpu.memory_space<vmem>> -> memref<1x16x128xbf16, #tpu.memory_space<vmem>>
      %90 = tpu.memref_slice %arg11[%c1_i32_77] : memref<2x!tpu.dma_semaphore, #tpu.memory_space<semaphore_mem>> -> memref<1x!tpu.dma_semaphore, #tpu.memory_space<semaphore_mem>>
      %91 = tpu.memref_squeeze %90 : memref<1x!tpu.dma_semaphore, #tpu.memory_space<semaphore_mem>> -> memref<!tpu.dma_semaphore, #tpu.memory_space<semaphore_mem>>
      tpu.wait_dma2 semaphore(%91 : memref<!tpu.dma_semaphore, #tpu.memory_space<semaphore_mem>>) src(%88 : memref<1x16x128xbf16, #tpu.memory_space<any>>) dst(%89 : memref<1x16x128xbf16, #tpu.memory_space<vmem>>)
      %c1_83 = arith.constant 1 : index
      %c0_84 = arith.constant 0 : index
      %c0_85 = arith.constant 0 : index
      %92 = vector.load %arg10[%c1_83, %c0_84, %c0_85] : memref<2x16x128xbf16, #tpu.memory_space<vmem>>, vector<1x16x128xbf16>
      %93 = arith.extf %92 : vector<1x16x128xbf16> to vector<1x16x128xf32>
      %c0_86 = arith.constant 0 : index
      %c0_87 = arith.constant 0 : index
      %94 = vector.load %arg5[%c0_86, %c0_87] : memref<1x128xf32, #tpu.memory_space<vmem>>, vector<1x128xf32>
      %95 = vector.shape_cast %94 : vector<1x128xf32> to vector<1x1x128xf32>
      %96 = vector.broadcast %95 : vector<1x1x128xf32> to vector<1x16x128xf32>
      %97 = arith.mulf %93, %96 : vector<1x16x128xf32>
      %c0_88 = arith.constant 0 : index
      %c0_89 = arith.constant 0 : index
      %98 = vector.load %arg6[%c0_88, %c0_89] : memref<1x128xf32, #tpu.memory_space<vmem>>, vector<1x128xf32>
      %99 = vector.shape_cast %98 : vector<1x128xf32> to vector<1x1x128xf32>
      %100 = vector.broadcast %99 : vector<1x1x128xf32> to vector<1x16x128xf32>
      %101 = arith.addf %97, %100 : vector<1x16x128xf32>
      %cst_90 = arith.constant 0.000000e+00 : f32
      %102 = vector.broadcast %cst_90 : f32 to vector<1x16x128xf32>
      %103 = arith.cmpf ogt, %101, %102 : vector<1x16x128xf32>
      %cst_91 = arith.constant 1.000000e-01 : f32
      %104 = vector.broadcast %cst_91 : f32 to vector<1x16x128xf32>
      %105 = arith.mulf %104, %101 : vector<1x16x128xf32>
      %106 = arith.select %103, %101, %105 : vector<1x16x128xi1>, vector<1x16x128xf32>
      %107 = arith.truncf %106 : vector<1x16x128xf32> to vector<1x16x128xbf16>
      %c9 = arith.constant 9 : index
      %c1_92 = arith.constant 1 : index
      %c0_93 = arith.constant 0 : index
      %108 = vector.load %arg9[%c9, %c1_92, %c0_93] : memref<10x18x128xbf16, #tpu.memory_space<vmem>>, vector<1x16x128xbf16>
      tpu.vector_store %arg9[%c9, %c1_92, %c0_93], %107 {strides = array<i32>} : memref<10x18x128xbf16, #tpu.memory_space<vmem>>, vector<1x16x128xbf16>,
    } else {
    }
    %c1_i32_24 = arith.constant 1 : i32
    %36 = arith.cmpi eq, %arg1, %c1_i32_24 : i32
    %37 = arith.extui %36 : i1 to i32
    %c0_i32_25 = arith.constant 0 : i32
    %38 = arith.cmpi ne, %37, %c0_i32_25 : i32
    scf.if %38 {
      %cst_76 = arith.constant 0.000000e+00 : bf16
      %85 = vector.broadcast %cst_76 : bf16 to vector<1x16x128xbf16>
      %c9 = arith.constant 9 : index
      %c1_77 = arith.constant 1 : index
      %c0_78 = arith.constant 0 : index
      %86 = vector.load %arg9[%c9, %c1_77, %c0_78] : memref<10x18x128xbf16, #tpu.memory_space<vmem>>, vector<1x16x128xbf16>
      tpu.vector_store %arg9[%c9, %c1_77, %c0_78], %85 {strides = array<i32>} : memref<10x18x128xbf16, #tpu.memory_space<vmem>>, vector<1x16x128xbf16>,
    } else {
    }
    %cst_26 = arith.constant 0.000000e+00 : f32
    %39 = vector.broadcast %cst_26 : f32 to vector<128x128xf32>
    %c0_27 = arith.constant 0 : index
    %c0_28 = arith.constant 0 : index
    %c0_29 = arith.constant 0 : index
    %40 = vector.load %arg9[%c0_27, %c0_28, %c0_29] : memref<10x18x128xbf16, #tpu.memory_space<vmem>>, vector<8x16x128xbf16>
    %c0_30 = arith.constant 0 : index
    %c1_31 = arith.constant 1 : index
    %c0_32 = arith.constant 0 : index
    %41 = vector.load %arg9[%c0_30, %c1_31, %c0_32] : memref<10x18x128xbf16, #tpu.memory_space<vmem>>, vector<8x16x128xbf16>
    %c0_33 = arith.constant 0 : index
    %c2 = arith.constant 2 : index
    %c0_34 = arith.constant 0 : index
    %42 = vector.load %arg9[%c0_33, %c2, %c0_34] : memref<10x18x128xbf16, #tpu.memory_space<vmem>>, vector<8x16x128xbf16>
    %43 = tpu.concatenate %40, %41, %42 in 2 : vector<8x16x128xbf16>, vector<8x16x128xbf16>, vector<8x16x128xbf16> -> vector<8x16x384xbf16>
    %44 = vector.shape_cast %43 : vector<8x16x384xbf16> to vector<128x384xbf16>
    %c0_35 = arith.constant 0 : index
    %c0_36 = arith.constant 0 : index
    %c0_37 = arith.constant 0 : index
    %45 = vector.load %arg4[%c0_35, %c0_36, %c0_37] : memref<3x384x128xbf16, #tpu.memory_space<vmem>>, vector<1x384x128xbf16>
    %46 = vector.shape_cast %45 : vector<1x384x128xbf16> to vector<384x128xbf16>
    %cst_38 = arith.constant dense<0.000000e+00> : vector<128x128xf32>
    %47 = tpu.matmul %44, %46, %cst_38 {dimension_numbers = #tpu.dot_dimension_numbers<[1], [0], [0], [1], [0, 0, 1, 1], [], []>} : vector<128x384xbf16>, vector<384x128xbf16>, vector<128x128xf32> -> vector<128x128xf32>
    %48 = arith.addf %39, %47 : vector<128x128xf32>
    %c1_39 = arith.constant 1 : index
    %c0_40 = arith.constant 0 : index
    %c0_41 = arith.constant 0 : index
    %49 = vector.load %arg9[%c1_39, %c0_40, %c0_41] : memref<10x18x128xbf16, #tpu.memory_space<vmem>>, vector<8x16x128xbf16>
    %c1_42 = arith.constant 1 : index
    %c1_43 = arith.constant 1 : index
    %c0_44 = arith.constant 0 : index
    %50 = vector.load %arg9[%c1_42, %c1_43, %c0_44] : memref<10x18x128xbf16, #tpu.memory_space<vmem>>, vector<8x16x128xbf16>
    %c1_45 = arith.constant 1 : index
    %c2_46 = arith.constant 2 : index
    %c0_47 = arith.constant 0 : index
    %51 = vector.load %arg9[%c1_45, %c2_46, %c0_47] : memref<10x18x128xbf16, #tpu.memory_space<vmem>>, vector<8x16x128xbf16>
    %52 = tpu.concatenate %49, %50, %51 in 2 : vector<8x16x128xbf16>, vector<8x16x128xbf16>, vector<8x16x128xbf16> -> vector<8x16x384xbf16>
    %53 = vector.shape_cast %52 : vector<8x16x384xbf16> to vector<128x384xbf16>
    %c1_48 = arith.constant 1 : index
    %c0_49 = arith.constant 0 : index
    %c0_50 = arith.constant 0 : index
    %54 = vector.load %arg4[%c1_48, %c0_49, %c0_50] : memref<3x384x128xbf16, #tpu.memory_space<vmem>>, vector<1x384x128xbf16>
    %55 = vector.shape_cast %54 : vector<1x384x128xbf16> to vector<384x128xbf16>
    %cst_51 = arith.constant dense<0.000000e+00> : vector<128x128xf32>
    %56 = tpu.matmul %53, %55, %cst_51 {dimension_numbers = #tpu.dot_dimension_numbers<[1], [0], [0], [1], [0, 0, 1, 1], [], []>} : vector<128x384xbf16>, vector<384x128xbf16>, vector<128x128xf32> -> vector<128x128xf32>
    %57 = arith.addf %48, %56 : vector<128x128xf32>
    %c2_52 = arith.constant 2 : index
    %c0_53 = arith.constant 0 : index
    %c0_54 = arith.constant 0 : index
    %58 = vector.load %arg9[%c2_52, %c0_53, %c0_54] : memref<10x18x128xbf16, #tpu.memory_space<vmem>>, vector<8x16x128xbf16>
    %c2_55 = arith.constant 2 : index
    %c1_56 = arith.constant 1 : index
    %c0_57 = arith.constant 0 : index
    %59 = vector.load %arg9[%c2_55, %c1_56, %c0_57] : memref<10x18x128xbf16, #tpu.memory_space<vmem>>, vector<8x16x128xbf16>
    %c2_58 = arith.constant 2 : index
    %c2_59 = arith.constant 2 : index
    %c0_60 = arith.constant 0 : index
    %60 = vector.load %arg9[%c2_58, %c2_59, %c0_60] : memref<10x18x128xbf16, #tpu.memory_space<vmem>>, vector<8x16x128xbf16>
    %61 = tpu.concatenate %58, %59, %60 in 2 : vector<8x16x128xbf16>, vector<8x16x128xbf16>, vector<8x16x128xbf16> -> vector<8x16x384xbf16>
    %62 = vector.shape_cast %61 : vector<8x16x384xbf16> to vector<128x384xbf16>
    %c2_61 = arith.constant 2 : index
    %c0_62 = arith.constant 0 : index
    %c0_63 = arith.constant 0 : index
    %63 = vector.load %arg4[%c2_61, %c0_62, %c0_63] : memref<3x384x128xbf16, #tpu.memory_space<vmem>>, vector<1x384x128xbf16>
    %64 = vector.shape_cast %63 : vector<1x384x128xbf16> to vector<384x128xbf16>
    %cst_64 = arith.constant dense<0.000000e+00> : vector<128x128xf32>
    %65 = tpu.matmul %62, %64, %cst_64 {dimension_numbers = #tpu.dot_dimension_numbers<[1], [0], [0], [1], [0, 0, 1, 1], [], []>} : vector<128x384xbf16>, vector<384x128xbf16>, vector<128x128xf32> -> vector<128x128xf32>
    %66 = arith.addf %57, %65 : vector<128x128xf32>
    %67 = vector.shape_cast %66 : vector<128x128xf32> to vector<8x16x128xf32>
    %68 = arith.truncf %67 : vector<8x16x128xf32> to vector<8x16x128xbf16>
    %c0_65 = arith.constant 0 : index
    %c0_66 = arith.constant 0 : index
    %c0_67 = arith.constant 0 : index
    %c0_68 = arith.constant 0 : index
    %69 = vector.load %arg7[%c0_65, %c0_66, %c0_67, %c0_68] : memref<1x8x16x128xbf16, #tpu.memory_space<vmem>>, vector<1x8x16x128xbf16>
    %70 = vector.shape_cast %69 : vector<1x8x16x128xbf16> to vector<8x16x128xbf16>
    %71 = vector.shape_cast %68 : vector<8x16x128xbf16> to vector<1x8x16x128xbf16>
    tpu.vector_store %arg7[%c0_65, %c0_66, %c0_67, %c0_68], %71 {strides = array<i32>} : memref<1x8x16x128xbf16, #tpu.memory_space<vmem>>, vector<1x8x16x128xbf16>,
    %cst_69 = arith.constant dense<0.000000e+00> : vector<128xf32>
    %72 = vector.multi_reduction <add>, %66, %cst_69 [0] : vector<128x128xf32> to vector<128xf32>
    %73 = vector.shape_cast %72 : vector<128xf32> to vector<1x128xf32>
    %cst_70 = arith.constant 7.812500e-03 : f32
    %74 = vector.broadcast %cst_70 : f32 to vector<1x128xf32>
    %75 = arith.mulf %73, %74 : vector<1x128xf32>
    %76 = vector.broadcast %75 : vector<1x128xf32> to vector<128x128xf32>
    %77 = arith.subf %66, %76 : vector<128x128xf32>
    %78 = arith.mulf %77, %77 : vector<128x128xf32>
    %cst_71 = arith.constant dense<0.000000e+00> : vector<128xf32>
    %79 = vector.multi_reduction <add>, %78, %cst_71 [0] : vector<128x128xf32> to vector<128xf32>
    %80 = vector.shape_cast %79 : vector<128xf32> to vector<1x128xf32>
    %81 = tpu.concatenate %73, %80 in 0 : vector<1x128xf32>, vector<1x128xf32> -> vector<2x128xf32>
    %c0_72 = arith.constant 0 : index
    %c0_73 = arith.constant 0 : index
    %c0_74 = arith.constant 0 : index
    %c0_75 = arith.constant 0 : index
    %82 = vector.load %arg8[%c0_72, %c0_73, %c0_74, %c0_75] : memref<1x1x2x128xf32, #tpu.memory_space<vmem>>, vector<1x1x2x128xf32>
    %83 = vector.shape_cast %82 : vector<1x1x2x128xf32> to vector<2x128xf32>
    %84 = vector.shape_cast %81 : vector<2x128xf32> to vector<1x1x2x128xf32>
    tpu.vector_store %arg8[%c0_72, %c0_73, %c0_74, %c0_75], %84 {strides = array<i32>} : memref<1x1x2x128xf32, #tpu.memory_space<vmem>>, vector<1x1x2x128xf32>,
    return
  }
  func.func @transform_0(%arg0: i32, %arg1: i32) -> (i32, i32, i32, i32) {
    %c0_i32 = arith.constant 0 : i32
    %c0_i32_0 = arith.constant 0 : i32
    %c0_i32_1 = arith.constant 0 : i32
    return %arg0, %arg1, %c0_i32, %c0_i32_0 : i32, i32, i32, i32
  }
  func.func @transform_2(%arg0: i32, %arg1: i32) -> (i32, i32, i32) {
    %c0_i32 = arith.constant 0 : i32
    %c0_i32_0 = arith.constant 0 : i32
    %c0_i32_1 = arith.constant 0 : i32
    %c0_i32_2 = arith.constant 0 : i32
    return %c0_i32, %c0_i32_0, %c0_i32_1 : i32, i32, i32
  }
  func.func @transform_3(%arg0: i32, %arg1: i32) -> (i32, i32) {
    %c0_i32 = arith.constant 0 : i32
    %c0_i32_0 = arith.constant 0 : i32
    %c0_i32_1 = arith.constant 0 : i32
    return %c0_i32, %c0_i32_0 : i32, i32
  }
  func.func @transform_4(%arg0: i32, %arg1: i32) -> (i32, i32) {
    %c0_i32 = arith.constant 0 : i32
    %c0_i32_0 = arith.constant 0 : i32
    %c0_i32_1 = arith.constant 0 : i32
    return %c0_i32, %c0_i32_0 : i32, i32
  }
  func.func @transform_5(%arg0: i32, %arg1: i32) -> (i32, i32, i32, i32) {
    %c0_i32 = arith.constant 0 : i32
    %c0_i32_0 = arith.constant 0 : i32
    %c0_i32_1 = arith.constant 0 : i32
    return %arg0, %arg1, %c0_i32, %c0_i32_0 : i32, i32, i32, i32
  }
  func.func @transform_6(%arg0: i32, %arg1: i32) -> (i32, i32, i32, i32) {
    %c0_i32 = arith.constant 0 : i32
    %c0_i32_0 = arith.constant 0 : i32
    %c0_i32_1 = arith.constant 0 : i32
    return %arg0, %arg1, %c0_i32, %c0_i32_0 : i32, i32, i32, i32
  }
}

module attributes {stable_mosaic.version = 11 : i64} {
  func.func @_bn_lrelu_res_kernel(%arg0: i32, %arg1: memref<256x128xbf16, #tpu.memory_space<vmem>>, %arg2: memref<1x128xf32, #tpu.memory_space<vmem>>, %arg3: memref<1x128xf32, #tpu.memory_space<vmem>>, %arg4: memref<256x128xf32, #tpu.memory_space<vmem>>, %arg5: memref<256x128xf32, #tpu.memory_space<vmem>>) attributes {dimension_semantics = [#tpu.dimension_semantics<parallel>], iteration_bounds = array<i64: 2>, scalar_prefetch = 0 : i64, scratch_operands = 0 : i64, tpu.core_type = #tpu.core_type<tc>, window_params = [{transform_indices = @transform_0, window_bounds = array<i64: 256, 128>}, {pipeline_mode = #tpu.pipeline_mode<synchronous>, transform_indices = @transform_1, window_bounds = array<i64: 1, 128>}, {pipeline_mode = #tpu.pipeline_mode<synchronous>, transform_indices = @transform_2, window_bounds = array<i64: 1, 128>}, {transform_indices = @transform_3, window_bounds = array<i64: 256, 128>}, {transform_indices = @transform_4, window_bounds = array<i64: 256, 128>}]} {
    %c0 = arith.constant 0 : index
    %c0_0 = arith.constant 0 : index
    %0 = vector.load %arg1[%c0, %c0_0] : memref<256x128xbf16, #tpu.memory_space<vmem>>, vector<256x128xbf16>
    %1 = arith.extf %0 : vector<256x128xbf16> to vector<256x128xf32>
    %c0_1 = arith.constant 0 : index
    %c0_2 = arith.constant 0 : index
    %2 = vector.load %arg2[%c0_1, %c0_2] : memref<1x128xf32, #tpu.memory_space<vmem>>, vector<1x128xf32>
    %3 = vector.broadcast %2 : vector<1x128xf32> to vector<256x128xf32>
    %4 = arith.mulf %1, %3 : vector<256x128xf32>
    %c0_3 = arith.constant 0 : index
    %c0_4 = arith.constant 0 : index
    %5 = vector.load %arg3[%c0_3, %c0_4] : memref<1x128xf32, #tpu.memory_space<vmem>>, vector<1x128xf32>
    %6 = vector.broadcast %5 : vector<1x128xf32> to vector<256x128xf32>
    %7 = arith.addf %4, %6 : vector<256x128xf32>
    %cst = arith.constant 0.000000e+00 : f32
    %8 = vector.broadcast %cst : f32 to vector<256x128xf32>
    %9 = arith.cmpf ogt, %7, %8 : vector<256x128xf32>
    %cst_5 = arith.constant 1.000000e-01 : f32
    %10 = vector.broadcast %cst_5 : f32 to vector<256x128xf32>
    %11 = arith.mulf %10, %7 : vector<256x128xf32>
    %12 = arith.select %9, %7, %11 : vector<256x128xi1>, vector<256x128xf32>
    %c0_6 = arith.constant 0 : index
    %c0_7 = arith.constant 0 : index
    %13 = vector.load %arg4[%c0_6, %c0_7] : memref<256x128xf32, #tpu.memory_space<vmem>>, vector<256x128xf32>
    %14 = arith.addf %12, %13 : vector<256x128xf32>
    %c0_8 = arith.constant 0 : index
    %c0_9 = arith.constant 0 : index
    %15 = vector.load %arg5[%c0_8, %c0_9] : memref<256x128xf32, #tpu.memory_space<vmem>>, vector<256x128xf32>
    tpu.vector_store %arg5[%c0_8, %c0_9], %14 {strides = array<i32>} : memref<256x128xf32, #tpu.memory_space<vmem>>, vector<256x128xf32>,
    return
  }
  func.func @transform_0(%arg0: i32) -> (i32, i32) {
    %c0_i32 = arith.constant 0 : i32
    %c0_i32_0 = arith.constant 0 : i32
    return %arg0, %c0_i32 : i32, i32
  }
  func.func @transform_1(%arg0: i32) -> (i32, i32) {
    %c0_i32 = arith.constant 0 : i32
    %c0_i32_0 = arith.constant 0 : i32
    %c0_i32_1 = arith.constant 0 : i32
    return %c0_i32, %c0_i32_0 : i32, i32
  }
  func.func @transform_2(%arg0: i32) -> (i32, i32) {
    %c0_i32 = arith.constant 0 : i32
    %c0_i32_0 = arith.constant 0 : i32
    %c0_i32_1 = arith.constant 0 : i32
    return %c0_i32, %c0_i32_0 : i32, i32
  }
  func.func @transform_3(%arg0: i32) -> (i32, i32) {
    %c0_i32 = arith.constant 0 : i32
    %c0_i32_0 = arith.constant 0 : i32
    return %arg0, %c0_i32 : i32, i32
  }
  func.func @transform_4(%arg0: i32) -> (i32, i32) {
    %c0_i32 = arith.constant 0 : i32
    %c0_i32_0 = arith.constant 0 : i32
    return %arg0, %c0_i32 : i32, i32
  }
}

</mosaic_0001>

<llo_original>
// kernel: residual_block_forward.3
$region0: #{residual_block_forward.3}
  #allocation0 [shape = 'u32[]', space=smem, size = 0x4, offset = 0x4, fixed_abs, tag = 'smem constant byte address 0x4 - core index']
  #allocation1 [shape = 'u32[72,128]{1,0:T(1,128)}', space=vmem, size = 0x9000, scoped, tag = 'internal scratch']
  %s0 = inlined_call_operand.vmem [shape: f32[512,128], index: 0, kind: input, shape index: {}]
  %s1 = inlined_call_operand.vmem [shape: bf16[128,128], index: 1, kind: input, shape index: {}]
  %s2 = inlined_call_operand.vmem [shape: bf16[512,128], index: 2, kind: output, shape index: {0}]
  %s3 = inlined_call_operand.vmem [shape: f32[2,2,128], index: 3, kind: output, shape index: {1}]
  %4 = xla_tuple %s2, %s3
  %s5 = sld [smem:[#allocation0]]
  $region49: #{residual_block_forward.3} parent=0
    _
  %s7 = ssub.s32 1, %s5
  %s8 = scalar_select 0, %s7, %s5
  loop: start=0, step=1, limit=4
  $region2: #{residual_block_forward.3} parent=0 // loop_pre_header
    _
  $region3: #{residual_block_forward.3} parent=0 // loop_header
    %s10 = sphi 0, %s14
    %p11 = scmp.ge.s32.totalorder %s10, 4
    %s20 = sphi 0, %s22
    %s23 = sphi 0, %s20
    %s24 = sphi 0, %s23
    %s40 = sphi 0, %s24
    %s44 = sphi 0, %s44
    %s46 = sphi 0, %s44
    %s47 = sphi 0, %s46
    %s61 = sphi 0, %s47
    %s67 = sphi 0, %s69
    %s70 = sphi 0, %s67
    %s71 = sphi 0, %s70
    %s87 = sphi 0, %s71
    %s93 = sphi 0, %s95
    %s96 = sphi 0, %s93
    %s97 = sphi 0, %s96
    %s113 = sphi 0, %s97
  $region4: #{residual_block_forward.3} parent=0 // loop_header_branch
    %13 = sbr.rel (%p11) target = $region8
  $region5: #{residual_block_forward.3} parent=0 // loop_body
    %s15 = ssub.s32 %s10, 1
    %s16 = ssub.s32 %s10, 2
    %s17 = sadd.s32 %s10, 1
    %s18 = ssub.s32 %s10, %s17
    %p19 = scmp.eq.s32.totalorder %s18, 0
    %s21 = sadd.s32 %s20, 1
    %s22 = scalar_select %p19, %s20, %s21
    %p25 = pneg %p19
    %p26 = scmp.eq.s32.totalorder %s10, 1
    %p27 = por %p25, %p26
    %p28 = scmp.ne.s32.totalorder %s20, %s23
    %p29 = scmp.eq.s32.totalorder %s10, 0
    %p30 = por %p28, %p29
    %p31 = scmp.ne.s32.totalorder %s20, %s23
    %p32 = scmp.eq.s32.totalorder %s15, 1
    %p33 = por %p31, %p32
    %p34 = scmp.ne.s32.totalorder %s23, %s24
    %p35 = scmp.eq.s32.totalorder %s15, 0
    %p36 = por %p34, %p35
    %p37 = scmp.ne.s32.totalorder %s23, %s24
    %p38 = scmp.eq.s32.totalorder %s16, 1
    %p39 = por %p37, %p38
    %p41 = scmp.ne.s32.totalorder %s24, %s40
    %p42 = scmp.eq.s32.totalorder %s16, 0
    %p43 = por %p41, %p42
    %s45 = sadd.s32 %s44, 1
    %p48 = scmp.eq.s32.totalorder %s10, 1
    %p49 = scmp.ne.s32.totalorder %s44, %s46
    %p50 = scmp.eq.s32.totalorder %s10, 0
    %p51 = por %p49, %p50
    %p52 = scmp.ne.s32.totalorder %s44, %s46
    %p53 = scmp.eq.s32.totalorder %s15, 1
    %p54 = por %p52, %p53
    %p55 = scmp.ne.s32.totalorder %s46, %s47
    %p56 = scmp.eq.s32.totalorder %s15, 0
    %p57 = por %p55, %p56
    %p58 = scmp.ne.s32.totalorder %s46, %s47
    %p59 = scmp.eq.s32.totalorder %s16, 1
    %p60 = por %p58, %p59
    %p62 = scmp.ne.s32.totalorder %s47, %s61
    %p63 = scmp.eq.s32.totalorder %s16, 0
    %p64 = por %p62, %p63
    %s65 = ssub.s32 %s10, %s17
    %p66 = scmp.eq.s32.totalorder %s65, 0
    %s68 = sadd.s32 %s67, 1
    %s69 = scalar_select %p66, %s67, %s68
    %p72 = pneg %p66
    %p73 = scmp.eq.s32.totalorder %s10, 1
    %p74 = por %p72, %p73
    %p75 = scmp.ne.s32.totalorder %s67, %s70
    %p76 = scmp.eq.s32.totalorder %s10, 0
    %p77 = por %p75, %p76
    %p78 = scmp.ne.s32.totalorder %s67, %s70
    %p79 = scmp.eq.s32.totalorder %s15, 1
    %p80 = por %p78, %p79
    %p81 = scmp.ne.s32.totalorder %s70, %s71
    %p82 = scmp.eq.s32.totalorder %s15, 0
    %p83 = por %p81, %p82
    %p84 = scmp.ne.s32.totalorder %s70, %s71
    %p85 = scmp.eq.s32.totalorder %s16, 1
    %p86 = por %p84, %p85
    %p88 = scmp.ne.s32.totalorder %s71, %s87
    %p89 = scmp.eq.s32.totalorder %s16, 0
    %p90 = por %p88, %p89
    %s91 = ssub.s32 %s10, %s17
    %p92 = scmp.eq.s32.totalorder %s91, 0
    %s94 = sadd.s32 %s93, 1
    %s95 = scalar_select %p92, %s93, %s94
    %p98 = pneg %p92
    %p99 = scmp.eq.s32.totalorder %s10, 1
    %p100 = por %p98, %p99
    %p101 = scmp.ne.s32.totalorder %s93, %s96
    %p102 = scmp.eq.s32.totalorder %s10, 0
    %p103 = por %p101, %p102
    %p104 = scmp.ne.s32.totalorder %s93, %s96
    %p105 = scmp.eq.s32.totalorder %s15, 1
    %p106 = por %p104, %p105
    %p107 = scmp.ne.s32.totalorder %s96, %s97
    %p108 = scmp.eq.s32.totalorder %s15, 0
    %p109 = por %p107, %p108
    %p110 = scmp.ne.s32.totalorder %s96, %s97
    %p111 = scmp.eq.s32.totalorder %s16, 1
    %p112 = por %p110, %p111
    %p114 = scmp.ne.s32.totalorder %s97, %s113
    %p115 = scmp.eq.s32.totalorder %s16, 0
    %p116 = por %p114, %p115
    %p117 = scmp.le.s32.totalorder 1, %s10
    %p118 = scmp.lt.s32.totalorder %s10, 3
    %p119 = pnand %p117, %p118
    %p120 = pneg %p119
    // Predicated region
    $region9: #{residual_block_forward.3} parent=5 // pred_check
      _
    $region10: #{residual_block_forward.3} parent=5 // pred_check_branch
      %122 = sbr.rel (%p119) target = $region12
    $region11: #{residual_block_forward.3} parent=5 // pred_region
      %s123 = ssub.s32 %s10, 1
      // Predicated region
      $region13: #{residual_block_forward.3} parent=11 // pred_check
        %p124 = pneg %p57
      $region14: #{residual_block_forward.3} parent=11 // pred_check_branch
        %126 = sbr.rel (%p124) target = $region16
      $region15: #{residual_block_forward.3} parent=11 // pred_region
        _
      $region16: #{residual_block_forward.3} parent=11 // pred_fallthru
        _
    $region12: #{residual_block_forward.3} parent=5 // pred_fallthru
      _
    %p127 = scmp.lt.s32.totalorder %s10, 2
    // Predicated region
    $region17: #{residual_block_forward.3} parent=5 // pred_check
      %p128 = pneg %p127
    $region18: #{residual_block_forward.3} parent=5 // pred_check_branch
      %130 = sbr.rel (%p128) target = $region20
    $region19: #{residual_block_forward.3} parent=5 // pred_region
      // Predicated region
      $region21: #{residual_block_forward.3} parent=19 // pred_check
        %p131 = pneg %p30
      $region22: #{residual_block_forward.3} parent=19 // pred_check_branch
        %133 = sbr.rel (%p131) target = $region24
      $region23: #{residual_block_forward.3} parent=19 // pred_region
        %s134 = smul.u32 32, %s10
        %p135 = scmp.lt.s32.totalorder %s134, 63
        %s136 = scalar_select %p135, %s134, 63
        %s137 = smul.addr %s136, 8
        %s138 = scalar_lea.vmem %s0, %s137
        %s139 = smul.u32 32, %s10
      $region24: #{residual_block_forward.3} parent=19 // pred_fallthru
        _
    $region20: #{residual_block_forward.3} parent=5 // pred_fallthru
      _
    %p140 = scmp.le.s32.totalorder 1, %s10
    %p141 = scmp.lt.s32.totalorder %s10, 3
    %p142 = pnand %p140, %p141
    %p143 = pneg %p142
    // Predicated region
    $region25: #{residual_block_forward.3} parent=5 // pred_check
      _
    $region26: #{residual_block_forward.3} parent=5 // pred_check_branch
      %145 = sbr.rel (%p142) target = $region28
    $region27: #{residual_block_forward.3} parent=5 // pred_region
      %s146 = ssub.s32 %s10, 1
      %s147 = smul.u32 32, %s15
      %p148 = scmp.lt.s32.totalorder %s147, 63
      %s149 = scalar_select %p148, %s147, 63
      %s150 = smul.addr %s149, 8
      %s151 = scalar_lea.vmem %s0, %s150
      %p152 = pneg %p36
      %p153 = pneg %p33
      %p154 = pneg %p57
      %p155 = pneg %p54
      %p156 = pneg %p83
      %p157 = pneg %p80
      %s158 = smul.u32 32, %s15
      %p159 = scmp.lt.s32.totalorder %s158, 63
      %s160 = scalar_select %p159, %s158, 63
      %s161 = smul.addr %s160, 4
      %s162 = scalar_lea.vmem %s2, %s161
      %p163 = pneg %p109
      %p164 = pneg %p106
      %p165 = scmp.lt.s32.totalorder %s15, 1
      %s166 = scalar_select %p165, %s15, 1
      %s167 = smul.addr %s166, 2
      %s168 = scalar_lea.vmem %s3, %s167
      %s169 = smul.u32 32, %s15
      %p170 = scmp.lt.s32.totalorder %s169, 63
      %s171 = scalar_select %p170, %s169, 63
      %s172 = smul.addr %s171, 8
      %s173 = scalar_lea.vmem %s0, %s172
      %s174 = smul.u32 32, %s15
      %s175 = smul.u32 32, %s15
      %p176 = scmp.lt.s32.totalorder %s175, 63
      %s177 = scalar_select %p176, %s175, 63
      %s178 = smul.addr %s177, 4
      %s179 = scalar_lea.vmem %s2, %s178
      %s180 = smul.u32 32, %s15
      %p181 = scmp.lt.s32.totalorder %s15, 1
      %s182 = scalar_select %p181, %s15, 1
      %s183 = smul.addr %s182, 2
      %s184 = scalar_lea.vmem %s3, %s183
      %v185 = vld [vmem:[%s173] sm:$0xff]
      %v186 = vld [vmem:[%s173 + $0x8] sm:$0xff]
      %v187 = vld [vmem:[%s173 + $0x10] sm:$0xff]
      %v188 = vld [vmem:[%s173 + $0x18] sm:$0xff]
      %v189 = vld [vmem:[%s173 + $0x20] sm:$0xff]
      %v190 = vld [vmem:[%s173 + $0x28] sm:$0xff]
      %v191 = vld [vmem:[%s173 + $0x30] sm:$0xff]
      %v192 = vld [vmem:[%s173 + $0x38] sm:$0xff]
      %v193 = vld [vmem:[%s173 + $0x40] sm:$0xff]
      %v194 = vld [vmem:[%s173 + $0x48] sm:$0xff]
      %v195 = vld [vmem:[%s173 + $0x50] sm:$0xff]
      %v196 = vld [vmem:[%s173 + $0x58] sm:$0xff]
      %v197 = vld [vmem:[%s173 + $0x60] sm:$0xff]
      %v198 = vld [vmem:[%s173 + $0x68] sm:$0xff]
      %v199 = vld [vmem:[%s173 + $0x70] sm:$0xff]
      %v200 = vld [vmem:[%s173 + $0x78] sm:$0xff]
      %v201 = vld [vmem:[%s173 + $0x80] sm:$0xff]
      %v202 = vld [vmem:[%s173 + $0x88] sm:$0xff]
      %v203 = vld [vmem:[%s173 + $0x90] sm:$0xff]
      %v204 = vld [vmem:[%s173 + $0x98] sm:$0xff]
      %v205 = vld [vmem:[%s173 + $0xa0] sm:$0xff]
      %v206 = vld [vmem:[%s173 + $0xa8] sm:$0xff]
      %v207 = vld [vmem:[%s173 + $0xb0] sm:$0xff]
      %v208 = vld [vmem:[%s173 + $0xb8] sm:$0xff]
      %v209 = vld [vmem:[%s173 + $0xc0] sm:$0xff]
      %v210 = vld [vmem:[%s173 + $0xc8] sm:$0xff]
      %v211 = vld [vmem:[%s173 + $0xd0] sm:$0xff]
      %v212 = vld [vmem:[%s173 + $0xd8] sm:$0xff]
      %v213 = vld [vmem:[%s173 + $0xe0] sm:$0xff]
      %v214 = vld [vmem:[%s173 + $0xe8] sm:$0xff]
      %v215 = vld [vmem:[%s173 + $0xf0] sm:$0xff]
      %v216 = vld [vmem:[%s173 + $0xf8] sm:$0xff]
      %v217 = vpack.c.bf16 %v186, %v185
      %v218 = vpack.c.bf16 %v188, %v187
      %v219 = vpack.c.bf16 %v190, %v189
      %v220 = vpack.c.bf16 %v192, %v191
      %v221 = vpack.c.bf16 %v194, %v193
      %v222 = vpack.c.bf16 %v196, %v195
      %v223 = vpack.c.bf16 %v198, %v197
      %v224 = vpack.c.bf16 %v200, %v199
      %v225 = vpack.c.bf16 %v202, %v201
      %v226 = vpack.c.bf16 %v204, %v203
      %v227 = vpack.c.bf16 %v206, %v205
      %v228 = vpack.c.bf16 %v208, %v207
      %v229 = vpack.c.bf16 %v210, %v209
      %v230 = vpack.c.bf16 %v212, %v211
      %v231 = vpack.c.bf16 %v214, %v213
      %v232 = vpack.c.bf16 %v216, %v215
      %v233 = vld [vmem:[%s1] sm:$0xf]
      %v234 = vld [vmem:[%s1 + $0x4] sm:$0xf]
      %v235 = vld [vmem:[%s1 + $0x8] sm:$0xf]
      %v236 = vld [vmem:[%s1 + $0xc] sm:$0xf]
      %v237 = vld [vmem:[%s1 + $0x10] sm:$0xf]
      %v238 = vld [vmem:[%s1 + $0x14] sm:$0xf]
      %v239 = vld [vmem:[%s1 + $0x18] sm:$0xf]
      %v240 = vld [vmem:[%s1 + $0x1c] sm:$0xf]
      %v241 = vld [vmem:[%s1 + $0x20] sm:$0xf]
      %v242 = vld [vmem:[%s1 + $0x24] sm:$0xf]
      %v243 = vld [vmem:[%s1 + $0x28] sm:$0xf]
      %v244 = vld [vmem:[%s1 + $0x2c] sm:$0xf]
      %v245 = vld [vmem:[%s1 + $0x30] sm:$0xf]
      %v246 = vld [vmem:[%s1 + $0x34] sm:$0xf]
      %v247 = vld [vmem:[%s1 + $0x38] sm:$0xf]
      %v248 = vld [vmem:[%s1 + $0x3c] sm:$0xf]
      %v265 = vunpack.c.l.b16 %v233
      %v266 = vunpack.c.l.b16 %v234
      %v267 = vunpack.c.l.b16 %v235
      %v268 = vunpack.c.l.b16 %v236
      %v269 = vunpack.c.l.b16 %v237
      %v270 = vunpack.c.l.b16 %v238
      %v271 = vunpack.c.l.b16 %v239
      %v272 = vunpack.c.l.b16 %v240
      %v273 = vunpack.c.l.b16 %v241
      %v274 = vunpack.c.l.b16 %v242
      %v275 = vunpack.c.l.b16 %v243
      %v276 = vunpack.c.l.b16 %v244
      %v277 = vunpack.c.l.b16 %v245
      %v278 = vunpack.c.l.b16 %v246
      %v279 = vunpack.c.l.b16 %v247
      %v280 = vunpack.c.l.b16 %v248
      %v281 = vpack.c.b16 %v266, %v265
      %v282 = vpack.c.b16 %v268, %v267
      %v283 = vpack.c.b16 %v270, %v269
      %v284 = vpack.c.b16 %v272, %v271
      %v285 = vpack.c.b16 %v274, %v273
      %v286 = vpack.c.b16 %v276, %v275
      %v287 = vpack.c.b16 %v278, %v277
      %v288 = vpack.c.b16 %v280, %v279
      %297 = vmatpush.bf16.msra.mxu0 %v288
      %298 = vmatpush.bf16.msra.mxu0 %v287
      %299 = vmatpush.bf16.msra.mxu0 %v286
      %300 = vmatpush.bf16.msra.mxu0 %v285
      %301 = vmatpush.bf16.msra.mxu0 %v284
      %302 = vmatpush.bf16.msra.mxu0 %v283
      %303 = vmatpush.bf16.msra.mxu0 %v282
      %304 = vmatpush.bf16.msra.mxu0 %v281
      %305 = vmatmul.bf16.gmra.mxu0 %v217
      %v306 = vpop.f32.mrf.mxu0
      %v307 = vadd.f32 0.0, %v306
      %v308 = vpop.f32.mrf.mxu0
      %v309 = vadd.f32 0.0, %v308
      %310 = vmatmul.bf16.gmra.mxu0 %v218
      %v311 = vpop.f32.mrf.mxu0
      %v312 = vadd.f32 0.0, %v311
      %v313 = vpop.f32.mrf.mxu0
      %v314 = vadd.f32 0.0, %v313
      %315 = vmatmul.bf16.gmra.mxu0 %v219
      %v316 = vpop.f32.mrf.mxu0
      %v317 = vadd.f32 0.0, %v316
      %v318 = vpop.f32.mrf.mxu0
      %v319 = vadd.f32 0.0, %v318
      %320 = vmatmul.bf16.gmra.mxu0 %v220
      %v321 = vpop.f32.mrf.mxu0
      %v322 = vadd.f32 0.0, %v321
      %v323 = vpop.f32.mrf.mxu0
      %v324 = vadd.f32 0.0, %v323
      %325 = vmatmul.bf16.gmra.mxu0 %v221
      %v326 = vpop.f32.mrf.mxu0
      %v327 = vadd.f32 0.0, %v326
      %v328 = vpop.f32.mrf.mxu0
      %v329 = vadd.f32 0.0, %v328
      %330 = vmatmul.bf16.gmra.mxu0 %v222
      %v331 = vpop.f32.mrf.mxu0
      %v332 = vadd.f32 0.0, %v331
      %v333 = vpop.f32.mrf.mxu0
      %v334 = vadd.f32 0.0, %v333
      %335 = vmatmul.bf16.gmra.mxu0 %v223
      %v336 = vpop.f32.mrf.mxu0
      %v337 = vadd.f32 0.0, %v336
      %v338 = vpop.f32.mrf.mxu0
      %v339 = vadd.f32 0.0, %v338
      %340 = vmatmul.bf16.gmra.mxu0 %v224
      %v341 = vpop.f32.mrf.mxu0
      %v342 = vadd.f32 0.0, %v341
      %v343 = vpop.f32.mrf.mxu0
      %v344 = vadd.f32 0.0, %v343
      %345 = vmatmul.bf16.gmra.mxu0 %v225
      %v346 = vpop.f32.mrf.mxu0
      %v347 = vadd.f32 0.0, %v346
      %v348 = vpop.f32.mrf.mxu0
      %v349 = vadd.f32 0.0, %v348
      %350 = vmatmul.bf16.gmra.mxu0 %v226
      %v351 = vpop.f32.mrf.mxu0
      %v352 = vadd.f32 0.0, %v351
      %v353 = vpop.f32.mrf.mxu0
      %v354 = vadd.f32 0.0, %v353
      %355 = vmatmul.bf16.gmra.mxu0 %v227
      %v356 = vpop.f32.mrf.mxu0
      %v357 = vadd.f32 0.0, %v356
      %v358 = vpop.f32.mrf.mxu0
      %v359 = vadd.f32 0.0, %v358
      %360 = vmatmul.bf16.gmra.mxu0 %v228
      %v361 = vpop.f32.mrf.mxu0
      %v362 = vadd.f32 0.0, %v361
      %v363 = vpop.f32.mrf.mxu0
      %v364 = vadd.f32 0.0, %v363
      %365 = vmatmul.bf16.gmra.mxu0 %v229
      %v366 = vpop.f32.mrf.mxu0
      %v367 = vadd.f32 0.0, %v366
      %v368 = vpop.f32.mrf.mxu0
      %v369 = vadd.f32 0.0, %v368
      %370 = vmatmul.bf16.gmra.mxu0 %v230
      %v371 = vpop.f32.mrf.mxu0
      %v372 = vadd.f32 0.0, %v371
      %v373 = vpop.f32.mrf.mxu0
      %v374 = vadd.f32 0.0, %v373
      %375 = vmatmul.bf16.gmra.mxu0 %v231
      %v376 = vpop.f32.mrf.mxu0
      %v377 = vadd.f32 0.0, %v376
      %v378 = vpop.f32.mrf.mxu0
      %v379 = vadd.f32 0.0, %v378
      %380 = vmatmul.bf16.gmra.mxu0 %v232
      %v381 = vpop.f32.mrf.mxu0
      %v382 = vadd.f32 0.0, %v381
      %v383 = vpop.f32.mrf.mxu0
      %v384 = vadd.f32 0.0, %v383
      %385 = vdwg.mxu0
      %v386 = vpack.c.bf16 %v307, %v307
      %v387 = vpack.c.bf16 %v309, %v309
      %v388 = vpack.c.bf16 %v312, %v312
      %v389 = vpack.c.bf16 %v314, %v314
      %v390 = vpack.c.bf16 %v317, %v317
      %v391 = vpack.c.bf16 %v319, %v319
      %v392 = vpack.c.bf16 %v322, %v322
      %v393 = vpack.c.bf16 %v324, %v324
      %v394 = vpack.c.bf16 %v327, %v327
      %v395 = vpack.c.bf16 %v329, %v329
      %v396 = vpack.c.bf16 %v332, %v332
      %v397 = vpack.c.bf16 %v334, %v334
      %v398 = vpack.c.bf16 %v337, %v337
      %v399 = vpack.c.bf16 %v339, %v339
      %v400 = vpack.c.bf16 %v342, %v342
      %v401 = vpack.c.bf16 %v344, %v344
      %v402 = vpack.c.bf16 %v347, %v347
      %v403 = vpack.c.bf16 %v349, %v349
      %v404 = vpack.c.bf16 %v352, %v352
      %v405 = vpack.c.bf16 %v354, %v354
      %v406 = vpack.c.bf16 %v357, %v357
      %v407 = vpack.c.bf16 %v359, %v359
      %v408 = vpack.c.bf16 %v362, %v362
      %v409 = vpack.c.bf16 %v364, %v364
      %v410 = vpack.c.bf16 %v367, %v367
      %v411 = vpack.c.bf16 %v369, %v369
      %v412 = vpack.c.bf16 %v372, %v372
      %v413 = vpack.c.bf16 %v374, %v374
      %v414 = vpack.c.bf16 %v377, %v377
      %v415 = vpack.c.bf16 %v379, %v379
      %v416 = vpack.c.bf16 %v382, %v382
      %v417 = vpack.c.bf16 %v384, %v384
      %418 = vst [vmem:[%s179] sm:$0xf] %v386
      %419 = vst [vmem:[%s179 + $0x4] sm:$0xf] %v387
      %420 = vst [vmem:[%s179 + $0x8] sm:$0xf] %v388
      %421 = vst [vmem:[%s179 + $0xc] sm:$0xf] %v389
      %422 = vst [vmem:[%s179 + $0x10] sm:$0xf] %v390
      %423 = vst [vmem:[%s179 + $0x14] sm:$0xf] %v391
      %424 = vst [vmem:[%s179 + $0x18] sm:$0xf] %v392
      %425 = vst [vmem:[%s179 + $0x1c] sm:$0xf] %v393
      %426 = vst [vmem:[%s179 + $0x20] sm:$0xf] %v394
      %427 = vst [vmem:[%s179 + $0x24] sm:$0xf] %v395
      %428 = vst [vmem:[%s179 + $0x28] sm:$0xf] %v396
      %429 = vst [vmem:[%s179 + $0x2c] sm:$0xf] %v397
      %430 = vst [vmem:[%s179 + $0x30] sm:$0xf] %v398
      %431 = vst [vmem:[%s179 + $0x34] sm:$0xf] %v399
      %432 = vst [vmem:[%s179 + $0x38] sm:$0xf] %v400
      %433 = vst [vmem:[%s179 + $0x3c] sm:$0xf] %v401
      %434 = vst [vmem:[%s179 + $0x40] sm:$0xf] %v402
      %435 = vst [vmem:[%s179 + $0x44] sm:$0xf] %v403
      %436 = vst [vmem:[%s179 + $0x48] sm:$0xf] %v404
      %437 = vst [vmem:[%s179 + $0x4c] sm:$0xf] %v405
      %438 = vst [vmem:[%s179 + $0x50] sm:$0xf] %v406
      %439 = vst [vmem:[%s179 + $0x54] sm:$0xf] %v407
      %440 = vst [vmem:[%s179 + $0x58] sm:$0xf] %v408
      %441 = vst [vmem:[%s179 + $0x5c] sm:$0xf] %v409
      %442 = vst [vmem:[%s179 + $0x60] sm:$0xf] %v410
      %443 = vst [vmem:[%s179 + $0x64] sm:$0xf] %v411
      %444 = vst [vmem:[%s179 + $0x68] sm:$0xf] %v412
      %445 = vst [vmem:[%s179 + $0x6c] sm:$0xf] %v413
      %446 = vst [vmem:[%s179 + $0x70] sm:$0xf] %v414
      %447 = vst [vmem:[%s179 + $0x74] sm:$0xf] %v415
      %448 = vst [vmem:[%s179 + $0x78] sm:$0xf] %v416
      %449 = vst [vmem:[%s179 + $0x7c] sm:$0xf] %v417
      %v450 = vadd.f32 %v307, %v309
      %v451 = vadd.f32 %v450, %v312
      %v452 = vadd.f32 %v451, %v314
      %v453 = vadd.f32 %v452, %v317
      %v454 = vadd.f32 %v453, %v319
      %v455 = vadd.f32 %v454, %v322
      %v456 = vadd.f32 %v455, %v324
      %v457 = vadd.f32 %v456, %v327
      %v458 = vadd.f32 %v457, %v329
      %v459 = vadd.f32 %v458, %v332
      %v460 = vadd.f32 %v459, %v334
      %v461 = vadd.f32 %v460, %v337
      %v462 = vadd.f32 %v461, %v339
      %v463 = vadd.f32 %v462, %v342
      %v464 = vadd.f32 %v463, %v344
      %v465 = vadd.f32 %v464, %v347
      %v466 = vadd.f32 %v465, %v349
      %v467 = vadd.f32 %v466, %v352
      %v468 = vadd.f32 %v467, %v354
      %v469 = vadd.f32 %v468, %v357
      %v470 = vadd.f32 %v469, %v359
      %v471 = vadd.f32 %v470, %v362
      %v472 = vadd.f32 %v471, %v364
      %v473 = vadd.f32 %v472, %v367
      %v474 = vadd.f32 %v473, %v369
      %v475 = vadd.f32 %v474, %v372
      %v476 = vadd.f32 %v475, %v374
      %v477 = vadd.f32 %v476, %v377
      %v478 = vadd.f32 %v477, %v379
      %v479 = vadd.f32 %v478, %v382
      %v480 = vadd.f32 %v479, %v384
      %v481 = vrot.slane %v480, 4
      %v482 = vadd.f32 %v480, %v481
      %v483 = vrot.slane %v482, 2
      %v484 = vadd.f32 %v482, %v483
      %v485 = vrot.slane %v484, 1
      %v486 = vadd.f32 %v484, %v485
      %v487 = vmul.f32 %v486, 0.00390625
      %v488 = vsub.f32 %v307, %v487
      %v489 = vsub.f32 %v309, %v487
      %v490 = vsub.f32 %v312, %v487
      %v491 = vsub.f32 %v314, %v487
      %v492 = vsub.f32 %v317, %v487
      %v493 = vsub.f32 %v319, %v487
      %v494 = vsub.f32 %v322, %v487
      %v495 = vsub.f32 %v324, %v487
      %v496 = vsub.f32 %v327, %v487
      %v497 = vsub.f32 %v329, %v487
      %v498 = vsub.f32 %v332, %v487
      %v499 = vsub.f32 %v334, %v487
      %v500 = vsub.f32 %v337, %v487
      %v501 = vsub.f32 %v339, %v487
      %v502 = vsub.f32 %v342, %v487
      %v503 = vsub.f32 %v344, %v487
      %v504 = vsub.f32 %v347, %v487
      %v505 = vsub.f32 %v349, %v487
      %v506 = vsub.f32 %v352, %v487
      %v507 = vsub.f32 %v354, %v487
      %v508 = vsub.f32 %v357, %v487
      %v509 = vsub.f32 %v359, %v487
      %v510 = vsub.f32 %v362, %v487
      %v511 = vsub.f32 %v364, %v487
      %v512 = vsub.f32 %v367, %v487
      %v513 = vsub.f32 %v369, %v487
      %v514 = vsub.f32 %v372, %v487
      %v515 = vsub.f32 %v374, %v487
      %v516 = vsub.f32 %v377, %v487
      %v517 = vsub.f32 %v379, %v487
      %v518 = vsub.f32 %v382, %v487
      %v519 = vsub.f32 %v384, %v487
      %v520 = vmul.f32 %v488, %v488
      %v521 = vmul.f32 %v489, %v489
      %v522 = vmul.f32 %v490, %v490
      %v523 = vmul.f32 %v491, %v491
      %v524 = vmul.f32 %v492, %v492
      %v525 = vmul.f32 %v493, %v493
      %v526 = vmul.f32 %v494, %v494
      %v527 = vmul.f32 %v495, %v495
      %v528 = vmul.f32 %v496, %v496
      %v529 = vmul.f32 %v497, %v497
      %v530 = vmul.f32 %v498, %v498
      %v531 = vmul.f32 %v499, %v499
      %v532 = vmul.f32 %v500, %v500
      %v533 = vmul.f32 %v501, %v501
      %v534 = vmul.f32 %v502, %v502
      %v535 = vmul.f32 %v503, %v503
      %v536 = vmul.f32 %v504, %v504
      %v537 = vmul.f32 %v505, %v505
      %v538 = vmul.f32 %v506, %v506
      %v539 = vmul.f32 %v507, %v507
      %v540 = vmul.f32 %v508, %v508
      %v541 = vmul.f32 %v509, %v509
      %v542 = vmul.f32 %v510, %v510
      %v543 = vmul.f32 %v511, %v511
      %v544 = vmul.f32 %v512, %v512
      %v545 = vmul.f32 %v513, %v513
      %v546 = vmul.f32 %v514, %v514
      %v547 = vmul.f32 %v515, %v515
      %v548 = vmul.f32 %v516, %v516
      %v549 = vmul.f32 %v517, %v517
      %v550 = vmul.f32 %v518, %v518
      %v551 = vmul.f32 %v519, %v519
      %v552 = vadd.f32 %v520, %v521
      %v553 = vadd.f32 %v552, %v522
      %v554 = vadd.f32 %v553, %v523
      %v555 = vadd.f32 %v554, %v524
      %v556 = vadd.f32 %v555, %v525
      %v557 = vadd.f32 %v556, %v526
      %v558 = vadd.f32 %v557, %v527
      %v559 = vadd.f32 %v558, %v528
      %v560 = vadd.f32 %v559, %v529
      %v561 = vadd.f32 %v560, %v530
      %v562 = vadd.f32 %v561, %v531
      %v563 = vadd.f32 %v562, %v532
      %v564 = vadd.f32 %v563, %v533
      %v565 = vadd.f32 %v564, %v534
      %v566 = vadd.f32 %v565, %v535
      %v567 = vadd.f32 %v566, %v536
      %v568 = vadd.f32 %v567, %v537
      %v569 = vadd.f32 %v568, %v538
      %v570 = vadd.f32 %v569, %v539
      %v571 = vadd.f32 %v570, %v540
      %v572 = vadd.f32 %v571, %v541
      %v573 = vadd.f32 %v572, %v542
      %v574 = vadd.f32 %v573, %v543
      %v575 = vadd.f32 %v574, %v544
      %v576 = vadd.f32 %v575, %v545
      %v577 = vadd.f32 %v576, %v546
      %v578 = vadd.f32 %v577, %v547
      %v579 = vadd.f32 %v578, %v548
      %v580 = vadd.f32 %v579, %v549
      %v581 = vadd.f32 %v580, %v550
      %v582 = vadd.f32 %v581, %v551
      %v583 = vrot.slane %v582, 4
      %v584 = vadd.f32 %v582, %v583
      %v585 = vrot.slane %v584, 2
      %v586 = vadd.f32 %v584, %v585
      %v587 = vrot.slane %v586, 1
      %v588 = vadd.f32 %v586, %v587
      %vm589 = vcmask 1040384
      %v590 = vsel %vm589, %v486, %v588
      %591 = vst [vmem:[%s184] sm:$0x3] %v590
      %s592 = smul.u32 32, %s15
      %p593 = scmp.lt.s32.totalorder %s592, 63
      %s594 = scalar_select %p593, %s592, 63
      %s595 = smul.addr %s594, 4
      %s596 = scalar_lea.vmem %s2, %s595
      %p597 = scmp.lt.s32.totalorder %s15, 1
      %s598 = scalar_select %p597, %s15, 1
      %s599 = smul.addr %s598, 2
      %s600 = scalar_lea.vmem %s3, %s599
      // Predicated region
      $region29: #{residual_block_forward.3} parent=27 // pred_check
        %p601 = pneg %p80
      $region30: #{residual_block_forward.3} parent=27 // pred_check_branch
        %603 = sbr.rel (%p601) target = $region32
      $region31: #{residual_block_forward.3} parent=27 // pred_region
        %s604 = smul.u32 32, %s15
      $region32: #{residual_block_forward.3} parent=27 // pred_fallthru
        _
      // Predicated region
      $region33: #{residual_block_forward.3} parent=27 // pred_check
        %p605 = pneg %p106
      $region34: #{residual_block_forward.3} parent=27 // pred_check_branch
        %607 = sbr.rel (%p605) target = $region36
      $region35: #{residual_block_forward.3} parent=27 // pred_region
        _
      $region36: #{residual_block_forward.3} parent=27 // pred_fallthru
        _
    $region28: #{residual_block_forward.3} parent=5 // pred_fallthru
      _
    %p608 = scmp.le.s32.totalorder 2, %s10
    // Predicated region
    $region37: #{residual_block_forward.3} parent=5 // pred_check
      %p609 = pneg %p608
    $region38: #{residual_block_forward.3} parent=5 // pred_check_branch
      %611 = sbr.rel (%p609) target = $region40
    $region39: #{residual_block_forward.3} parent=5 // pred_region
      %s612 = ssub.s32 %s10, 2
      // Predicated region
      $region41: #{residual_block_forward.3} parent=39 // pred_check
        %p613 = pneg %p86
      $region42: #{residual_block_forward.3} parent=39 // pred_check_branch
        %615 = sbr.rel (%p613) target = $region44
      $region43: #{residual_block_forward.3} parent=39 // pred_region
        %s616 = smul.u32 32, %s16
        %p617 = scmp.lt.s32.totalorder %s616, 63
        %s618 = scalar_select %p617, %s616, 63
        %s619 = smul.addr %s618, 4
        %s620 = scalar_lea.vmem %s2, %s619
      $region44: #{residual_block_forward.3} parent=39 // pred_fallthru
        _
      // Predicated region
      $region45: #{residual_block_forward.3} parent=39 // pred_check
        %p621 = pneg %p112
      $region46: #{residual_block_forward.3} parent=39 // pred_check_branch
        %623 = sbr.rel (%p621) target = $region48
      $region47: #{residual_block_forward.3} parent=39 // pred_region
        %p624 = scmp.lt.s32.totalorder %s16, 1
        %s625 = scalar_select %p624, %s16, 1
        %s626 = smul.addr %s625, 2
        %s627 = scalar_lea.vmem %s3, %s626
      $region48: #{residual_block_forward.3} parent=39 // pred_fallthru
        _
    $region40: #{residual_block_forward.3} parent=5 // pred_fallthru
      _
  $region6: #{residual_block_forward.3} parent=0 // loop_footer
    %s14 = sadd.s32 1, %s10
  $region7: #{residual_block_forward.3} parent=0 // loop_footer_branch
    %9 = sbr.rel target = $region3
  $region8: #{residual_block_forward.3} parent=0 // loop_exit
    _

// kernel: residual_block_forward.5
$region0: #{residual_block_forward.5}
  #allocation0 [shape = 'u32[]', space=smem, size = 0x4, offset = 0x4, fixed_abs, tag = 'smem constant byte address 0x4 - core index']
  #allocation1 [shape = 'u32[72,128]{1,0:T(1,128)}', space=vmem, size = 0x9000, scoped, tag = 'internal scratch']
  %s0 = inlined_call_operand.vmem [shape: bf16[512,128], index: 0, kind: input, shape index: {}]
  %s1 = inlined_call_operand.vmem [shape: f32[1,128], index: 1, kind: input, shape index: {}]
  %s2 = inlined_call_operand.vmem [shape: f32[1,128], index: 2, kind: input, shape index: {}]
  %s3 = inlined_call_operand.vmem [shape: f32[512,128], index: 3, kind: input, shape index: {}]
  %s4 = inlined_call_operand.vmem [shape: f32[512,128], index: 4, kind: output, shape index: {}]
  %s5 = sld [smem:[#allocation0]]
  $region49: #{residual_block_forward.5} parent=0
    _
  %s7 = ssub.s32 1, %s5
  %s8 = scalar_select 0, %s7, %s5
  loop: start=0, step=1, limit=4
  $region2: #{residual_block_forward.5} parent=0 // loop_pre_header
    _
  $region3: #{residual_block_forward.5} parent=0 // loop_header
    %s10 = sphi 0, %s14
    %p11 = scmp.ge.s32.totalorder %s10, 4
    %s20 = sphi 0, %s22
    %s23 = sphi 0, %s20
    %s24 = sphi 0, %s23
    %s40 = sphi 0, %s24
    %s44 = sphi 0, %s44
    %s46 = sphi 0, %s44
    %s47 = sphi 0, %s46
    %s61 = sphi 0, %s47
    %s65 = sphi 0, %s65
    %s67 = sphi 0, %s65
    %s68 = sphi 0, %s67
    %s82 = sphi 0, %s68
    %s88 = sphi 0, %s90
    %s91 = sphi 0, %s88
    %s92 = sphi 0, %s91
    %s108 = sphi 0, %s92
    %s114 = sphi 0, %s116
    %s117 = sphi 0, %s114
    %s118 = sphi 0, %s117
    %s134 = sphi 0, %s118
  $region4: #{residual_block_forward.5} parent=0 // loop_header_branch
    %13 = sbr.rel (%p11) target = $region8
  $region5: #{residual_block_forward.5} parent=0 // loop_body
    %s15 = ssub.s32 %s10, 1
    %s16 = ssub.s32 %s10, 2
    %s17 = sadd.s32 %s10, 1
    %s18 = ssub.s32 %s10, %s17
    %p19 = scmp.eq.s32.totalorder %s18, 0
    %s21 = sadd.s32 %s20, 1
    %s22 = scalar_select %p19, %s20, %s21
    %p25 = pneg %p19
    %p26 = scmp.eq.s32.totalorder %s10, 1
    %p27 = por %p25, %p26
    %p28 = scmp.ne.s32.totalorder %s20, %s23
    %p29 = scmp.eq.s32.totalorder %s10, 0
    %p30 = por %p28, %p29
    %p31 = scmp.ne.s32.totalorder %s20, %s23
    %p32 = scmp.eq.s32.totalorder %s15, 1
    %p33 = por %p31, %p32
    %p34 = scmp.ne.s32.totalorder %s23, %s24
    %p35 = scmp.eq.s32.totalorder %s15, 0
    %p36 = por %p34, %p35
    %p37 = scmp.ne.s32.totalorder %s23, %s24
    %p38 = scmp.eq.s32.totalorder %s16, 1
    %p39 = por %p37, %p38
    %p41 = scmp.ne.s32.totalorder %s24, %s40
    %p42 = scmp.eq.s32.totalorder %s16, 0
    %p43 = por %p41, %p42
    %s45 = sadd.s32 %s44, 1
    %p48 = scmp.eq.s32.totalorder %s10, 1
    %p49 = scmp.ne.s32.totalorder %s44, %s46
    %p50 = scmp.eq.s32.totalorder %s10, 0
    %p51 = por %p49, %p50
    %p52 = scmp.ne.s32.totalorder %s44, %s46
    %p53 = scmp.eq.s32.totalorder %s15, 1
    %p54 = por %p52, %p53
    %p55 = scmp.ne.s32.totalorder %s46, %s47
    %p56 = scmp.eq.s32.totalorder %s15, 0
    %p57 = por %p55, %p56
    %p58 = scmp.ne.s32.totalorder %s46, %s47
    %p59 = scmp.eq.s32.totalorder %s16, 1
    %p60 = por %p58, %p59
    %p62 = scmp.ne.s32.totalorder %s47, %s61
    %p63 = scmp.eq.s32.totalorder %s16, 0
    %p64 = por %p62, %p63
    %s66 = sadd.s32 %s65, 1
    %p69 = scmp.eq.s32.totalorder %s10, 1
    %p70 = scmp.ne.s32.totalorder %s65, %s67
    %p71 = scmp.eq.s32.totalorder %s10, 0
    %p72 = por %p70, %p71
    %p73 = scmp.ne.s32.totalorder %s65, %s67
    %p74 = scmp.eq.s32.totalorder %s15, 1
    %p75 = por %p73, %p74
    %p76 = scmp.ne.s32.totalorder %s67, %s68
    %p77 = scmp.eq.s32.totalorder %s15, 0
    %p78 = por %p76, %p77
    %p79 = scmp.ne.s32.totalorder %s67, %s68
    %p80 = scmp.eq.s32.totalorder %s16, 1
    %p81 = por %p79, %p80
    %p83 = scmp.ne.s32.totalorder %s68, %s82
    %p84 = scmp.eq.s32.totalorder %s16, 0
    %p85 = por %p83, %p84
    %s86 = ssub.s32 %s10, %s17
    %p87 = scmp.eq.s32.totalorder %s86, 0
    %s89 = sadd.s32 %s88, 1
    %s90 = scalar_select %p87, %s88, %s89
    %p93 = pneg %p87
    %p94 = scmp.eq.s32.totalorder %s10, 1
    %p95 = por %p93, %p94
    %p96 = scmp.ne.s32.totalorder %s88, %s91
    %p97 = scmp.eq.s32.totalorder %s10, 0
    %p98 = por %p96, %p97
    %p99 = scmp.ne.s32.totalorder %s88, %s91
    %p100 = scmp.eq.s32.totalorder %s15, 1
    %p101 = por %p99, %p100
    %p102 = scmp.ne.s32.totalorder %s91, %s92
    %p103 = scmp.eq.s32.totalorder %s15, 0
    %p104 = por %p102, %p103
    %p105 = scmp.ne.s32.totalorder %s91, %s92
    %p106 = scmp.eq.s32.totalorder %s16, 1
    %p107 = por %p105, %p106
    %p109 = scmp.ne.s32.totalorder %s92, %s108
    %p110 = scmp.eq.s32.totalorder %s16, 0
    %p111 = por %p109, %p110
    %s112 = ssub.s32 %s10, %s17
    %p113 = scmp.eq.s32.totalorder %s112, 0
    %s115 = sadd.s32 %s114, 1
    %s116 = scalar_select %p113, %s114, %s115
    %p119 = pneg %p113
    %p120 = scmp.eq.s32.totalorder %s10, 1
    %p121 = por %p119, %p120
    %p122 = scmp.ne.s32.totalorder %s114, %s117
    %p123 = scmp.eq.s32.totalorder %s10, 0
    %p124 = por %p122, %p123
    %p125 = scmp.ne.s32.totalorder %s114, %s117
    %p126 = scmp.eq.s32.totalorder %s15, 1
    %p127 = por %p125, %p126
    %p128 = scmp.ne.s32.totalorder %s117, %s118
    %p129 = scmp.eq.s32.totalorder %s15, 0
    %p130 = por %p128, %p129
    %p131 = scmp.ne.s32.totalorder %s117, %s118
    %p132 = scmp.eq.s32.totalorder %s16, 1
    %p133 = por %p131, %p132
    %p135 = scmp.ne.s32.totalorder %s118, %s134
    %p136 = scmp.eq.s32.totalorder %s16, 0
    %p137 = por %p135, %p136
    %p138 = scmp.le.s32.totalorder 1, %s10
    %p139 = scmp.lt.s32.totalorder %s10, 3
    %p140 = pnand %p138, %p139
    %p141 = pneg %p140
    // Predicated region
    $region9: #{residual_block_forward.5} parent=5 // pred_check
      _
    $region10: #{residual_block_forward.5} parent=5 // pred_check_branch
      %143 = sbr.rel (%p140) target = $region12
    $region11: #{residual_block_forward.5} parent=5 // pred_region
      %s144 = ssub.s32 %s10, 1
      // Predicated region
      $region13: #{residual_block_forward.5} parent=11 // pred_check
        %p145 = pneg %p57
      $region14: #{residual_block_forward.5} parent=11 // pred_check_branch
        %147 = sbr.rel (%p145) target = $region16
      $region15: #{residual_block_forward.5} parent=11 // pred_region
        _
      $region16: #{residual_block_forward.5} parent=11 // pred_fallthru
        _
      // Predicated region
      $region17: #{residual_block_forward.5} parent=11 // pred_check
        %p148 = pneg %p78
      $region18: #{residual_block_forward.5} parent=11 // pred_check_branch
        %150 = sbr.rel (%p148) target = $region20
      $region19: #{residual_block_forward.5} parent=11 // pred_region
        _
      $region20: #{residual_block_forward.5} parent=11 // pred_fallthru
        _
    $region12: #{residual_block_forward.5} parent=5 // pred_fallthru
      _
    %p151 = scmp.lt.s32.totalorder %s10, 2
    // Predicated region
    $region21: #{residual_block_forward.5} parent=5 // pred_check
      %p152 = pneg %p151
    $region22: #{residual_block_forward.5} parent=5 // pred_check_branch
      %154 = sbr.rel (%p152) target = $region24
    $region23: #{residual_block_forward.5} parent=5 // pred_region
      // Predicated region
      $region25: #{residual_block_forward.5} parent=23 // pred_check
        %p155 = pneg %p30
      $region26: #{residual_block_forward.5} parent=23 // pred_check_branch
        %157 = sbr.rel (%p155) target = $region28
      $region27: #{residual_block_forward.5} parent=23 // pred_region
        %s158 = smul.u32 32, %s10
        %p159 = scmp.lt.s32.totalorder %s158, 63
        %s160 = scalar_select %p159, %s158, 63
        %s161 = smul.addr %s160, 4
        %s162 = scalar_lea.vmem %s0, %s161
        %s163 = smul.u32 32, %s10
      $region28: #{residual_block_forward.5} parent=23 // pred_fallthru
        _
      // Predicated region
      $region29: #{residual_block_forward.5} parent=23 // pred_check
        %p164 = pneg %p98
      $region30: #{residual_block_forward.5} parent=23 // pred_check_branch
        %166 = sbr.rel (%p164) target = $region32
      $region31: #{residual_block_forward.5} parent=23 // pred_region
        %s167 = smul.u32 32, %s10
        %p168 = scmp.lt.s32.totalorder %s167, 63
        %s169 = scalar_select %p168, %s167, 63
        %s170 = smul.addr %s169, 8
        %s171 = scalar_lea.vmem %s3, %s170
        %s172 = smul.u32 32, %s10
      $region32: #{residual_block_forward.5} parent=23 // pred_fallthru
        _
    $region24: #{residual_block_forward.5} parent=5 // pred_fallthru
      _
    %p173 = scmp.le.s32.totalorder 1, %s10
    %p174 = scmp.lt.s32.totalorder %s10, 3
    %p175 = pnand %p173, %p174
    %p176 = pneg %p175
    // Predicated region
    $region33: #{residual_block_forward.5} parent=5 // pred_check
      _
    $region34: #{residual_block_forward.5} parent=5 // pred_check_branch
      %178 = sbr.rel (%p175) target = $region36
    $region35: #{residual_block_forward.5} parent=5 // pred_region
      %s179 = ssub.s32 %s10, 1
      %s180 = smul.u32 32, %s15
      %p181 = scmp.lt.s32.totalorder %s180, 63
      %s182 = scalar_select %p181, %s180, 63
      %s183 = smul.addr %s182, 4
      %s184 = scalar_lea.vmem %s0, %s183
      %p185 = pneg %p36
      %p186 = pneg %p33
      %p187 = pneg %p57
      %p188 = pneg %p54
      %p189 = pneg %p78
      %p190 = pneg %p75
      %s191 = smul.u32 32, %s15
      %p192 = scmp.lt.s32.totalorder %s191, 63
      %s193 = scalar_select %p192, %s191, 63
      %s194 = smul.addr %s193, 8
      %s195 = scalar_lea.vmem %s3, %s194
      %p196 = pneg %p104
      %p197 = pneg %p101
      %p198 = pneg %p130
      %p199 = pneg %p127
      %s200 = smul.u32 32, %s15
      %p201 = scmp.lt.s32.totalorder %s200, 63
      %s202 = scalar_select %p201, %s200, 63
      %s203 = smul.addr %s202, 8
      %s204 = scalar_lea.vmem %s4, %s203
      %s205 = smul.u32 32, %s15
      %p206 = scmp.lt.s32.totalorder %s205, 63
      %s207 = scalar_select %p206, %s205, 63
      %s208 = smul.addr %s207, 4
      %s209 = scalar_lea.vmem %s0, %s208
      %s210 = smul.u32 32, %s15
      %s211 = smul.u32 32, %s15
      %p212 = scmp.lt.s32.totalorder %s211, 63
      %s213 = scalar_select %p212, %s211, 63
      %s214 = smul.addr %s213, 8
      %s215 = scalar_lea.vmem %s3, %s214
      %s216 = smul.u32 32, %s15
      %s217 = smul.u32 32, %s15
      %p218 = scmp.lt.s32.totalorder %s217, 63
      %s219 = scalar_select %p218, %s217, 63
      %s220 = smul.addr %s219, 8
      %s221 = scalar_lea.vmem %s4, %s220
      %s222 = smul.u32 32, %s15
      %v223 = vld [vmem:[%s209] sm:$0xf]
      %v224 = vld [vmem:[%s209 + $0x4] sm:$0xf]
      %v225 = vld [vmem:[%s209 + $0x8] sm:$0xf]
      %v226 = vld [vmem:[%s209 + $0xc] sm:$0xf]
      %v227 = vld [vmem:[%s209 + $0x10] sm:$0xf]
      %v228 = vld [vmem:[%s209 + $0x14] sm:$0xf]
      %v229 = vld [vmem:[%s209 + $0x18] sm:$0xf]
      %v230 = vld [vmem:[%s209 + $0x1c] sm:$0xf]
      %v231 = vld [vmem:[%s209 + $0x20] sm:$0xf]
      %v232 = vld [vmem:[%s209 + $0x24] sm:$0xf]
      %v233 = vld [vmem:[%s209 + $0x28] sm:$0xf]
      %v234 = vld [vmem:[%s209 + $0x2c] sm:$0xf]
      %v235 = vld [vmem:[%s209 + $0x30] sm:$0xf]
      %v236 = vld [vmem:[%s209 + $0x34] sm:$0xf]
      %v237 = vld [vmem:[%s209 + $0x38] sm:$0xf]
      %v238 = vld [vmem:[%s209 + $0x3c] sm:$0xf]
      %v239 = vld [vmem:[%s209 + $0x40] sm:$0xf]
      %v240 = vld [vmem:[%s209 + $0x44] sm:$0xf]
      %v241 = vld [vmem:[%s209 + $0x48] sm:$0xf]
      %v242 = vld [vmem:[%s209 + $0x4c] sm:$0xf]
      %v243 = vld [vmem:[%s209 + $0x50] sm:$0xf]
      %v244 = vld [vmem:[%s209 + $0x54] sm:$0xf]
      %v245 = vld [vmem:[%s209 + $0x58] sm:$0xf]
      %v246 = vld [vmem:[%s209 + $0x5c] sm:$0xf]
      %v247 = vld [vmem:[%s209 + $0x60] sm:$0xf]
      %v248 = vld [vmem:[%s209 + $0x64] sm:$0xf]
      %v249 = vld [vmem:[%s209 + $0x68] sm:$0xf]
      %v250 = vld [vmem:[%s209 + $0x6c] sm:$0xf]
      %v251 = vld [vmem:[%s209 + $0x70] sm:$0xf]
      %v252 = vld [vmem:[%s209 + $0x74] sm:$0xf]
      %v253 = vld [vmem:[%s209 + $0x78] sm:$0xf]
      %v254 = vld [vmem:[%s209 + $0x7c] sm:$0xf]
      %v255 = vunpack.c.l.bf16 %v223
      %v256 = vunpack.c.l.bf16 %v224
      %v257 = vunpack.c.l.bf16 %v225
      %v258 = vunpack.c.l.bf16 %v226
      %v259 = vunpack.c.l.bf16 %v227
      %v260 = vunpack.c.l.bf16 %v228
      %v261 = vunpack.c.l.bf16 %v229
      %v262 = vunpack.c.l.bf16 %v230
      %v263 = vunpack.c.l.bf16 %v231
      %v264 = vunpack.c.l.bf16 %v232
      %v265 = vunpack.c.l.bf16 %v233
      %v266 = vunpack.c.l.bf16 %v234
      %v267 = vunpack.c.l.bf16 %v235
      %v268 = vunpack.c.l.bf16 %v236
      %v269 = vunpack.c.l.bf16 %v237
      %v270 = vunpack.c.l.bf16 %v238
      %v271 = vunpack.c.l.bf16 %v239
      %v272 = vunpack.c.l.bf16 %v240
      %v273 = vunpack.c.l.bf16 %v241
      %v274 = vunpack.c.l.bf16 %v242
      %v275 = vunpack.c.l.bf16 %v243
      %v276 = vunpack.c.l.bf16 %v244
      %v277 = vunpack.c.l.bf16 %v245
      %v278 = vunpack.c.l.bf16 %v246
      %v279 = vunpack.c.l.bf16 %v247
      %v280 = vunpack.c.l.bf16 %v248
      %v281 = vunpack.c.l.bf16 %v249
      %v282 = vunpack.c.l.bf16 %v250
      %v283 = vunpack.c.l.bf16 %v251
      %v284 = vunpack.c.l.bf16 %v252
      %v285 = vunpack.c.l.bf16 %v253
      %v286 = vunpack.c.l.bf16 %v254
      %v287 = vld [vmem:[%s1] sm:$0x1]
      %v289 = vperm.slane %v287, 0
      %v291 = vmul.f32 %v255, %v289
      %v292 = vmul.f32 %v256, %v289
      %v293 = vmul.f32 %v257, %v289
      %v294 = vmul.f32 %v258, %v289
      %v295 = vmul.f32 %v259, %v289
      %v296 = vmul.f32 %v260, %v289
      %v297 = vmul.f32 %v261, %v289
      %v298 = vmul.f32 %v262, %v289
      %v299 = vmul.f32 %v263, %v289
      %v300 = vmul.f32 %v264, %v289
      %v301 = vmul.f32 %v265, %v289
      %v302 = vmul.f32 %v266, %v289
      %v303 = vmul.f32 %v267, %v289
      %v304 = vmul.f32 %v268, %v289
      %v305 = vmul.f32 %v269, %v289
      %v306 = vmul.f32 %v270, %v289
      %v307 = vmul.f32 %v271, %v289
      %v308 = vmul.f32 %v272, %v289
      %v309 = vmul.f32 %v273, %v289
      %v310 = vmul.f32 %v274, %v289
      %v311 = vmul.f32 %v275, %v289
      %v312 = vmul.f32 %v276, %v289
      %v313 = vmul.f32 %v277, %v289
      %v314 = vmul.f32 %v278, %v289
      %v315 = vmul.f32 %v279, %v289
      %v316 = vmul.f32 %v280, %v289
      %v317 = vmul.f32 %v281, %v289
      %v318 = vmul.f32 %v282, %v289
      %v319 = vmul.f32 %v283, %v289
      %v320 = vmul.f32 %v284, %v289
      %v321 = vmul.f32 %v285, %v289
      %v322 = vmul.f32 %v286, %v289
      %v323 = vld [vmem:[%s2] sm:$0x1]
      %v325 = vperm.slane %v323, 0
      %v327 = vadd.f32 %v291, %v325
      %v328 = vadd.f32 %v292, %v325
      %v329 = vadd.f32 %v293, %v325
      %v330 = vadd.f32 %v294, %v325
      %v331 = vadd.f32 %v295, %v325
      %v332 = vadd.f32 %v296, %v325
      %v333 = vadd.f32 %v297, %v325
      %v334 = vadd.f32 %v298, %v325
      %v335 = vadd.f32 %v299, %v325
      %v336 = vadd.f32 %v300, %v325
      %v337 = vadd.f32 %v301, %v325
      %v338 = vadd.f32 %v302, %v325
      %v339 = vadd.f32 %v303, %v325
      %v340 = vadd.f32 %v304, %v325
      %v341 = vadd.f32 %v305, %v325
      %v342 = vadd.f32 %v306, %v325
      %v343 = vadd.f32 %v307, %v325
      %v344 = vadd.f32 %v308, %v325
      %v345 = vadd.f32 %v309, %v325
      %v346 = vadd.f32 %v310, %v325
      %v347 = vadd.f32 %v311, %v325
      %v348 = vadd.f32 %v312, %v325
      %v349 = vadd.f32 %v313, %v325
      %v350 = vadd.f32 %v314, %v325
      %v351 = vadd.f32 %v315, %v325
      %v352 = vadd.f32 %v316, %v325
      %v353 = vadd.f32 %v317, %v325
      %v354 = vadd.f32 %v318, %v325
      %v355 = vadd.f32 %v319, %v325
      %v356 = vadd.f32 %v320, %v325
      %v357 = vadd.f32 %v321, %v325
      %v358 = vadd.f32 %v322, %v325
      %vm359 = vcmp.gt.f32.partialorder %v327, 0.0
      %vm360 = vcmp.gt.f32.partialorder %v328, 0.0
      %vm361 = vcmp.gt.f32.partialorder %v329, 0.0
      %vm362 = vcmp.gt.f32.partialorder %v330, 0.0
      %vm363 = vcmp.gt.f32.partialorder %v331, 0.0
      %vm364 = vcmp.gt.f32.partialorder %v332, 0.0
      %vm365 = vcmp.gt.f32.partialorder %v333, 0.0
      %vm366 = vcmp.gt.f32.partialorder %v334, 0.0
      %vm367 = vcmp.gt.f32.partialorder %v335, 0.0
      %vm368 = vcmp.gt.f32.partialorder %v336, 0.0
      %vm369 = vcmp.gt.f32.partialorder %v337, 0.0
      %vm370 = vcmp.gt.f32.partialorder %v338, 0.0
      %vm371 = vcmp.gt.f32.partialorder %v339, 0.0
      %vm372 = vcmp.gt.f32.partialorder %v340, 0.0
      %vm373 = vcmp.gt.f32.partialorder %v341, 0.0
      %vm374 = vcmp.gt.f32.partialorder %v342, 0.0
      %vm375 = vcmp.gt.f32.partialorder %v343, 0.0
      %vm376 = vcmp.gt.f32.partialorder %v344, 0.0
      %vm377 = vcmp.gt.f32.partialorder %v345, 0.0
      %vm378 = vcmp.gt.f32.partialorder %v346, 0.0
      %vm379 = vcmp.gt.f32.partialorder %v347, 0.0
      %vm380 = vcmp.gt.f32.partialorder %v348, 0.0
      %vm381 = vcmp.gt.f32.partialorder %v349, 0.0
      %vm382 = vcmp.gt.f32.partialorder %v350, 0.0
      %vm383 = vcmp.gt.f32.partialorder %v351, 0.0
      %vm384 = vcmp.gt.f32.partialorder %v352, 0.0
      %vm385 = vcmp.gt.f32.partialorder %v353, 0.0
      %vm386 = vcmp.gt.f32.partialorder %v354, 0.0
      %vm387 = vcmp.gt.f32.partialorder %v355, 0.0
      %vm388 = vcmp.gt.f32.partialorder %v356, 0.0
      %vm389 = vcmp.gt.f32.partialorder %v357, 0.0
      %vm390 = vcmp.gt.f32.partialorder %v358, 0.0
      %v391 = vmul.f32 %v327, 0.1
      %v392 = vmul.f32 %v328, 0.1
      %v393 = vmul.f32 %v329, 0.1
      %v394 = vmul.f32 %v330, 0.1
      %v395 = vmul.f32 %v331, 0.1
      %v396 = vmul.f32 %v332, 0.1
      %v397 = vmul.f32 %v333, 0.1
      %v398 = vmul.f32 %v334, 0.1
      %v399 = vmul.f32 %v335, 0.1
      %v400 = vmul.f32 %v336, 0.1
      %v401 = vmul.f32 %v337, 0.1
      %v402 = vmul.f32 %v338, 0.1
      %v403 = vmul.f32 %v339, 0.1
      %v404 = vmul.f32 %v340, 0.1
      %v405 = vmul.f32 %v341, 0.1
      %v406 = vmul.f32 %v342, 0.1
      %v407 = vmul.f32 %v343, 0.1
      %v408 = vmul.f32 %v344, 0.1
      %v409 = vmul.f32 %v345, 0.1
      %v410 = vmul.f32 %v346, 0.1
      %v411 = vmul.f32 %v347, 0.1
      %v412 = vmul.f32 %v348, 0.1
      %v413 = vmul.f32 %v349, 0.1
      %v414 = vmul.f32 %v350, 0.1
      %v415 = vmul.f32 %v351, 0.1
      %v416 = vmul.f32 %v352, 0.1
      %v417 = vmul.f32 %v353, 0.1
      %v418 = vmul.f32 %v354, 0.1
      %v419 = vmul.f32 %v355, 0.1
      %v420 = vmul.f32 %v356, 0.1
      %v421 = vmul.f32 %v357, 0.1
      %v422 = vmul.f32 %v358, 0.1
      %v423 = vsel %vm359, %v327, %v391
      %v424 = vsel %vm360, %v328, %v392
      %v425 = vsel %vm361, %v329, %v393
      %v426 = vsel %vm362, %v330, %v394
      %v427 = vsel %vm363, %v331, %v395
      %v428 = vsel %vm364, %v332, %v396
      %v429 = vsel %vm365, %v333, %v397
      %v430 = vsel %vm366, %v334, %v398
      %v431 = vsel %vm367, %v335, %v399
      %v432 = vsel %vm368, %v336, %v400
      %v433 = vsel %vm369, %v337, %v401
      %v434 = vsel %vm370, %v338, %v402
      %v435 = vsel %vm371, %v339, %v403
      %v436 = vsel %vm372, %v340, %v404
      %v437 = vsel %vm373, %v341, %v405
      %v438 = vsel %vm374, %v342, %v406
      %v439 = vsel %vm375, %v343, %v407
      %v440 = vsel %vm376, %v344, %v408
      %v441 = vsel %vm377, %v345, %v409
      %v442 = vsel %vm378, %v346, %v410
      %v443 = vsel %vm379, %v347, %v411
      %v444 = vsel %vm380, %v348, %v412
      %v445 = vsel %vm381, %v349, %v413
      %v446 = vsel %vm382, %v350, %v414
      %v447 = vsel %vm383, %v351, %v415
      %v448 = vsel %vm384, %v352, %v416
      %v449 = vsel %vm385, %v353, %v417
      %v450 = vsel %vm386, %v354, %v418
      %v451 = vsel %vm387, %v355, %v419
      %v452 = vsel %vm388, %v356, %v420
      %v453 = vsel %vm389, %v357, %v421
      %v454 = vsel %vm390, %v358, %v422
      %v455 = vld [vmem:[%s215] sm:$0xff]
      %v456 = vld [vmem:[%s215 + $0x8] sm:$0xff]
      %v457 = vld [vmem:[%s215 + $0x10] sm:$0xff]
      %v458 = vld [vmem:[%s215 + $0x18] sm:$0xff]
      %v459 = vld [vmem:[%s215 + $0x20] sm:$0xff]
      %v460 = vld [vmem:[%s215 + $0x28] sm:$0xff]
      %v461 = vld [vmem:[%s215 + $0x30] sm:$0xff]
      %v462 = vld [vmem:[%s215 + $0x38] sm:$0xff]
      %v463 = vld [vmem:[%s215 + $0x40] sm:$0xff]
      %v464 = vld [vmem:[%s215 + $0x48] sm:$0xff]
      %v465 = vld [vmem:[%s215 + $0x50] sm:$0xff]
      %v466 = vld [vmem:[%s215 + $0x58] sm:$0xff]
      %v467 = vld [vmem:[%s215 + $0x60] sm:$0xff]
      %v468 = vld [vmem:[%s215 + $0x68] sm:$0xff]
      %v469 = vld [vmem:[%s215 + $0x70] sm:$0xff]
      %v470 = vld [vmem:[%s215 + $0x78] sm:$0xff]
      %v471 = vld [vmem:[%s215 + $0x80] sm:$0xff]
      %v472 = vld [vmem:[%s215 + $0x88] sm:$0xff]
      %v473 = vld [vmem:[%s215 + $0x90] sm:$0xff]
      %v474 = vld [vmem:[%s215 + $0x98] sm:$0xff]
      %v475 = vld [vmem:[%s215 + $0xa0] sm:$0xff]
      %v476 = vld [vmem:[%s215 + $0xa8] sm:$0xff]
      %v477 = vld [vmem:[%s215 + $0xb0] sm:$0xff]
      %v478 = vld [vmem:[%s215 + $0xb8] sm:$0xff]
      %v479 = vld [vmem:[%s215 + $0xc0] sm:$0xff]
      %v480 = vld [vmem:[%s215 + $0xc8] sm:$0xff]
      %v481 = vld [vmem:[%s215 + $0xd0] sm:$0xff]
      %v482 = vld [vmem:[%s215 + $0xd8] sm:$0xff]
      %v483 = vld [vmem:[%s215 + $0xe0] sm:$0xff]
      %v484 = vld [vmem:[%s215 + $0xe8] sm:$0xff]
      %v485 = vld [vmem:[%s215 + $0xf0] sm:$0xff]
      %v486 = vld [vmem:[%s215 + $0xf8] sm:$0xff]
      %v487 = vadd.f32 %v423, %v455
      %v488 = vadd.f32 %v424, %v456
      %v489 = vadd.f32 %v425, %v457
      %v490 = vadd.f32 %v426, %v458
      %v491 = vadd.f32 %v427, %v459
      %v492 = vadd.f32 %v428, %v460
      %v493 = vadd.f32 %v429, %v461
      %v494 = vadd.f32 %v430, %v462
      %v495 = vadd.f32 %v431, %v463
      %v496 = vadd.f32 %v432, %v464
      %v497 = vadd.f32 %v433, %v465
      %v498 = vadd.f32 %v434, %v466
      %v499 = vadd.f32 %v435, %v467
      %v500 = vadd.f32 %v436, %v468
      %v501 = vadd.f32 %v437, %v469
      %v502 = vadd.f32 %v438, %v470
      %v503 = vadd.f32 %v439, %v471
      %v504 = vadd.f32 %v440, %v472
      %v505 = vadd.f32 %v441, %v473
      %v506 = vadd.f32 %v442, %v474
      %v507 = vadd.f32 %v443, %v475
      %v508 = vadd.f32 %v444, %v476
      %v509 = vadd.f32 %v445, %v477
      %v510 = vadd.f32 %v446, %v478
      %v511 = vadd.f32 %v447, %v479
      %v512 = vadd.f32 %v448, %v480
      %v513 = vadd.f32 %v449, %v481
      %v514 = vadd.f32 %v450, %v482
      %v515 = vadd.f32 %v451, %v483
      %v516 = vadd.f32 %v452, %v484
      %v517 = vadd.f32 %v453, %v485
      %v518 = vadd.f32 %v454, %v486
      %519 = vst [vmem:[%s221] sm:$0xff] %v487
      %520 = vst [vmem:[%s221 + $0x8] sm:$0xff] %v488
      %521 = vst [vmem:[%s221 + $0x10] sm:$0xff] %v489
      %522 = vst [vmem:[%s221 + $0x18] sm:$0xff] %v490
      %523 = vst [vmem:[%s221 + $0x20] sm:$0xff] %v491
      %524 = vst [vmem:[%s221 + $0x28] sm:$0xff] %v492
      %525 = vst [vmem:[%s221 + $0x30] sm:$0xff] %v493
      %526 = vst [vmem:[%s221 + $0x38] sm:$0xff] %v494
      %527 = vst [vmem:[%s221 + $0x40] sm:$0xff] %v495
      %528 = vst [vmem:[%s221 + $0x48] sm:$0xff] %v496
      %529 = vst [vmem:[%s221 + $0x50] sm:$0xff] %v497
      %530 = vst [vmem:[%s221 + $0x58] sm:$0xff] %v498
      %531 = vst [vmem:[%s221 + $0x60] sm:$0xff] %v499
      %532 = vst [vmem:[%s221 + $0x68] sm:$0xff] %v500
      %533 = vst [vmem:[%s221 + $0x70] sm:$0xff] %v501
      %534 = vst [vmem:[%s221 + $0x78] sm:$0xff] %v502
      %535 = vst [vmem:[%s221 + $0x80] sm:$0xff] %v503
      %536 = vst [vmem:[%s221 + $0x88] sm:$0xff] %v504
      %537 = vst [vmem:[%s221 + $0x90] sm:$0xff] %v505
      %538 = vst [vmem:[%s221 + $0x98] sm:$0xff] %v506
      %539 = vst [vmem:[%s221 + $0xa0] sm:$0xff] %v507
      %540 = vst [vmem:[%s221 + $0xa8] sm:$0xff] %v508
      %541 = vst [vmem:[%s221 + $0xb0] sm:$0xff] %v509
      %542 = vst [vmem:[%s221 + $0xb8] sm:$0xff] %v510
      %543 = vst [vmem:[%s221 + $0xc0] sm:$0xff] %v511
      %544 = vst [vmem:[%s221 + $0xc8] sm:$0xff] %v512
      %545 = vst [vmem:[%s221 + $0xd0] sm:$0xff] %v513
      %546 = vst [vmem:[%s221 + $0xd8] sm:$0xff] %v514
      %547 = vst [vmem:[%s221 + $0xe0] sm:$0xff] %v515
      %548 = vst [vmem:[%s221 + $0xe8] sm:$0xff] %v516
      %549 = vst [vmem:[%s221 + $0xf0] sm:$0xff] %v517
      %550 = vst [vmem:[%s221 + $0xf8] sm:$0xff] %v518
      %s551 = smul.u32 32, %s15
      %p552 = scmp.lt.s32.totalorder %s551, 63
      %s553 = scalar_select %p552, %s551, 63
      %s554 = smul.addr %s553, 8
      %s555 = scalar_lea.vmem %s4, %s554
      // Predicated region
      $region37: #{residual_block_forward.5} parent=35 // pred_check
        %p556 = pneg %p127
      $region38: #{residual_block_forward.5} parent=35 // pred_check_branch
        %558 = sbr.rel (%p556) target = $region40
      $region39: #{residual_block_forward.5} parent=35 // pred_region
        %s559 = smul.u32 32, %s15
      $region40: #{residual_block_forward.5} parent=35 // pred_fallthru
        _
    $region36: #{residual_block_forward.5} parent=5 // pred_fallthru
      _
    %p560 = scmp.le.s32.totalorder 2, %s10
    // Predicated region
    $region41: #{residual_block_forward.5} parent=5 // pred_check
      %p561 = pneg %p560
    $region42: #{residual_block_forward.5} parent=5 // pred_check_branch
      %563 = sbr.rel (%p561) target = $region44
    $region43: #{residual_block_forward.5} parent=5 // pred_region
      %s564 = ssub.s32 %s10, 2
      // Predicated region
      $region45: #{residual_block_forward.5} parent=43 // pred_check
        %p565 = pneg %p133
      $region46: #{residual_block_forward.5} parent=43 // pred_check_branch
        %567 = sbr.rel (%p565) target = $region48
      $region47: #{residual_block_forward.5} parent=43 // pred_region
        %s568 = smul.u32 32, %s16
        %p569 = scmp.lt.s32.totalorder %s568, 63
        %s570 = scalar_select %p569, %s568, 63
        %s571 = smul.addr %s570, 8
        %s572 = scalar_lea.vmem %s4, %s571
      $region48: #{residual_block_forward.5} parent=43 // pred_fallthru
        _
    $region44: #{residual_block_forward.5} parent=5 // pred_fallthru
      _
  $region6: #{residual_block_forward.5} parent=0 // loop_footer
    %s14 = sadd.s32 1, %s10
  $region7: #{residual_block_forward.5} parent=0 // loop_footer_branch
    %9 = sbr.rel target = $region3
  $region8: #{residual_block_forward.5} parent=0 // loop_exit
    _

// kernel: residual_block_forward.4
$region0: #{residual_block_forward.4}
  #allocation0 [shape = 'u32[]', space=smem, size = 0x4, offset = 0x4, fixed_abs, tag = 'smem constant byte address 0x4 - core index']
  #allocation1 [shape = 'u32[72,128]{1,0:T(1,128)}', space=vmem, size = 0x9000, scoped, tag = 'internal scratch']
  #allocation2 [shape = 'bf16[10,18,128]{2,1,0:T(8,128)(2,1)}', space=vmem, size = 0xf000, scoped, tag = 'scratch operand']
  #allocation3 [shape = 'bf16[2,16,128]{2,1,0:T(8,128)(2,1)}', space=vmem, size = 0x2000, scoped, tag = 'scratch operand']
  #allocation4 [shape = 's32[2]{0}', space=sflag, size = 0x8, scoped, tag = 'scratch operand']
  #allocation5 [shape = 's32[]', space=sflag, size = 0x4, offset = 0, fixed_abs, tag = 'sflag constant byte address 0x0 - dummy sync flag']
  #allocation6 [shape = 's32[]', space=sflag, size = 0x4, offset = 0, fixed_abs, tag = 'sflag constant byte address 0x0 - dummy sync flag']
  %s0 = inlined_call_operand.vmem [shape: bf16[2,16,16,128], index: 0, kind: input, shape index: {}, may-alias: {0,1}]
  %s1 = inlined_call_operand.vmem [shape: bf16[2,16,16,128], index: 1, kind: input, shape index: {}, may-alias: {0,1}]
  %s2 = inlined_call_operand.vmem [shape: bf16[3,384,128], index: 2, kind: input, shape index: {}]
  %s3 = inlined_call_operand.vmem [shape: f32[1,128], index: 3, kind: input, shape index: {}]
  %s4 = inlined_call_operand.vmem [shape: f32[1,128], index: 4, kind: input, shape index: {}]
  %s5 = inlined_call_operand.vmem [shape: bf16[2,16,16,128], index: 5, kind: output, shape index: {0}]
  %s6 = inlined_call_operand.vmem [shape: f32[2,2,2,128], index: 6, kind: output, shape index: {1}]
  %7 = xla_tuple %s5, %s6
  %s8 = sld [smem:[#allocation0]]
  $region149: #{residual_block_forward.4} parent=0
    _
  %s10 = ssub.s32 1, %s8
  %s11 = scalar_select 0, %s10, %s8
  loop: start=0, step=1, limit=6
  $region2: #{residual_block_forward.4} parent=0 // loop_pre_header
    _
  $region3: #{residual_block_forward.4} parent=0 // loop_header
    %s13 = sphi 0, %s17
    %p14 = scmp.ge.s32.totalorder %s13, 6
    %s20 = sphi 0, %s32
    %s21 = sphi 0, %s28
    %s22 = sphi 0, %s20
    %s23 = sphi 0, %s21
    %s24 = sphi 0, %s22
    %s25 = sphi 0, %s23
    %s37 = sphi 0, %s39
    %s40 = sphi 0, %s37
    %s41 = sphi 0, %s40
    %s57 = sphi 0, %s41
    %s61 = sphi 0, %s61
    %s63 = sphi 0, %s61
    %s64 = sphi 0, %s63
    %s78 = sphi 0, %s64
    %s82 = sphi 0, %s82
    %s84 = sphi 0, %s82
    %s85 = sphi 0, %s84
    %s99 = sphi 0, %s85
    %s103 = sphi 0, %s103
    %s105 = sphi 0, %s103
    %s106 = sphi 0, %s105
    %s120 = sphi 0, %s106
    %s128 = sphi 0, %s130
    %s131 = sphi 0, %s128
    %s132 = sphi 0, %s131
    %s148 = sphi 0, %s132
    %s156 = sphi 0, %s158
    %s159 = sphi 0, %s156
    %s160 = sphi 0, %s159
    %s176 = sphi 0, %s160
  $region4: #{residual_block_forward.4} parent=0 // loop_header_branch
    %16 = sbr.rel (%p14) target = $region8
  $region5: #{residual_block_forward.4} parent=0 // loop_body
    %s18 = ssub.s32 %s13, 1
    %s19 = ssub.s32 %s13, 2
    %s26 = sadd.s32 1, %s21
    %p27 = scmp.ge.s32.totalorder %s26, 2
    %s28 = scalar_select %p27, 0, %s26
    %s29 = sadd.s32 1, %s20
    %s30 = scalar_select %p27, %s29, %s20
    %p31 = scmp.ge.s32.totalorder %s30, 2
    %s32 = scalar_select %p31, 0, %s30
    %s33 = ssub.s32 %s20, %s32
    %s34 = ssub.s32 %s21, %s28
    %s35 = sor.u32 %s33, %s34
    %p36 = scmp.eq.s32.totalorder %s35, 0
    %s38 = sadd.s32 %s37, 1
    %s39 = scalar_select %p36, %s37, %s38
    %p42 = pneg %p36
    %p43 = scmp.eq.s32.totalorder %s13, 3
    %p44 = por %p42, %p43
    %p45 = scmp.ne.s32.totalorder %s37, %s40
    %p46 = scmp.eq.s32.totalorder %s13, 0
    %p47 = por %p45, %p46
    %p48 = scmp.ne.s32.totalorder %s37, %s40
    %p49 = scmp.eq.s32.totalorder %s18, 3
    %p50 = por %p48, %p49
    %p51 = scmp.ne.s32.totalorder %s40, %s41
    %p52 = scmp.eq.s32.totalorder %s18, 0
    %p53 = por %p51, %p52
    %p54 = scmp.ne.s32.totalorder %s40, %s41
    %p55 = scmp.eq.s32.totalorder %s19, 3
    %p56 = por %p54, %p55
    %p58 = scmp.ne.s32.totalorder %s41, %s57
    %p59 = scmp.eq.s32.totalorder %s19, 0
    %p60 = por %p58, %p59
    %s62 = sadd.s32 %s61, 1
    %p65 = scmp.eq.s32.totalorder %s13, 3
    %p66 = scmp.ne.s32.totalorder %s61, %s63
    %p67 = scmp.eq.s32.totalorder %s13, 0
    %p68 = por %p66, %p67
    %p69 = scmp.ne.s32.totalorder %s61, %s63
    %p70 = scmp.eq.s32.totalorder %s18, 3
    %p71 = por %p69, %p70
    %p72 = scmp.ne.s32.totalorder %s63, %s64
    %p73 = scmp.eq.s32.totalorder %s18, 0
    %p74 = por %p72, %p73
    %p75 = scmp.ne.s32.totalorder %s63, %s64
    %p76 = scmp.eq.s32.totalorder %s19, 3
    %p77 = por %p75, %p76
    %p79 = scmp.ne.s32.totalorder %s64, %s78
    %p80 = scmp.eq.s32.totalorder %s19, 0
    %p81 = por %p79, %p80
    %s83 = sadd.s32 %s82, 1
    %p86 = scmp.eq.s32.totalorder %s13, 3
    %p87 = scmp.ne.s32.totalorder %s82, %s84
    %p88 = scmp.eq.s32.totalorder %s13, 0
    %p89 = por %p87, %p88
    %p90 = scmp.ne.s32.totalorder %s82, %s84
    %p91 = scmp.eq.s32.totalorder %s18, 3
    %p92 = por %p90, %p91
    %p93 = scmp.ne.s32.totalorder %s84, %s85
    %p94 = scmp.eq.s32.totalorder %s18, 0
    %p95 = por %p93, %p94
    %p96 = scmp.ne.s32.totalorder %s84, %s85
    %p97 = scmp.eq.s32.totalorder %s19, 3
    %p98 = por %p96, %p97
    %p100 = scmp.ne.s32.totalorder %s85, %s99
    %p101 = scmp.eq.s32.totalorder %s19, 0
    %p102 = por %p100, %p101
    %s104 = sadd.s32 %s103, 1
    %p107 = scmp.eq.s32.totalorder %s13, 3
    %p108 = scmp.ne.s32.totalorder %s103, %s105
    %p109 = scmp.eq.s32.totalorder %s13, 0
    %p110 = por %p108, %p109
    %p111 = scmp.ne.s32.totalorder %s103, %s105
    %p112 = scmp.eq.s32.totalorder %s18, 3
    %p113 = por %p111, %p112
    %p114 = scmp.ne.s32.totalorder %s105, %s106
    %p115 = scmp.eq.s32.totalorder %s18, 0
    %p116 = por %p114, %p115
    %p117 = scmp.ne.s32.totalorder %s105, %s106
    %p118 = scmp.eq.s32.totalorder %s19, 3
    %p119 = por %p117, %p118
    %p121 = scmp.ne.s32.totalorder %s106, %s120
    %p122 = scmp.eq.s32.totalorder %s19, 0
    %p123 = por %p121, %p122
    %s124 = ssub.s32 %s20, %s32
    %s125 = ssub.s32 %s21, %s28
    %s126 = sor.u32 %s124, %s125
    %p127 = scmp.eq.s32.totalorder %s126, 0
    %s129 = sadd.s32 %s128, 1
    %s130 = scalar_select %p127, %s128, %s129
    %p133 = pneg %p127
    %p134 = scmp.eq.s32.totalorder %s13, 3
    %p135 = por %p133, %p134
    %p136 = scmp.ne.s32.totalorder %s128, %s131
    %p137 = scmp.eq.s32.totalorder %s13, 0
    %p138 = por %p136, %p137
    %p139 = scmp.ne.s32.totalorder %s128, %s131
    %p140 = scmp.eq.s32.totalorder %s18, 3
    %p141 = por %p139, %p140
    %p142 = scmp.ne.s32.totalorder %s131, %s132
    %p143 = scmp.eq.s32.totalorder %s18, 0
    %p144 = por %p142, %p143
    %p145 = scmp.ne.s32.totalorder %s131, %s132
    %p146 = scmp.eq.s32.totalorder %s19, 3
    %p147 = por %p145, %p146
    %p149 = scmp.ne.s32.totalorder %s132, %s148
    %p150 = scmp.eq.s32.totalorder %s19, 0
    %p151 = por %p149, %p150
    %s152 = ssub.s32 %s20, %s32
    %s153 = ssub.s32 %s21, %s28
    %s154 = sor.u32 %s152, %s153
    %p155 = scmp.eq.s32.totalorder %s154, 0
    %s157 = sadd.s32 %s156, 1
    %s158 = scalar_select %p155, %s156, %s157
    %p161 = pneg %p155
    %p162 = scmp.eq.s32.totalorder %s13, 3
    %p163 = por %p161, %p162
    %p164 = scmp.ne.s32.totalorder %s156, %s159
    %p165 = scmp.eq.s32.totalorder %s13, 0
    %p166 = por %p164, %p165
    %p167 = scmp.ne.s32.totalorder %s156, %s159
    %p168 = scmp.eq.s32.totalorder %s18, 3
    %p169 = por %p167, %p168
    %p170 = scmp.ne.s32.totalorder %s159, %s160
    %p171 = scmp.eq.s32.totalorder %s18, 0
    %p172 = por %p170, %p171
    %p173 = scmp.ne.s32.totalorder %s159, %s160
    %p174 = scmp.eq.s32.totalorder %s19, 3
    %p175 = por %p173, %p174
    %p177 = scmp.ne.s32.totalorder %s160, %s176
    %p178 = scmp.eq.s32.totalorder %s19, 0
    %p179 = por %p177, %p178
    %p180 = scmp.le.s32.totalorder 1, %s13
    %p181 = scmp.lt.s32.totalorder %s13, 5
    %p182 = pnand %p180, %p181
    %p183 = pneg %p182
    // Predicated region
    $region9: #{residual_block_forward.4} parent=5 // pred_check
      _
    $region10: #{residual_block_forward.4} parent=5 // pred_check_branch
      %185 = sbr.rel (%p182) target = $region12
    $region11: #{residual_block_forward.4} parent=5 // pred_region
      %s186 = ssub.s32 %s13, 1
      // Predicated region
      $region13: #{residual_block_forward.4} parent=11 // pred_check
        %p187 = pneg %p74
      $region14: #{residual_block_forward.4} parent=11 // pred_check_branch
        %189 = sbr.rel (%p187) target = $region16
      $region15: #{residual_block_forward.4} parent=11 // pred_region
        _
      $region16: #{residual_block_forward.4} parent=11 // pred_fallthru
        _
      // Predicated region
      $region17: #{residual_block_forward.4} parent=11 // pred_check
        %p190 = pneg %p95
      $region18: #{residual_block_forward.4} parent=11 // pred_check_branch
        %192 = sbr.rel (%p190) target = $region20
      $region19: #{residual_block_forward.4} parent=11 // pred_region
        _
      $region20: #{residual_block_forward.4} parent=11 // pred_fallthru
        _
      // Predicated region
      $region21: #{residual_block_forward.4} parent=11 // pred_check
        %p193 = pneg %p116
      $region22: #{residual_block_forward.4} parent=11 // pred_check_branch
        %195 = sbr.rel (%p193) target = $region24
      $region23: #{residual_block_forward.4} parent=11 // pred_region
        _
      $region24: #{residual_block_forward.4} parent=11 // pred_fallthru
        _
    $region12: #{residual_block_forward.4} parent=5 // pred_fallthru
      _
    %p196 = scmp.lt.s32.totalorder %s13, 4
    // Predicated region
    $region25: #{residual_block_forward.4} parent=5 // pred_check
      %p197 = pneg %p196
    $region26: #{residual_block_forward.4} parent=5 // pred_check_branch
      %199 = sbr.rel (%p197) target = $region28
    $region27: #{residual_block_forward.4} parent=5 // pred_region
      // Predicated region
      $region29: #{residual_block_forward.4} parent=27 // pred_check
        %p200 = pneg %p47
      $region30: #{residual_block_forward.4} parent=27 // pred_check_branch
        %202 = sbr.rel (%p200) target = $region32
      $region31: #{residual_block_forward.4} parent=27 // pred_region
        %s203 = smul.u32 8, %s21
        %p204 = scmp.lt.s32.totalorder %s20, 1
        %s205 = scalar_select %p204, %s20, 1
        %p206 = scmp.lt.s32.totalorder %s203, 15
        %s207 = scalar_select %p206, %s203, 15
        %s208 = smul.addr %s207, 2
        %s209 = smul.addr %s205, 32
        %s210 = sadd.s32 %s208, %s209
        %s211 = smul.addr %s210, 4
        %s212 = scalar_lea.vmem %s0, %s211
        %s213 = smul.u32 8, %s21
      $region32: #{residual_block_forward.4} parent=27 // pred_fallthru
        _
    $region28: #{residual_block_forward.4} parent=5 // pred_fallthru
      _
    %p214 = scmp.le.s32.totalorder 1, %s13
    %p215 = scmp.lt.s32.totalorder %s13, 5
    %p216 = pnand %p214, %p215
    %p217 = pneg %p216
    // Predicated region
    $region33: #{residual_block_forward.4} parent=5 // pred_check
      _
    $region34: #{residual_block_forward.4} parent=5 // pred_check_branch
      %219 = sbr.rel (%p216) target = $region36
    $region35: #{residual_block_forward.4} parent=5 // pred_region
      %s220 = ssub.s32 %s13, 1
      %s221 = smul.u32 8, %s23
      %p222 = scmp.lt.s32.totalorder %s22, 1
      %s223 = scalar_select %p222, %s22, 1
      %p224 = scmp.lt.s32.totalorder %s221, 15
      %s225 = scalar_select %p224, %s221, 15
      %s226 = smul.addr %s225, 2
      %s227 = smul.addr %s223, 32
      %s228 = sadd.s32 %s226, %s227
      %s229 = smul.addr %s228, 4
      %s230 = scalar_lea.vmem %s0, %s229
      %p231 = pneg %p53
      %p232 = pneg %p50
      %p233 = pneg %p74
      %p234 = pneg %p71
      %p235 = pneg %p95
      %p236 = pneg %p92
      %p237 = pneg %p116
      %p238 = pneg %p113
      %p239 = pneg %p144
      %p240 = pneg %p141
      %s241 = smul.u32 8, %s23
      %p242 = scmp.lt.s32.totalorder %s22, 1
      %s243 = scalar_select %p242, %s22, 1
      %p244 = scmp.lt.s32.totalorder %s241, 15
      %s245 = scalar_select %p244, %s241, 15
      %s246 = smul.addr %s245, 2
      %s247 = smul.addr %s243, 32
      %s248 = sadd.s32 %s246, %s247
      %s249 = smul.addr %s248, 4
      %s250 = scalar_lea.vmem %s5, %s249
      %p251 = pneg %p172
      %p252 = pneg %p169
      %p253 = scmp.lt.s32.totalorder %s22, 1
      %s254 = scalar_select %p253, %s22, 1
      %p255 = scmp.lt.s32.totalorder %s23, 1
      %s256 = scalar_select %p255, %s23, 1
      %s257 = smul.addr %s254, 2
      %s258 = sadd.s32 %s256, %s257
      %s259 = smul.addr %s258, 2
      %s260 = scalar_lea.vmem %s6, %s259
      %s261 = smul.u32 8, %s23
      %p262 = scmp.lt.s32.totalorder %s22, 1
      %s263 = scalar_select %p262, %s22, 1
      %p264 = scmp.lt.s32.totalorder %s261, 15
      %s265 = scalar_select %p264, %s261, 15
      %s266 = smul.addr %s265, 2
      %s267 = smul.addr %s263, 32
      %s268 = sadd.s32 %s266, %s267
      %s269 = smul.addr %s268, 4
      %s270 = scalar_lea.vmem %s0, %s269
      %s271 = smul.u32 8, %s23
      %s272 = smul.u32 8, %s23
      %p273 = scmp.lt.s32.totalorder %s22, 1
      %s274 = scalar_select %p273, %s22, 1
      %p275 = scmp.lt.s32.totalorder %s272, 15
      %s276 = scalar_select %p275, %s272, 15
      %s277 = smul.addr %s276, 2
      %s278 = smul.addr %s274, 32
      %s279 = sadd.s32 %s277, %s278
      %s280 = smul.addr %s279, 4
      %s281 = scalar_lea.vmem %s5, %s280
      %s282 = smul.u32 8, %s23
      %p283 = scmp.lt.s32.totalorder %s22, 1
      %s284 = scalar_select %p283, %s22, 1
      %p285 = scmp.lt.s32.totalorder %s23, 1
      %s286 = scalar_select %p285, %s23, 1
      %s287 = smul.addr %s284, 2
      %s288 = sadd.s32 %s286, %s287
      %s289 = smul.addr %s288, 2
      %s290 = scalar_lea.vmem %s6, %s289
      %p292 = scmp.gt.s32.totalorder %s23, 0
      // Predicated region
      $region37: #{residual_block_forward.4} parent=35 // pred_check
        %p293 = pneg %p292
      $region38: #{residual_block_forward.4} parent=35 // pred_check_branch
        %295 = sbr.rel (%p293) target = $region40
      $region39: #{residual_block_forward.4} parent=35 // pred_region
        %s296 = smul.u32 %s23, 8
        %s297 = ssub.s32 %s296, 1
        %s298 = smul.u32 %s297, 2
        %s299 = smul.u32 %s22, 32
        %s300 = sadd.s32 %s298, %s299
        %s301 = smul.addr %s300, 4
        %s302 = scalar_lea.vmem %s1, %s301
        // Predicated region
        $region41: #{residual_block_forward.4} parent=39 // pred_check
          _
        $region42: #{residual_block_forward.4} parent=39 // pred_check_branch
          %304 = sbr.rel (0) target = $region44
        $region43: #{residual_block_forward.4} parent=39 // pred_region
          // Predicated region
          $region56: #{residual_block_forward.4} parent=43 // pred_check
            _
          $region57: #{residual_block_forward.4} parent=43 // pred_check_branch
            %320 = sbr.rel (0) target = $region59
          $region58: #{residual_block_forward.4} parent=43 // pred_region
            loop: start=0, step=1, limit=1
            $region60: #{residual_block_forward.4} parent=58 // loop_pre_header
              _
            $region61: #{residual_block_forward.4} parent=58 // loop_header
              %s322 = sphi 0, %s326
              %p323 = scmp.ge.s32.totalorder %s322, 1
              %s327 = sphi %s302, %s302
              %s328 = sphi [#allocation3], [#allocation3]
            $region62: #{residual_block_forward.4} parent=58 // loop_header_branch
              %325 = sbr.rel (%p323) target = $region66
            $region63: #{residual_block_forward.4} parent=58 // loop_body
              %v329 = vld [vmem:[%s327] sm:$0xff]
              %330 = vst [vmem:[%s328] sm:$0xff] %v329
            $region64: #{residual_block_forward.4} parent=58 // loop_footer
              %s326 = sadd.s32 1, %s322
            $region65: #{residual_block_forward.4} parent=58 // loop_footer_branch
              %321 = sbr.rel target = $region61
            $region66: #{residual_block_forward.4} parent=58 // loop_exit
              _
          $region59: #{residual_block_forward.4} parent=43 // pred_fallthru
            _
          // Predicated region
          $region67: #{residual_block_forward.4} parent=43 // pred_check
            _
          $region68: #{residual_block_forward.4} parent=43 // pred_check_branch
            %332 = sbr.rel target = $region70
          $region69: #{residual_block_forward.4} parent=43 // pred_region
            _
          $region70: #{residual_block_forward.4} parent=43 // pred_fallthru
            _
        $region44: #{residual_block_forward.4} parent=39 // pred_fallthru
          _
        // Predicated region
        $region45: #{residual_block_forward.4} parent=39 // pred_check
          _
        $region46: #{residual_block_forward.4} parent=39 // pred_check_branch
          %306 = sbr.rel target = $region48
        $region47: #{residual_block_forward.4} parent=39 // pred_region
          %s308 = ssub.s32 256, 1
          loop: start=0, step=1, limit=1
          $region49: #{residual_block_forward.4} parent=47 // loop_pre_header
            _
          $region50: #{residual_block_forward.4} parent=47 // loop_header
            %s310 = sphi 0, %s314
            %p311 = scmp.ge.s32.totalorder %s310, 1
            %s315 = sphi %s302, %s302
            %s316 = sphi [#allocation3], [#allocation3]
          $region51: #{residual_block_forward.4} parent=47 // loop_header_branch
            %313 = sbr.rel (%p311) target = $region55
          $region52: #{residual_block_forward.4} parent=47 // loop_body
            %v317 = vld [vmem:[%s315] sm:%s308]
            %318 = vst [vmem:[%s316] sm:%s308] %v317
          $region53: #{residual_block_forward.4} parent=47 // loop_footer
            %s314 = sadd.s32 1, %s310
          $region54: #{residual_block_forward.4} parent=47 // loop_footer_branch
            %309 = sbr.rel target = $region50
          $region55: #{residual_block_forward.4} parent=47 // loop_exit
            _
        $region48: #{residual_block_forward.4} parent=39 // pred_fallthru
          _
        // Predicated region
        $region71: #{residual_block_forward.4} parent=39 // pred_check
          _
        $region72: #{residual_block_forward.4} parent=39 // pred_check_branch
          %335 = sbr.rel (0) target = $region74
        $region73: #{residual_block_forward.4} parent=39 // pred_region
          %336 = vsyncadd [#allocation4], 128
        $region74: #{residual_block_forward.4} parent=39 // pred_fallthru
          _
      $region40: #{residual_block_forward.4} parent=35 // pred_fallthru
        _
      %p337 = scmp.lt.s32.totalorder %s23, 1
      // Predicated region
      $region75: #{residual_block_forward.4} parent=35 // pred_check
        %p338 = pneg %p337
      $region76: #{residual_block_forward.4} parent=35 // pred_check_branch
        %340 = sbr.rel (%p338) target = $region78
      $region77: #{residual_block_forward.4} parent=35 // pred_region
        %s341 = smul.u32 %s23, 8
        %s342 = sadd.s32 %s341, 8
        %s343 = smul.u32 %s342, 2
        %s344 = smul.u32 %s22, 32
        %s345 = sadd.s32 %s343, %s344
        %s346 = smul.addr %s345, 4
        %s347 = scalar_lea.vmem %s1, %s346
        %s348 = scalar_lea.vmem [#allocation3], 8
        %s349 = scalar_lea.sflag [#allocation4], 1
        // Predicated region
        $region79: #{residual_block_forward.4} parent=77 // pred_check
          _
        $region80: #{residual_block_forward.4} parent=77 // pred_check_branch
          %351 = sbr.rel (0) target = $region82
        $region81: #{residual_block_forward.4} parent=77 // pred_region
          // Predicated region
          $region94: #{residual_block_forward.4} parent=81 // pred_check
            _
          $region95: #{residual_block_forward.4} parent=81 // pred_check_branch
            %367 = sbr.rel (0) target = $region97
          $region96: #{residual_block_forward.4} parent=81 // pred_region
            loop: start=0, step=1, limit=1
            $region98: #{residual_block_forward.4} parent=96 // loop_pre_header
              _
            $region99: #{residual_block_forward.4} parent=96 // loop_header
              %s369 = sphi 0, %s373
              %p370 = scmp.ge.s32.totalorder %s369, 1
              %s374 = sphi %s347, %s347
              %s375 = sphi %s348, %s348
            $region100: #{residual_block_forward.4} parent=96 // loop_header_branch
              %372 = sbr.rel (%p370) target = $region104
            $region101: #{residual_block_forward.4} parent=96 // loop_body
              %v376 = vld [vmem:[%s374] sm:$0xff]
              %377 = vst [vmem:[%s375] sm:$0xff] %v376
            $region102: #{residual_block_forward.4} parent=96 // loop_footer
              %s373 = sadd.s32 1, %s369
            $region103: #{residual_block_forward.4} parent=96 // loop_footer_branch
              %368 = sbr.rel target = $region99
            $region104: #{residual_block_forward.4} parent=96 // loop_exit
              _
          $region97: #{residual_block_forward.4} parent=81 // pred_fallthru
            _
          // Predicated region
          $region105: #{residual_block_forward.4} parent=81 // pred_check
            _
          $region106: #{residual_block_forward.4} parent=81 // pred_check_branch
            %379 = sbr.rel target = $region108
          $region107: #{residual_block_forward.4} parent=81 // pred_region
            _
          $region108: #{residual_block_forward.4} parent=81 // pred_fallthru
            _
        $region82: #{residual_block_forward.4} parent=77 // pred_fallthru
          _
        // Predicated region
        $region83: #{residual_block_forward.4} parent=77 // pred_check
          _
        $region84: #{residual_block_forward.4} parent=77 // pred_check_branch
          %353 = sbr.rel target = $region86
        $region85: #{residual_block_forward.4} parent=77 // pred_region
          %s355 = ssub.s32 256, 1
          loop: start=0, step=1, limit=1
          $region87: #{residual_block_forward.4} parent=85 // loop_pre_header
            _
          $region88: #{residual_block_forward.4} parent=85 // loop_header
            %s357 = sphi 0, %s361
            %p358 = scmp.ge.s32.totalorder %s357, 1
            %s362 = sphi %s347, %s347
            %s363 = sphi %s348, %s348
          $region89: #{residual_block_forward.4} parent=85 // loop_header_branch
            %360 = sbr.rel (%p358) target = $region93
          $region90: #{residual_block_forward.4} parent=85 // loop_body
            %v364 = vld [vmem:[%s362] sm:%s355]
            %365 = vst [vmem:[%s363] sm:%s355] %v364
          $region91: #{residual_block_forward.4} parent=85 // loop_footer
            %s361 = sadd.s32 1, %s357
          $region92: #{residual_block_forward.4} parent=85 // loop_footer_branch
            %356 = sbr.rel target = $region88
          $region93: #{residual_block_forward.4} parent=85 // loop_exit
            _
        $region86: #{residual_block_forward.4} parent=77 // pred_fallthru
          _
        // Predicated region
        $region109: #{residual_block_forward.4} parent=77 // pred_check
          _
        $region110: #{residual_block_forward.4} parent=77 // pred_check_branch
          %382 = sbr.rel (0) target = $region112
        $region111: #{residual_block_forward.4} parent=77 // pred_region
          %383 = vsyncadd %s349, 128
        $region112: #{residual_block_forward.4} parent=77 // pred_fallthru
          _
      $region78: #{residual_block_forward.4} parent=35 // pred_fallthru
        _
      %vm384 = vcmask 1040384
      %vm385 = vsmask.f32 256
      %vm386 = vmand %vm384, %vm385
      %v387 = vld [vmem:[#allocation2] sm:$0x1]
      %v388 = vsel %vm386, 0, %v387
      %389 = vst [vmem:[#allocation2] sm:$0x1] %v388
      %v390 = vld [vmem:[#allocation2 + $0xc] sm:$0x1]
      %v391 = vsel %vm386, 0, %v390
      %392 = vst [vmem:[#allocation2 + $0xc] sm:$0x1] %v391
      %v393 = vld [vmem:[#allocation2 + $0x18] sm:$0x1]
      %v394 = vsel %vm386, 0, %v393
      %395 = vst [vmem:[#allocation2 + $0x18] sm:$0x1] %v394
      %v396 = vld [vmem:[#allocation2 + $0x24] sm:$0x1]
      %v397 = vsel %vm386, 0, %v396
      %398 = vst [vmem:[#allocation2 + $0x24] sm:$0x1] %v397
      %v399 = vld [vmem:[#allocation2 + $0x30] sm:$0x1]
      %v400 = vsel %vm386, 0, %v399
      %401 = vst [vmem:[#allocation2 + $0x30] sm:$0x1] %v400
      %v402 = vld [vmem:[#allocation2 + $0x3c] sm:$0x1]
      %v403 = vsel %vm386, 0, %v402
      %404 = vst [vmem:[#allocation2 + $0x3c] sm:$0x1] %v403
      %v405 = vld [vmem:[#allocation2 + $0x48] sm:$0x1]
      %v406 = vsel %vm386, 0, %v405
      %407 = vst [vmem:[#allocation2 + $0x48] sm:$0x1] %v406
      %v408 = vld [vmem:[#allocation2 + $0x54] sm:$0x1]
      %v409 = vsel %vm386, 0, %v408
      %410 = vst [vmem:[#allocation2 + $0x54] sm:$0x1] %v409
      %v411 = vld [vmem:[#allocation2 + $0x60] sm:$0x1]
      %v412 = vsel %vm386, 0, %v411
      %413 = vst [vmem:[#allocation2 + $0x60] sm:$0x1] %v412
      %v414 = vld [vmem:[#allocation2 + $0x6c] sm:$0x1]
      %v415 = vsel %vm386, 0, %v414
      %416 = vst [vmem:[#allocation2 + $0x6c] sm:$0x1] %v415
      %vm417 = vsmask.f32 7938
      %vm418 = vmand %vm384, %vm417
      %v419 = vld [vmem:[#allocation2 + $0x8] sm:$0x1]
      %v420 = vsel %vm418, 0, %v419
      %421 = vst [vmem:[#allocation2 + $0x8] sm:$0x1] %v420
      %v422 = vld [vmem:[#allocation2 + $0x14] sm:$0x1]
      %v423 = vsel %vm418, 0, %v422
      %424 = vst [vmem:[#allocation2 + $0x14] sm:$0x1] %v423
      %v425 = vld [vmem:[#allocation2 + $0x20] sm:$0x1]
      %v426 = vsel %vm418, 0, %v425
      %427 = vst [vmem:[#allocation2 + $0x20] sm:$0x1] %v426
      %v428 = vld [vmem:[#allocation2 + $0x2c] sm:$0x1]
      %v429 = vsel %vm418, 0, %v428
      %430 = vst [vmem:[#allocation2 + $0x2c] sm:$0x1] %v429
      %v431 = vld [vmem:[#allocation2 + $0x38] sm:$0x1]
      %v432 = vsel %vm418, 0, %v431
      %433 = vst [vmem:[#allocation2 + $0x38] sm:$0x1] %v432
      %v434 = vld [vmem:[#allocation2 + $0x44] sm:$0x1]
      %v435 = vsel %vm418, 0, %v434
      %436 = vst [vmem:[#allocation2 + $0x44] sm:$0x1] %v435
      %v437 = vld [vmem:[#allocation2 + $0x50] sm:$0x1]
      %v438 = vsel %vm418, 0, %v437
      %439 = vst [vmem:[#allocation2 + $0x50] sm:$0x1] %v438
      %v440 = vld [vmem:[#allocation2 + $0x5c] sm:$0x1]
      %v441 = vsel %vm418, 0, %v440
      %442 = vst [vmem:[#allocation2 + $0x5c] sm:$0x1] %v441
      %v443 = vld [vmem:[#allocation2 + $0x68] sm:$0x1]
      %v444 = vsel %vm418, 0, %v443
      %445 = vst [vmem:[#allocation2 + $0x68] sm:$0x1] %v444
      %v446 = vld [vmem:[#allocation2 + $0x74] sm:$0x1]
      %v447 = vsel %vm418, 0, %v446
      %448 = vst [vmem:[#allocation2 + $0x74] sm:$0x1] %v447
      %v449 = vld [vmem:[%s270] sm:$0xf]
      %v450 = vld [vmem:[%s270 + $0x4] sm:$0xf]
      %v451 = vld [vmem:[%s270 + $0x8] sm:$0xf]
      %v452 = vld [vmem:[%s270 + $0xc] sm:$0xf]
      %v453 = vld [vmem:[%s270 + $0x10] sm:$0xf]
      %v454 = vld [vmem:[%s270 + $0x14] sm:$0xf]
      %v455 = vld [vmem:[%s270 + $0x18] sm:$0xf]
      %v456 = vld [vmem:[%s270 + $0x1c] sm:$0xf]
      %v457 = vld [vmem:[%s270 + $0x20] sm:$0xf]
      %v458 = vld [vmem:[%s270 + $0x24] sm:$0xf]
      %v459 = vld [vmem:[%s270 + $0x28] sm:$0xf]
      %v460 = vld [vmem:[%s270 + $0x2c] sm:$0xf]
      %v461 = vld [vmem:[%s270 + $0x30] sm:$0xf]
      %v462 = vld [vmem:[%s270 + $0x34] sm:$0xf]
      %v463 = vld [vmem:[%s270 + $0x38] sm:$0xf]
      %v464 = vld [vmem:[%s270 + $0x3c] sm:$0xf]
      %v465 = vunpack.c.l.bf16 %v449
      %v466 = vunpack.c.l.bf16 %v450
      %v467 = vunpack.c.l.bf16 %v451
      %v468 = vunpack.c.l.bf16 %v452
      %v469 = vunpack.c.l.bf16 %v453
      %v470 = vunpack.c.l.bf16 %v454
      %v471 = vunpack.c.l.bf16 %v455
      %v472 = vunpack.c.l.bf16 %v456
      %v473 = vunpack.c.l.bf16 %v457
      %v474 = vunpack.c.l.bf16 %v458
      %v475 = vunpack.c.l.bf16 %v459
      %v476 = vunpack.c.l.bf16 %v460
      %v477 = vunpack.c.l.bf16 %v461
      %v478 = vunpack.c.l.bf16 %v462
      %v479 = vunpack.c.l.bf16 %v463
      %v480 = vunpack.c.l.bf16 %v464
      %v481 = vld [vmem:[%s3] sm:$0x1]
      %v483 = vperm.slane %v481, 0
      %v485 = vmul.f32 %v465, %v483
      %v486 = vmul.f32 %v466, %v483
      %v487 = vmul.f32 %v467, %v483
      %v488 = vmul.f32 %v468, %v483
      %v489 = vmul.f32 %v469, %v483
      %v490 = vmul.f32 %v470, %v483
      %v491 = vmul.f32 %v471, %v483
      %v492 = vmul.f32 %v472, %v483
      %v493 = vmul.f32 %v473, %v483
      %v494 = vmul.f32 %v474, %v483
      %v495 = vmul.f32 %v475, %v483
      %v496 = vmul.f32 %v476, %v483
      %v497 = vmul.f32 %v477, %v483
      %v498 = vmul.f32 %v478, %v483
      %v499 = vmul.f32 %v479, %v483
      %v500 = vmul.f32 %v480, %v483
      %v501 = vld [vmem:[%s4] sm:$0x1]
      %v503 = vperm.slane %v501, 0
      %v505 = vadd.f32 %v485, %v503
      %v506 = vadd.f32 %v486, %v503
      %v507 = vadd.f32 %v487, %v503
      %v508 = vadd.f32 %v488, %v503
      %v509 = vadd.f32 %v489, %v503
      %v510 = vadd.f32 %v490, %v503
      %v511 = vadd.f32 %v491, %v503
      %v512 = vadd.f32 %v492, %v503
      %v513 = vadd.f32 %v493, %v503
      %v514 = vadd.f32 %v494, %v503
      %v515 = vadd.f32 %v495, %v503
      %v516 = vadd.f32 %v496, %v503
      %v517 = vadd.f32 %v497, %v503
      %v518 = vadd.f32 %v498, %v503
      %v519 = vadd.f32 %v499, %v503
      %v520 = vadd.f32 %v500, %v503
      %vm521 = vcmp.gt.f32.partialorder %v505, 0.0
      %vm522 = vcmp.gt.f32.partialorder %v506, 0.0
      %vm523 = vcmp.gt.f32.partialorder %v507, 0.0
      %vm524 = vcmp.gt.f32.partialorder %v508, 0.0
      %vm525 = vcmp.gt.f32.partialorder %v509, 0.0
      %vm526 = vcmp.gt.f32.partialorder %v510, 0.0
      %vm527 = vcmp.gt.f32.partialorder %v511, 0.0
      %vm528 = vcmp.gt.f32.partialorder %v512, 0.0
      %vm529 = vcmp.gt.f32.partialorder %v513, 0.0
      %vm530 = vcmp.gt.f32.partialorder %v514, 0.0
      %vm531 = vcmp.gt.f32.partialorder %v515, 0.0
      %vm532 = vcmp.gt.f32.partialorder %v516, 0.0
      %vm533 = vcmp.gt.f32.partialorder %v517, 0.0
      %vm534 = vcmp.gt.f32.partialorder %v518, 0.0
      %vm535 = vcmp.gt.f32.partialorder %v519, 0.0
      %vm536 = vcmp.gt.f32.partialorder %v520, 0.0
      %v537 = vmul.f32 %v505, 0.1
      %v538 = vmul.f32 %v506, 0.1
      %v539 = vmul.f32 %v507, 0.1
      %v540 = vmul.f32 %v508, 0.1
      %v541 = vmul.f32 %v509, 0.1
      %v542 = vmul.f32 %v510, 0.1
      %v543 = vmul.f32 %v511, 0.1
      %v544 = vmul.f32 %v512, 0.1
      %v545 = vmul.f32 %v513, 0.1
      %v546 = vmul.f32 %v514, 0.1
      %v547 = vmul.f32 %v515, 0.1
      %v548 = vmul.f32 %v516, 0.1
      %v549 = vmul.f32 %v517, 0.1
      %v550 = vmul.f32 %v518, 0.1
      %v551 = vmul.f32 %v519, 0.1
      %v552 = vmul.f32 %v520, 0.1
      %v553 = vsel %vm521, %v505, %v537
      %v554 = vsel %vm522, %v506, %v538
      %v555 = vsel %vm523, %v507, %v539
      %v556 = vsel %vm524, %v508, %v540
      %v557 = vsel %vm525, %v509, %v541
      %v558 = vsel %vm526, %v510, %v542
      %v559 = vsel %vm527, %v511, %v543
      %v560 = vsel %vm528, %v512, %v544
      %v561 = vsel %vm529, %v513, %v545
      %v562 = vsel %vm530, %v514, %v546
      %v563 = vsel %vm531, %v515, %v547
      %v564 = vsel %vm532, %v516, %v548
      %v565 = vsel %vm533, %v517, %v549
      %v566 = vsel %vm534, %v518, %v550
      %v567 = vsel %vm535, %v519, %v551
      %v568 = vsel %vm536, %v520, %v552
      %v569 = vpack.c.bf16 %v553, %v553
      %v570 = vpack.c.bf16 %v554, %v554
      %v571 = vpack.c.bf16 %v555, %v555
      %v572 = vpack.c.bf16 %v556, %v556
      %v573 = vpack.c.bf16 %v557, %v557
      %v574 = vpack.c.bf16 %v558, %v558
      %v575 = vpack.c.bf16 %v559, %v559
      %v576 = vpack.c.bf16 %v560, %v560
      %v577 = vpack.c.bf16 %v561, %v561
      %v578 = vpack.c.bf16 %v562, %v562
      %v579 = vpack.c.bf16 %v563, %v563
      %v580 = vpack.c.bf16 %v564, %v564
      %v581 = vpack.c.bf16 %v565, %v565
      %v582 = vpack.c.bf16 %v566, %v566
      %v583 = vpack.c.bf16 %v567, %v567
      %v584 = vpack.c.bf16 %v568, %v568
      %vm585 = vsmask.f32 4368
      %vm586 = vmor %vm385, %vm585
      %v588 = vshrl.u32 %v569, 16
      %v590 = vrot.slane %v588, 7
      %v591 = vshll.u32 %v569, 16
      %v593 = vor.u32 %v590, %v591
      %v594 = vrot.slane %v590, 4
      %v596 = vshrl.u32 %v570, 16
      %v598 = vrot.slane %v596, 7
      %v599 = vshll.u32 %v570, 16
      %v601 = vor.u32 %v598, %v599
      %v602 = vsel %vm586, %v594, %v601
      %v603 = vrot.slane %v598, 4
      %v605 = vshrl.u32 %v571, 16
      %v607 = vrot.slane %v605, 7
      %v608 = vshll.u32 %v571, 16
      %v610 = vor.u32 %v607, %v608
      %v611 = vrot.slane %v607, 4
      %v613 = vshrl.u32 %v572, 16
      %v615 = vrot.slane %v613, 7
      %v616 = vshll.u32 %v572, 16
      %v618 = vor.u32 %v615, %v616
      %v619 = vsel %vm586, %v611, %v618
      %v620 = vrot.slane %v615, 4
      %v622 = vshrl.u32 %v573, 16
      %v624 = vrot.slane %v622, 7
      %v625 = vshll.u32 %v573, 16
      %v627 = vor.u32 %v624, %v625
      %v628 = vrot.slane %v624, 4
      %v630 = vshrl.u32 %v574, 16
      %v632 = vrot.slane %v630, 7
      %v633 = vshll.u32 %v574, 16
      %v635 = vor.u32 %v632, %v633
      %v636 = vsel %vm586, %v628, %v635
      %v637 = vrot.slane %v632, 4
      %v639 = vshrl.u32 %v575, 16
      %v641 = vrot.slane %v639, 7
      %v642 = vshll.u32 %v575, 16
      %v644 = vor.u32 %v641, %v642
      %v645 = vrot.slane %v641, 4
      %v647 = vshrl.u32 %v576, 16
      %v649 = vrot.slane %v647, 7
      %v650 = vshll.u32 %v576, 16
      %v652 = vor.u32 %v649, %v650
      %v653 = vsel %vm586, %v645, %v652
      %v654 = vrot.slane %v649, 4
      %v656 = vshrl.u32 %v577, 16
      %v658 = vrot.slane %v656, 7
      %v659 = vshll.u32 %v577, 16
      %v661 = vor.u32 %v658, %v659
      %v662 = vrot.slane %v658, 4
      %v664 = vshrl.u32 %v578, 16
      %v666 = vrot.slane %v664, 7
      %v667 = vshll.u32 %v578, 16
      %v669 = vor.u32 %v666, %v667
      %v670 = vsel %vm586, %v662, %v669
      %v671 = vrot.slane %v666, 4
      %v673 = vshrl.u32 %v579, 16
      %v675 = vrot.slane %v673, 7
      %v676 = vshll.u32 %v579, 16
      %v678 = vor.u32 %v675, %v676
      %v679 = vrot.slane %v675, 4
      %v681 = vshrl.u32 %v580, 16
      %v683 = vrot.slane %v681, 7
      %v684 = vshll.u32 %v580, 16
      %v686 = vor.u32 %v683, %v684
      %v687 = vsel %vm586, %v679, %v686
      %v688 = vrot.slane %v683, 4
      %v690 = vshrl.u32 %v581, 16
      %v692 = vrot.slane %v690, 7
      %v693 = vshll.u32 %v581, 16
      %v695 = vor.u32 %v692, %v693
      %v696 = vrot.slane %v692, 4
      %v698 = vshrl.u32 %v582, 16
      %v700 = vrot.slane %v698, 7
      %v701 = vshll.u32 %v582, 16
      %v703 = vor.u32 %v700, %v701
      %v704 = vsel %vm586, %v696, %v703
      %v705 = vrot.slane %v700, 4
      %v707 = vshrl.u32 %v583, 16
      %v709 = vrot.slane %v707, 7
      %v710 = vshll.u32 %v583, 16
      %v712 = vor.u32 %v709, %v710
      %v713 = vrot.slane %v709, 4
      %v715 = vshrl.u32 %v584, 16
      %v717 = vrot.slane %v715, 7
      %v718 = vshll.u32 %v584, 16
      %v720 = vor.u32 %v717, %v718
      %v721 = vsel %vm586, %v713, %v720
      %v722 = vrot.slane %v717, 4
      %s747 = scalar_lea.vmem [#allocation2], 12
      %vm748 = vcmask 1043456
      %vm749 = vmand %vm748, %vm417
      %v750 = vld [vmem:[%s747] sm:$0xf]
      %v751 = vsel %vm749, %v593, %v750
      %752 = vst [vmem:[%s747] sm:$0xf] %v751
      %753 = vst [vmem:[%s747 + $0x4] sm:$0xf] %v602
      %v754 = vld [vmem:[%s747 + $0x8] sm:$0x1]
      %v755 = vsel %vm386, %v603, %v754
      %756 = vst [vmem:[%s747 + $0x8] sm:$0x1] %v755
      %v757 = vld [vmem:[%s747 + $0xc] sm:$0xf]
      %v758 = vsel %vm749, %v610, %v757
      %759 = vst [vmem:[%s747 + $0xc] sm:$0xf] %v758
      %760 = vst [vmem:[%s747 + $0x10] sm:$0xf] %v619
      %v761 = vld [vmem:[%s747 + $0x14] sm:$0x1]
      %v762 = vsel %vm386, %v620, %v761
      %763 = vst [vmem:[%s747 + $0x14] sm:$0x1] %v762
      %v764 = vld [vmem:[%s747 + $0x18] sm:$0xf]
      %v765 = vsel %vm749, %v627, %v764
      %766 = vst [vmem:[%s747 + $0x18] sm:$0xf] %v765
      %767 = vst [vmem:[%s747 + $0x1c] sm:$0xf] %v636
      %v768 = vld [vmem:[%s747 + $0x20] sm:$0x1]
      %v769 = vsel %vm386, %v637, %v768
      %770 = vst [vmem:[%s747 + $0x20] sm:$0x1] %v769
      %v771 = vld [vmem:[%s747 + $0x24] sm:$0xf]
      %v772 = vsel %vm749, %v644, %v771
      %773 = vst [vmem:[%s747 + $0x24] sm:$0xf] %v772
      %774 = vst [vmem:[%s747 + $0x28] sm:$0xf] %v653
      %v775 = vld [vmem:[%s747 + $0x2c] sm:$0x1]
      %v776 = vsel %vm386, %v654, %v775
      %777 = vst [vmem:[%s747 + $0x2c] sm:$0x1] %v776
      %v778 = vld [vmem:[%s747 + $0x30] sm:$0xf]
      %v779 = vsel %vm749, %v661, %v778
      %780 = vst [vmem:[%s747 + $0x30] sm:$0xf] %v779
      %781 = vst [vmem:[%s747 + $0x34] sm:$0xf] %v670
      %v782 = vld [vmem:[%s747 + $0x38] sm:$0x1]
      %v783 = vsel %vm386, %v671, %v782
      %784 = vst [vmem:[%s747 + $0x38] sm:$0x1] %v783
      %v785 = vld [vmem:[%s747 + $0x3c] sm:$0xf]
      %v786 = vsel %vm749, %v678, %v785
      %787 = vst [vmem:[%s747 + $0x3c] sm:$0xf] %v786
      %788 = vst [vmem:[%s747 + $0x40] sm:$0xf] %v687
      %v789 = vld [vmem:[%s747 + $0x44] sm:$0x1]
      %v790 = vsel %vm386, %v688, %v789
      %791 = vst [vmem:[%s747 + $0x44] sm:$0x1] %v790
      %v792 = vld [vmem:[%s747 + $0x48] sm:$0xf]
      %v793 = vsel %vm749, %v695, %v792
      %794 = vst [vmem:[%s747 + $0x48] sm:$0xf] %v793
      %795 = vst [vmem:[%s747 + $0x4c] sm:$0xf] %v704
      %v796 = vld [vmem:[%s747 + $0x50] sm:$0x1]
      %v797 = vsel %vm386, %v705, %v796
      %798 = vst [vmem:[%s747 + $0x50] sm:$0x1] %v797
      %v799 = vld [vmem:[%s747 + $0x54] sm:$0xf]
      %v800 = vsel %vm749, %v712, %v799
      %801 = vst [vmem:[%s747 + $0x54] sm:$0xf] %v800
      %802 = vst [vmem:[%s747 + $0x58] sm:$0xf] %v721
      %v803 = vld [vmem:[%s747 + $0x5c] sm:$0x1]
      %v804 = vsel %vm386, %v722, %v803
      %805 = vst [vmem:[%s747 + $0x5c] sm:$0x1] %v804
      // Predicated region
      $region113: #{residual_block_forward.4} parent=35 // pred_check
        %p806 = pneg %p292
      $region114: #{residual_block_forward.4} parent=35 // pred_check_branch
        %808 = sbr.rel (%p806) target = $region116
      $region115: #{residual_block_forward.4} parent=35 // pred_region
        %s809 = smul.u32 4, 1
        %s810 = smul.u32 %s809, 2
        %s811 = smul.u32 %s810, 1
        %s812 = sshll.u32 %s811, 4
        %813 = dma.done [#allocation4], %s812
        %v814 = vld [vmem:[#allocation3] sm:$0xf]
        %v815 = vld [vmem:[#allocation3 + $0x4] sm:$0xf]
        %v816 = vunpack.c.l.bf16 %v814
        %v817 = vunpack.c.l.bf16 %v815
        %v818 = vld [vmem:[%s3] sm:$0x1]
        %v820 = vperm.slane %v818, 0
        %v822 = vmul.f32 %v816, %v820
        %v823 = vmul.f32 %v817, %v820
        %v824 = vld [vmem:[%s4] sm:$0x1]
        %v826 = vperm.slane %v824, 0
        %v828 = vadd.f32 %v822, %v826
        %v829 = vadd.f32 %v823, %v826
        %vm830 = vcmp.gt.f32.partialorder %v828, 0.0
        %vm831 = vcmp.gt.f32.partialorder %v829, 0.0
        %v832 = vmul.f32 %v828, 0.1
        %v833 = vmul.f32 %v829, 0.1
        %v834 = vsel %vm830, %v828, %v832
        %v835 = vsel %vm831, %v829, %v833
        %v836 = vpack.c.bf16 %v834, %v834
        %v837 = vpack.c.bf16 %v835, %v835
        %v839 = vshrl.u32 %v836, 16
        %v841 = vrot.slane %v839, 7
        %v842 = vshll.u32 %v836, 16
        %v844 = vor.u32 %v841, %v842
        %v845 = vrot.slane %v841, 4
        %v847 = vshrl.u32 %v837, 16
        %v849 = vrot.slane %v847, 7
        %v850 = vshll.u32 %v837, 16
        %v852 = vor.u32 %v849, %v850
        %v853 = vsel %vm586, %v845, %v852
        %v854 = vrot.slane %v849, 4
        %v858 = vld [vmem:[#allocation2] sm:$0xf]
        %v859 = vsel %vm749, %v844, %v858
        %860 = vst [vmem:[#allocation2] sm:$0xf] %v859
        %861 = vst [vmem:[#allocation2 + $0x4] sm:$0xf] %v853
        %v862 = vld [vmem:[#allocation2 + $0x8] sm:$0x1]
        %v863 = vsel %vm386, %v854, %v862
        %864 = vst [vmem:[#allocation2 + $0x8] sm:$0x1] %v863
      $region116: #{residual_block_forward.4} parent=35 // pred_fallthru
        _
      %p865 = scmp.eq.s32.totalorder %s23, 0
      // Predicated region
      $region117: #{residual_block_forward.4} parent=35 // pred_check
        %p866 = pneg %p865
      $region118: #{residual_block_forward.4} parent=35 // pred_check_branch
        %868 = sbr.rel (%p866) target = $region120
      $region119: #{residual_block_forward.4} parent=35 // pred_region
        %v869 = vld [vmem:[#allocation2] sm:$0xf]
        %v870 = vsel %vm749, 0, %v869
        %871 = vst [vmem:[#allocation2] sm:$0xf] %v870
        %872 = vst [vmem:[#allocation2 + $0x4] sm:$0xf] 0
        %v873 = vld [vmem:[#allocation2 + $0x8] sm:$0x1]
        %v874 = vsel %vm386, 0, %v873
        %875 = vst [vmem:[#allocation2 + $0x8] sm:$0x1] %v874
      $region120: #{residual_block_forward.4} parent=35 // pred_fallthru
        _
      // Predicated region
      $region121: #{residual_block_forward.4} parent=35 // pred_check
        %p876 = pneg %p337
      $region122: #{residual_block_forward.4} parent=35 // pred_check_branch
        %878 = sbr.rel (%p876) target = $region124
      $region123: #{residual_block_forward.4} parent=35 // pred_region
        %s879 = scalar_lea.vmem [#allocation3], 8
        %s880 = scalar_lea.sflag [#allocation4], 1
        %s881 = smul.u32 4, 1
        %s882 = smul.u32 %s881, 2
        %s883 = smul.u32 %s882, 1
        %s884 = sshll.u32 %s883, 4
        %885 = dma.done %s880, %s884
        %v886 = vld [vmem:[%s879] sm:$0xf]
        %v887 = vld [vmem:[%s879 + $0x4] sm:$0xf]
        %v888 = vunpack.c.l.bf16 %v886
        %v889 = vunpack.c.l.bf16 %v887
        %v890 = vld [vmem:[%s3] sm:$0x1]
        %v892 = vperm.slane %v890, 0
        %v894 = vmul.f32 %v888, %v892
        %v895 = vmul.f32 %v889, %v892
        %v896 = vld [vmem:[%s4] sm:$0x1]
        %v898 = vperm.slane %v896, 0
        %v900 = vadd.f32 %v894, %v898
        %v901 = vadd.f32 %v895, %v898
        %vm902 = vcmp.gt.f32.partialorder %v900, 0.0
        %vm903 = vcmp.gt.f32.partialorder %v901, 0.0
        %v904 = vmul.f32 %v900, 0.1
        %v905 = vmul.f32 %v901, 0.1
        %v906 = vsel %vm902, %v900, %v904
        %v907 = vsel %vm903, %v901, %v905
        %v908 = vpack.c.bf16 %v906, %v906
        %v909 = vpack.c.bf16 %v907, %v907
        %v911 = vshrl.u32 %v908, 16
        %v913 = vrot.slane %v911, 7
        %v914 = vshll.u32 %v908, 16
        %v916 = vor.u32 %v913, %v914
        %v917 = vrot.slane %v913, 4
        %v919 = vshrl.u32 %v909, 16
        %v921 = vrot.slane %v919, 7
        %v922 = vshll.u32 %v909, 16
        %v924 = vor.u32 %v921, %v922
        %v925 = vsel %vm586, %v917, %v924
        %v926 = vrot.slane %v921, 4
        %s930 = scalar_lea.vmem [#allocation2], 108
        %v931 = vld [vmem:[%s930] sm:$0xf]
        %v932 = vsel %vm749, %v916, %v931
        %933 = vst [vmem:[%s930] sm:$0xf] %v932
        %934 = vst [vmem:[%s930 + $0x4] sm:$0xf] %v925
        %v935 = vld [vmem:[%s930 + $0x8] sm:$0x1]
        %v936 = vsel %vm386, %v926, %v935
        %937 = vst [vmem:[%s930 + $0x8] sm:$0x1] %v936
      $region124: #{residual_block_forward.4} parent=35 // pred_fallthru
        _
      %p938 = scmp.eq.s32.totalorder %s23, 1
      // Predicated region
      $region125: #{residual_block_forward.4} parent=35 // pred_check
        %p939 = pneg %p938
      $region126: #{residual_block_forward.4} parent=35 // pred_check_branch
        %941 = sbr.rel (%p939) target = $region128
      $region127: #{residual_block_forward.4} parent=35 // pred_region
        %s942 = scalar_lea.vmem [#allocation2], 108
        %v943 = vld [vmem:[%s942] sm:$0xf]
        %v944 = vsel %vm749, 0, %v943
        %945 = vst [vmem:[%s942] sm:$0xf] %v944
        %946 = vst [vmem:[%s942 + $0x4] sm:$0xf] 0
        %v947 = vld [vmem:[%s942 + $0x8] sm:$0x1]
        %v948 = vsel %vm386, 0, %v947
        %949 = vst [vmem:[%s942 + $0x8] sm:$0x1] %v948
      $region128: #{residual_block_forward.4} parent=35 // pred_fallthru
        _
      %v950 = vld [vmem:[#allocation2] sm:$0xf]
      %v951 = vld [vmem:[#allocation2 + $0x4] sm:$0xf]
      %v952 = vld [vmem:[#allocation2 + $0xc] sm:$0xf]
      %v953 = vld [vmem:[#allocation2 + $0x10] sm:$0xf]
      %v954 = vld [vmem:[#allocation2 + $0x18] sm:$0xf]
      %v955 = vld [vmem:[#allocation2 + $0x1c] sm:$0xf]
      %v956 = vld [vmem:[#allocation2 + $0x24] sm:$0xf]
      %v957 = vld [vmem:[#allocation2 + $0x28] sm:$0xf]
      %v958 = vld [vmem:[#allocation2 + $0x30] sm:$0xf]
      %v959 = vld [vmem:[#allocation2 + $0x34] sm:$0xf]
      %v960 = vld [vmem:[#allocation2 + $0x3c] sm:$0xf]
      %v961 = vld [vmem:[#allocation2 + $0x40] sm:$0xf]
      %v962 = vld [vmem:[#allocation2 + $0x48] sm:$0xf]
      %v963 = vld [vmem:[#allocation2 + $0x4c] sm:$0xf]
      %v964 = vld [vmem:[#allocation2 + $0x54] sm:$0xf]
      %v965 = vld [vmem:[#allocation2 + $0x58] sm:$0xf]
      %v966 = vld [vmem:[#allocation2 + $0x8] sm:$0x1]
      %v967 = vld [vmem:[#allocation2 + $0x14] sm:$0x1]
      %v968 = vld [vmem:[#allocation2 + $0x20] sm:$0x1]
      %v969 = vld [vmem:[#allocation2 + $0x2c] sm:$0x1]
      %v970 = vld [vmem:[#allocation2 + $0x38] sm:$0x1]
      %v971 = vld [vmem:[#allocation2 + $0x44] sm:$0x1]
      %v972 = vld [vmem:[#allocation2 + $0x50] sm:$0x1]
      %v973 = vld [vmem:[#allocation2 + $0x5c] sm:$0x1]
      %v974 = vld [vmem:[#allocation2] sm:$0xe]
      %v975 = vld [vmem:[#allocation2 + $0xc] sm:$0xe]
      %v976 = vld [vmem:[#allocation2 + $0x18] sm:$0xe]
      %v977 = vld [vmem:[#allocation2 + $0x24] sm:$0xe]
      %v978 = vld [vmem:[#allocation2 + $0x30] sm:$0xe]
      %v979 = vld [vmem:[#allocation2 + $0x3c] sm:$0xe]
      %v980 = vld [vmem:[#allocation2 + $0x48] sm:$0xe]
      %v981 = vld [vmem:[#allocation2 + $0x54] sm:$0xe]
      %v998 = vunpack.c.l.b16 %v950
      %v999 = vunpack.c.l.b16 %v951
      %v1000 = vunpack.c.l.b16 %v952
      %v1001 = vunpack.c.l.b16 %v953
      %v1002 = vunpack.c.l.b16 %v954
      %v1003 = vunpack.c.l.b16 %v955
      %v1004 = vunpack.c.l.b16 %v956
      %v1005 = vunpack.c.l.b16 %v957
      %v1006 = vunpack.c.l.b16 %v958
      %v1007 = vunpack.c.l.b16 %v959
      %v1008 = vunpack.c.l.b16 %v960
      %v1009 = vunpack.c.l.b16 %v961
      %v1010 = vunpack.c.l.b16 %v962
      %v1011 = vunpack.c.l.b16 %v963
      %v1012 = vunpack.c.l.b16 %v964
      %v1013 = vunpack.c.l.b16 %v965
      %v1014 = vpack.c.b16 %v999, %v998
      %v1015 = vpack.c.b16 %v1001, %v1000
      %v1016 = vpack.c.b16 %v1003, %v1002
      %v1017 = vpack.c.b16 %v1005, %v1004
      %v1018 = vpack.c.b16 %v1007, %v1006
      %v1019 = vpack.c.b16 %v1009, %v1008
      %v1020 = vpack.c.b16 %v1011, %v1010
      %v1021 = vpack.c.b16 %v1013, %v1012
      %v1038 = vunpack.c.l.b16 %v966
      %v1039 = vunpack.c.l.b16 %v967
      %v1040 = vunpack.c.l.b16 %v968
      %v1041 = vunpack.c.l.b16 %v969
      %v1042 = vunpack.c.l.b16 %v970
      %v1043 = vunpack.c.l.b16 %v971
      %v1044 = vunpack.c.l.b16 %v972
      %v1045 = vunpack.c.l.b16 %v973
      %v1046 = vpack.c.b16 %v1038, %v1038
      %v1047 = vpack.c.b16 %v1039, %v1039
      %v1048 = vpack.c.b16 %v1040, %v1040
      %v1049 = vpack.c.b16 %v1041, %v1041
      %v1050 = vpack.c.b16 %v1042, %v1042
      %v1051 = vpack.c.b16 %v1043, %v1043
      %v1052 = vpack.c.b16 %v1044, %v1044
      %v1053 = vpack.c.b16 %v1045, %v1045
      %vm1054 = vsmask.f32 7424
      %v1056 = vshrl.u32 %v1014, 16
      %v1058 = vshll.u32 %v1014, 16
      %v1060 = vrot.slane %v1058, 1
      %v1061 = vor.u32 %v1056, %v1060
      %v1063 = vshll.u32 %v1046, 16
      %v1065 = vrot.slane %v1063, 1
      %v1066 = vsel %vm1054, %v1061, %v1065
      %v1068 = vshrl.u32 %v1015, 16
      %v1070 = vshll.u32 %v1015, 16
      %v1072 = vrot.slane %v1070, 1
      %v1073 = vor.u32 %v1068, %v1072
      %v1075 = vshll.u32 %v1047, 16
      %v1077 = vrot.slane %v1075, 1
      %v1078 = vsel %vm1054, %v1073, %v1077
      %v1080 = vshrl.u32 %v1016, 16
      %v1082 = vshll.u32 %v1016, 16
      %v1084 = vrot.slane %v1082, 1
      %v1085 = vor.u32 %v1080, %v1084
      %v1087 = vshll.u32 %v1048, 16
      %v1089 = vrot.slane %v1087, 1
      %v1090 = vsel %vm1054, %v1085, %v1089
      %v1092 = vshrl.u32 %v1017, 16
      %v1094 = vshll.u32 %v1017, 16
      %v1096 = vrot.slane %v1094, 1
      %v1097 = vor.u32 %v1092, %v1096
      %v1099 = vshll.u32 %v1049, 16
      %v1101 = vrot.slane %v1099, 1
      %v1102 = vsel %vm1054, %v1097, %v1101
      %v1104 = vshrl.u32 %v1018, 16
      %v1106 = vshll.u32 %v1018, 16
      %v1108 = vrot.slane %v1106, 1
      %v1109 = vor.u32 %v1104, %v1108
      %v1111 = vshll.u32 %v1050, 16
      %v1113 = vrot.slane %v1111, 1
      %v1114 = vsel %vm1054, %v1109, %v1113
      %v1116 = vshrl.u32 %v1019, 16
      %v1118 = vshll.u32 %v1019, 16
      %v1120 = vrot.slane %v1118, 1
      %v1121 = vor.u32 %v1116, %v1120
      %v1123 = vshll.u32 %v1051, 16
      %v1125 = vrot.slane %v1123, 1
      %v1126 = vsel %vm1054, %v1121, %v1125
      %v1128 = vshrl.u32 %v1020, 16
      %v1130 = vshll.u32 %v1020, 16
      %v1132 = vrot.slane %v1130, 1
      %v1133 = vor.u32 %v1128, %v1132
      %v1135 = vshll.u32 %v1052, 16
      %v1137 = vrot.slane %v1135, 1
      %v1138 = vsel %vm1054, %v1133, %v1137
      %v1140 = vshrl.u32 %v1021, 16
      %v1142 = vshll.u32 %v1021, 16
      %v1144 = vrot.slane %v1142, 1
      %v1145 = vor.u32 %v1140, %v1144
      %v1147 = vshll.u32 %v1053, 16
      %v1149 = vrot.slane %v1147, 1
      %v1150 = vsel %vm1054, %v1145, %v1149
      %v1167 = vunpack.c.l.b16 %v974
      %v1168 = vunpack.c.l.b16 %v975
      %v1169 = vunpack.c.l.b16 %v976
      %v1170 = vunpack.c.l.b16 %v977
      %v1171 = vunpack.c.l.b16 %v978
      %v1172 = vunpack.c.l.b16 %v979
      %v1173 = vunpack.c.l.b16 %v980
      %v1174 = vunpack.c.l.b16 %v981
      %v1175 = vpack.c.b16 %v999, %v1167
      %v1176 = vpack.c.b16 %v1001, %v1168
      %v1177 = vpack.c.b16 %v1003, %v1169
      %v1178 = vpack.c.b16 %v1005, %v1170
      %v1179 = vpack.c.b16 %v1007, %v1171
      %v1180 = vpack.c.b16 %v1009, %v1172
      %v1181 = vpack.c.b16 %v1011, %v1173
      %v1182 = vpack.c.b16 %v1013, %v1174
      %vm1183 = vcmask 1046528
      %v1184 = vrot.slane %v1175, 1
      %v1185 = vrot.slane %v1046, 1
      %v1186 = vsel %vm1183, %v1184, %v1185
      %v1187 = vrot.slane %v1176, 1
      %v1188 = vrot.slane %v1047, 1
      %v1189 = vsel %vm1183, %v1187, %v1188
      %v1190 = vrot.slane %v1177, 1
      %v1191 = vrot.slane %v1048, 1
      %v1192 = vsel %vm1183, %v1190, %v1191
      %v1193 = vrot.slane %v1178, 1
      %v1194 = vrot.slane %v1049, 1
      %v1195 = vsel %vm1183, %v1193, %v1194
      %v1196 = vrot.slane %v1179, 1
      %v1197 = vrot.slane %v1050, 1
      %v1198 = vsel %vm1183, %v1196, %v1197
      %v1199 = vrot.slane %v1180, 1
      %v1200 = vrot.slane %v1051, 1
      %v1201 = vsel %vm1183, %v1199, %v1200
      %v1202 = vrot.slane %v1181, 1
      %v1203 = vrot.slane %v1052, 1
      %v1204 = vsel %vm1183, %v1202, %v1203
      %v1205 = vrot.slane %v1182, 1
      %v1206 = vrot.slane %v1053, 1
      %v1207 = vsel %vm1183, %v1205, %v1206
      %v1216 = vld [vmem:[%s2] sm:$0xf]
      %v1217 = vld [vmem:[%s2 + $0x4] sm:$0xf]
      %v1218 = vld [vmem:[%s2 + $0x8] sm:$0xf]
      %v1219 = vld [vmem:[%s2 + $0xc] sm:$0xf]
      %v1220 = vld [vmem:[%s2 + $0x10] sm:$0xf]
      %v1221 = vld [vmem:[%s2 + $0x14] sm:$0xf]
      %v1222 = vld [vmem:[%s2 + $0x18] sm:$0xf]
      %v1223 = vld [vmem:[%s2 + $0x1c] sm:$0xf]
      %v1224 = vld [vmem:[%s2 + $0x20] sm:$0xf]
      %v1225 = vld [vmem:[%s2 + $0x24] sm:$0xf]
      %v1226 = vld [vmem:[%s2 + $0x28] sm:$0xf]
      %v1227 = vld [vmem:[%s2 + $0x2c] sm:$0xf]
      %v1228 = vld [vmem:[%s2 + $0x30] sm:$0xf]
      %v1229 = vld [vmem:[%s2 + $0x34] sm:$0xf]
      %v1230 = vld [vmem:[%s2 + $0x38] sm:$0xf]
      %v1231 = vld [vmem:[%s2 + $0x3c] sm:$0xf]
      %v1232 = vld [vmem:[%s2 + $0x40] sm:$0xf]
      %v1233 = vld [vmem:[%s2 + $0x44] sm:$0xf]
      %v1234 = vld [vmem:[%s2 + $0x48] sm:$0xf]
      %v1235 = vld [vmem:[%s2 + $0x4c] sm:$0xf]
      %v1236 = vld [vmem:[%s2 + $0x50] sm:$0xf]
      %v1237 = vld [vmem:[%s2 + $0x54] sm:$0xf]
      %v1238 = vld [vmem:[%s2 + $0x58] sm:$0xf]
      %v1239 = vld [vmem:[%s2 + $0x5c] sm:$0xf]
      %v1240 = vld [vmem:[%s2 + $0x60] sm:$0xf]
      %v1241 = vld [vmem:[%s2 + $0x64] sm:$0xf]
      %v1242 = vld [vmem:[%s2 + $0x68] sm:$0xf]
      %v1243 = vld [vmem:[%s2 + $0x6c] sm:$0xf]
      %v1244 = vld [vmem:[%s2 + $0x70] sm:$0xf]
      %v1245 = vld [vmem:[%s2 + $0x74] sm:$0xf]
      %v1246 = vld [vmem:[%s2 + $0x78] sm:$0xf]
      %v1247 = vld [vmem:[%s2 + $0x7c] sm:$0xf]
      %v1248 = vld [vmem:[%s2 + $0x80] sm:$0xf]
      %v1249 = vld [vmem:[%s2 + $0x84] sm:$0xf]
      %v1250 = vld [vmem:[%s2 + $0x88] sm:$0xf]
      %v1251 = vld [vmem:[%s2 + $0x8c] sm:$0xf]
      %v1252 = vld [vmem:[%s2 + $0x90] sm:$0xf]
      %v1253 = vld [vmem:[%s2 + $0x94] sm:$0xf]
      %v1254 = vld [vmem:[%s2 + $0x98] sm:$0xf]
      %v1255 = vld [vmem:[%s2 + $0x9c] sm:$0xf]
      %v1256 = vld [vmem:[%s2 + $0xa0] sm:$0xf]
      %v1257 = vld [vmem:[%s2 + $0xa4] sm:$0xf]
      %v1258 = vld [vmem:[%s2 + $0xa8] sm:$0xf]
      %v1259 = vld [vmem:[%s2 + $0xac] sm:$0xf]
      %v1260 = vld [vmem:[%s2 + $0xb0] sm:$0xf]
      %v1261 = vld [vmem:[%s2 + $0xb4] sm:$0xf]
      %v1262 = vld [vmem:[%s2 + $0xb8] sm:$0xf]
      %v1263 = vld [vmem:[%s2 + $0xbc] sm:$0xf]
      %v1264 = vld [vmem:[%s747] sm:$0xf]
      %v1265 = vld [vmem:[%s747 + $0x4] sm:$0xf]
      %v1266 = vld [vmem:[%s747 + $0xc] sm:$0xf]
      %v1267 = vld [vmem:[%s747 + $0x10] sm:$0xf]
      %v1268 = vld [vmem:[%s747 + $0x18] sm:$0xf]
      %v1269 = vld [vmem:[%s747 + $0x1c] sm:$0xf]
      %v1270 = vld [vmem:[%s747 + $0x24] sm:$0xf]
      %v1271 = vld [vmem:[%s747 + $0x28] sm:$0xf]
      %v1272 = vld [vmem:[%s747 + $0x30] sm:$0xf]
      %v1273 = vld [vmem:[%s747 + $0x34] sm:$0xf]
      %v1274 = vld [vmem:[%s747 + $0x3c] sm:$0xf]
      %v1275 = vld [vmem:[%s747 + $0x40] sm:$0xf]
      %v1276 = vld [vmem:[%s747 + $0x48] sm:$0xf]
      %v1277 = vld [vmem:[%s747 + $0x4c] sm:$0xf]
      %v1278 = vld [vmem:[%s747 + $0x54] sm:$0xf]
      %v1279 = vld [vmem:[%s747 + $0x58] sm:$0xf]
      %v1280 = vld [vmem:[%s747 + $0x8] sm:$0x1]
      %v1281 = vld [vmem:[%s747 + $0x14] sm:$0x1]
      %v1282 = vld [vmem:[%s747 + $0x20] sm:$0x1]
      %v1283 = vld [vmem:[%s747 + $0x2c] sm:$0x1]
      %v1284 = vld [vmem:[%s747 + $0x38] sm:$0x1]
      %v1285 = vld [vmem:[%s747 + $0x44] sm:$0x1]
      %v1286 = vld [vmem:[%s747 + $0x50] sm:$0x1]
      %v1287 = vld [vmem:[%s747 + $0x5c] sm:$0x1]
      %v1288 = vld [vmem:[%s747] sm:$0xe]
      %v1289 = vld [vmem:[%s747 + $0xc] sm:$0xe]
      %v1290 = vld [vmem:[%s747 + $0x18] sm:$0xe]
      %v1291 = vld [vmem:[%s747 + $0x24] sm:$0xe]
      %v1292 = vld [vmem:[%s747 + $0x30] sm:$0xe]
      %v1293 = vld [vmem:[%s747 + $0x3c] sm:$0xe]
      %v1294 = vld [vmem:[%s747 + $0x48] sm:$0xe]
      %v1295 = vld [vmem:[%s747 + $0x54] sm:$0xe]
      %v1312 = vunpack.c.l.b16 %v1264
      %v1313 = vunpack.c.l.b16 %v1265
      %v1314 = vunpack.c.l.b16 %v1266
      %v1315 = vunpack.c.l.b16 %v1267
      %v1316 = vunpack.c.l.b16 %v1268
      %v1317 = vunpack.c.l.b16 %v1269
      %v1318 = vunpack.c.l.b16 %v1270
      %v1319 = vunpack.c.l.b16 %v1271
      %v1320 = vunpack.c.l.b16 %v1272
      %v1321 = vunpack.c.l.b16 %v1273
      %v1322 = vunpack.c.l.b16 %v1274
      %v1323 = vunpack.c.l.b16 %v1275
      %v1324 = vunpack.c.l.b16 %v1276
      %v1325 = vunpack.c.l.b16 %v1277
      %v1326 = vunpack.c.l.b16 %v1278
      %v1327 = vunpack.c.l.b16 %v1279
      %v1328 = vpack.c.b16 %v1313, %v1312
      %v1329 = vpack.c.b16 %v1315, %v1314
      %v1330 = vpack.c.b16 %v1317, %v1316
      %v1331 = vpack.c.b16 %v1319, %v1318
      %v1332 = vpack.c.b16 %v1321, %v1320
      %v1333 = vpack.c.b16 %v1323, %v1322
      %v1334 = vpack.c.b16 %v1325, %v1324
      %v1335 = vpack.c.b16 %v1327, %v1326
      %v1352 = vunpack.c.l.b16 %v1280
      %v1353 = vunpack.c.l.b16 %v1281
      %v1354 = vunpack.c.l.b16 %v1282
      %v1355 = vunpack.c.l.b16 %v1283
      %v1356 = vunpack.c.l.b16 %v1284
      %v1357 = vunpack.c.l.b16 %v1285
      %v1358 = vunpack.c.l.b16 %v1286
      %v1359 = vunpack.c.l.b16 %v1287
      %v1360 = vpack.c.b16 %v1352, %v1352
      %v1361 = vpack.c.b16 %v1353, %v1353
      %v1362 = vpack.c.b16 %v1354, %v1354
      %v1363 = vpack.c.b16 %v1355, %v1355
      %v1364 = vpack.c.b16 %v1356, %v1356
      %v1365 = vpack.c.b16 %v1357, %v1357
      %v1366 = vpack.c.b16 %v1358, %v1358
      %v1367 = vpack.c.b16 %v1359, %v1359
      %v1369 = vshrl.u32 %v1328, 16
      %v1371 = vshll.u32 %v1328, 16
      %v1373 = vrot.slane %v1371, 1
      %v1374 = vor.u32 %v1369, %v1373
      %v1376 = vshll.u32 %v1360, 16
      %v1378 = vrot.slane %v1376, 1
      %v1379 = vsel %vm1054, %v1374, %v1378
      %v1381 = vshrl.u32 %v1329, 16
      %v1383 = vshll.u32 %v1329, 16
      %v1385 = vrot.slane %v1383, 1
      %v1386 = vor.u32 %v1381, %v1385
      %v1388 = vshll.u32 %v1361, 16
      %v1390 = vrot.slane %v1388, 1
      %v1391 = vsel %vm1054, %v1386, %v1390
      %v1393 = vshrl.u32 %v1330, 16
      %v1395 = vshll.u32 %v1330, 16
      %v1397 = vrot.slane %v1395, 1
      %v1398 = vor.u32 %v1393, %v1397
      %v1400 = vshll.u32 %v1362, 16
      %v1402 = vrot.slane %v1400, 1
      %v1403 = vsel %vm1054, %v1398, %v1402
      %v1405 = vshrl.u32 %v1331, 16
      %v1407 = vshll.u32 %v1331, 16
      %v1409 = vrot.slane %v1407, 1
      %v1410 = vor.u32 %v1405, %v1409
      %v1412 = vshll.u32 %v1363, 16
      %v1414 = vrot.slane %v1412, 1
      %v1415 = vsel %vm1054, %v1410, %v1414
      %v1417 = vshrl.u32 %v1332, 16
      %v1419 = vshll.u32 %v1332, 16
      %v1421 = vrot.slane %v1419, 1
      %v1422 = vor.u32 %v1417, %v1421
      %v1424 = vshll.u32 %v1364, 16
      %v1426 = vrot.slane %v1424, 1
      %v1427 = vsel %vm1054, %v1422, %v1426
      %v1429 = vshrl.u32 %v1333, 16
      %v1431 = vshll.u32 %v1333, 16
      %v1433 = vrot.slane %v1431, 1
      %v1434 = vor.u32 %v1429, %v1433
      %v1436 = vshll.u32 %v1365, 16
      %v1438 = vrot.slane %v1436, 1
      %v1439 = vsel %vm1054, %v1434, %v1438
      %v1441 = vshrl.u32 %v1334, 16
      %v1443 = vshll.u32 %v1334, 16
      %v1445 = vrot.slane %v1443, 1
      %v1446 = vor.u32 %v1441, %v1445
      %v1448 = vshll.u32 %v1366, 16
      %v1450 = vrot.slane %v1448, 1
      %v1451 = vsel %vm1054, %v1446, %v1450
      %v1453 = vshrl.u32 %v1335, 16
      %v1455 = vshll.u32 %v1335, 16
      %v1457 = vrot.slane %v1455, 1
      %v1458 = vor.u32 %v1453, %v1457
      %v1460 = vshll.u32 %v1367, 16
      %v1462 = vrot.slane %v1460, 1
      %v1463 = vsel %vm1054, %v1458, %v1462
      %v1480 = vunpack.c.l.b16 %v1288
      %v1481 = vunpack.c.l.b16 %v1289
      %v1482 = vunpack.c.l.b16 %v1290
      %v1483 = vunpack.c.l.b16 %v1291
      %v1484 = vunpack.c.l.b16 %v1292
      %v1485 = vunpack.c.l.b16 %v1293
      %v1486 = vunpack.c.l.b16 %v1294
      %v1487 = vunpack.c.l.b16 %v1295
      %v1488 = vpack.c.b16 %v1313, %v1480
      %v1489 = vpack.c.b16 %v1315, %v1481
      %v1490 = vpack.c.b16 %v1317, %v1482
      %v1491 = vpack.c.b16 %v1319, %v1483
      %v1492 = vpack.c.b16 %v1321, %v1484
      %v1493 = vpack.c.b16 %v1323, %v1485
      %v1494 = vpack.c.b16 %v1325, %v1486
      %v1495 = vpack.c.b16 %v1327, %v1487
      %v1496 = vrot.slane %v1488, 1
      %v1497 = vrot.slane %v1360, 1
      %v1498 = vsel %vm1183, %v1496, %v1497
      %v1499 = vrot.slane %v1489, 1
      %v1500 = vrot.slane %v1361, 1
      %v1501 = vsel %vm1183, %v1499, %v1500
      %v1502 = vrot.slane %v1490, 1
      %v1503 = vrot.slane %v1362, 1
      %v1504 = vsel %vm1183, %v1502, %v1503
      %v1505 = vrot.slane %v1491, 1
      %v1506 = vrot.slane %v1363, 1
      %v1507 = vsel %vm1183, %v1505, %v1506
      %v1508 = vrot.slane %v1492, 1
      %v1509 = vrot.slane %v1364, 1
      %v1510 = vsel %vm1183, %v1508, %v1509
      %v1511 = vrot.slane %v1493, 1
      %v1512 = vrot.slane %v1365, 1
      %v1513 = vsel %vm1183, %v1511, %v1512
      %v1514 = vrot.slane %v1494, 1
      %v1515 = vrot.slane %v1366, 1
      %v1516 = vsel %vm1183, %v1514, %v1515
      %v1517 = vrot.slane %v1495, 1
      %v1518 = vrot.slane %v1367, 1
      %v1519 = vsel %vm1183, %v1517, %v1518
      %s1528 = scalar_lea.vmem %s2, 192
      %v1529 = vld [vmem:[%s1528] sm:$0xf]
      %v1530 = vld [vmem:[%s1528 + $0x4] sm:$0xf]
      %v1531 = vld [vmem:[%s1528 + $0x8] sm:$0xf]
      %v1532 = vld [vmem:[%s1528 + $0xc] sm:$0xf]
      %v1533 = vld [vmem:[%s1528 + $0x10] sm:$0xf]
      %v1534 = vld [vmem:[%s1528 + $0x14] sm:$0xf]
      %v1535 = vld [vmem:[%s1528 + $0x18] sm:$0xf]
      %v1536 = vld [vmem:[%s1528 + $0x1c] sm:$0xf]
      %v1537 = vld [vmem:[%s1528 + $0x20] sm:$0xf]
      %v1538 = vld [vmem:[%s1528 + $0x24] sm:$0xf]
      %v1539 = vld [vmem:[%s1528 + $0x28] sm:$0xf]
      %v1540 = vld [vmem:[%s1528 + $0x2c] sm:$0xf]
      %v1541 = vld [vmem:[%s1528 + $0x30] sm:$0xf]
      %v1542 = vld [vmem:[%s1528 + $0x34] sm:$0xf]
      %v1543 = vld [vmem:[%s1528 + $0x38] sm:$0xf]
      %v1544 = vld [vmem:[%s1528 + $0x3c] sm:$0xf]
      %v1545 = vld [vmem:[%s1528 + $0x40] sm:$0xf]
      %v1546 = vld [vmem:[%s1528 + $0x44] sm:$0xf]
      %v1547 = vld [vmem:[%s1528 + $0x48] sm:$0xf]
      %v1548 = vld [vmem:[%s1528 + $0x4c] sm:$0xf]
      %v1549 = vld [vmem:[%s1528 + $0x50] sm:$0xf]
      %v1550 = vld [vmem:[%s1528 + $0x54] sm:$0xf]
      %v1551 = vld [vmem:[%s1528 + $0x58] sm:$0xf]
      %v1552 = vld [vmem:[%s1528 + $0x5c] sm:$0xf]
      %v1553 = vld [vmem:[%s1528 + $0x60] sm:$0xf]
      %v1554 = vld [vmem:[%s1528 + $0x64] sm:$0xf]
      %v1555 = vld [vmem:[%s1528 + $0x68] sm:$0xf]
      %v1556 = vld [vmem:[%s1528 + $0x6c] sm:$0xf]
      %v1557 = vld [vmem:[%s1528 + $0x70] sm:$0xf]
      %v1558 = vld [vmem:[%s1528 + $0x74] sm:$0xf]
      %v1559 = vld [vmem:[%s1528 + $0x78] sm:$0xf]
      %v1560 = vld [vmem:[%s1528 + $0x7c] sm:$0xf]
      %v1561 = vld [vmem:[%s1528 + $0x80] sm:$0xf]
      %v1562 = vld [vmem:[%s1528 + $0x84] sm:$0xf]
      %v1563 = vld [vmem:[%s1528 + $0x88] sm:$0xf]
      %v1564 = vld [vmem:[%s1528 + $0x8c] sm:$0xf]
      %v1565 = vld [vmem:[%s1528 + $0x90] sm:$0xf]
      %v1566 = vld [vmem:[%s1528 + $0x94] sm:$0xf]
      %v1567 = vld [vmem:[%s1528 + $0x98] sm:$0xf]
      %v1568 = vld [vmem:[%s1528 + $0x9c] sm:$0xf]
      %v1569 = vld [vmem:[%s1528 + $0xa0] sm:$0xf]
      %v1570 = vld [vmem:[%s1528 + $0xa4] sm:$0xf]
      %v1571 = vld [vmem:[%s1528 + $0xa8] sm:$0xf]
      %v1572 = vld [vmem:[%s1528 + $0xac] sm:$0xf]
      %v1573 = vld [vmem:[%s1528 + $0xb0] sm:$0xf]
      %v1574 = vld [vmem:[%s1528 + $0xb4] sm:$0xf]
      %v1575 = vld [vmem:[%s1528 + $0xb8] sm:$0xf]
      %v1576 = vld [vmem:[%s1528 + $0xbc] sm:$0xf]
      %v1625 = vunpack.c.l.b16 %v1529
      %v1626 = vunpack.c.l.b16 %v1530
      %v1627 = vunpack.c.l.b16 %v1531
      %v1628 = vunpack.c.l.b16 %v1532
      %v1629 = vunpack.c.l.b16 %v1533
      %v1630 = vunpack.c.l.b16 %v1534
      %v1631 = vunpack.c.l.b16 %v1535
      %v1632 = vunpack.c.l.b16 %v1536
      %v1633 = vunpack.c.l.b16 %v1537
      %v1634 = vunpack.c.l.b16 %v1538
      %v1635 = vunpack.c.l.b16 %v1539
      %v1636 = vunpack.c.l.b16 %v1540
      %v1637 = vunpack.c.l.b16 %v1541
      %v1638 = vunpack.c.l.b16 %v1542
      %v1639 = vunpack.c.l.b16 %v1543
      %v1640 = vunpack.c.l.b16 %v1544
      %v1641 = vunpack.c.l.b16 %v1545
      %v1642 = vunpack.c.l.b16 %v1546
      %v1643 = vunpack.c.l.b16 %v1547
      %v1644 = vunpack.c.l.b16 %v1548
      %v1645 = vunpack.c.l.b16 %v1549
      %v1646 = vunpack.c.l.b16 %v1550
      %v1647 = vunpack.c.l.b16 %v1551
      %v1648 = vunpack.c.l.b16 %v1552
      %v1649 = vunpack.c.l.b16 %v1553
      %v1650 = vunpack.c.l.b16 %v1554
      %v1651 = vunpack.c.l.b16 %v1555
      %v1652 = vunpack.c.l.b16 %v1556
      %v1653 = vunpack.c.l.b16 %v1557
      %v1654 = vunpack.c.l.b16 %v1558
      %v1655 = vunpack.c.l.b16 %v1559
      %v1656 = vunpack.c.l.b16 %v1560
      %v1657 = vunpack.c.l.b16 %v1561
      %v1658 = vunpack.c.l.b16 %v1562
      %v1659 = vunpack.c.l.b16 %v1563
      %v1660 = vunpack.c.l.b16 %v1564
      %v1661 = vunpack.c.l.b16 %v1565
      %v1662 = vunpack.c.l.b16 %v1566
      %v1663 = vunpack.c.l.b16 %v1567
      %v1664 = vunpack.c.l.b16 %v1568
      %v1665 = vunpack.c.l.b16 %v1569
      %v1666 = vunpack.c.l.b16 %v1570
      %v1667 = vunpack.c.l.b16 %v1571
      %v1668 = vunpack.c.l.b16 %v1572
      %v1669 = vunpack.c.l.b16 %v1573
      %v1670 = vunpack.c.l.b16 %v1574
      %v1671 = vunpack.c.l.b16 %v1575
      %v1672 = vunpack.c.l.b16 %v1576
      %v1673 = vpack.c.b16 %v1626, %v1625
      %v1674 = vpack.c.b16 %v1628, %v1627
      %v1675 = vpack.c.b16 %v1630, %v1629
      %v1676 = vpack.c.b16 %v1632, %v1631
      %v1677 = vpack.c.b16 %v1634, %v1633
      %v1678 = vpack.c.b16 %v1636, %v1635
      %v1679 = vpack.c.b16 %v1638, %v1637
      %v1680 = vpack.c.b16 %v1640, %v1639
      %v1681 = vpack.c.b16 %v1642, %v1641
      %v1682 = vpack.c.b16 %v1644, %v1643
      %v1683 = vpack.c.b16 %v1646, %v1645
      %v1684 = vpack.c.b16 %v1648, %v1647
      %v1685 = vpack.c.b16 %v1650, %v1649
      %v1686 = vpack.c.b16 %v1652, %v1651
      %v1687 = vpack.c.b16 %v1654, %v1653
      %v1688 = vpack.c.b16 %v1656, %v1655
      %v1689 = vpack.c.b16 %v1658, %v1657
      %v1690 = vpack.c.b16 %v1660, %v1659
      %v1691 = vpack.c.b16 %v1662, %v1661
      %v1692 = vpack.c.b16 %v1664, %v1663
      %v1693 = vpack.c.b16 %v1666, %v1665
      %v1694 = vpack.c.b16 %v1668, %v1667
      %v1695 = vpack.c.b16 %v1670, %v1669
      %v1696 = vpack.c.b16 %v1672, %v1671
      %1721 = vmatpush.bf16.msra.mxu0 %v1680
      %1722 = vmatpush.bf16.msra.mxu0 %v1679
      %1723 = vmatpush.bf16.msra.mxu0 %v1678
      %1724 = vmatpush.bf16.msra.mxu0 %v1677
      %1725 = vmatpush.bf16.msra.mxu0 %v1676
      %1726 = vmatpush.bf16.msra.mxu0 %v1675
      %1727 = vmatpush.bf16.msra.mxu0 %v1674
      %1728 = vmatpush.bf16.msra.mxu0 %v1673
      %1729 = vmatmul.bf16.gmra.mxu0 %v1328
      %v1730 = vpop.f32.mrf.mxu0
      %v1731 = vadd.f32 0.0, %v1730
      %v1732 = vpop.f32.mrf.mxu0
      %v1733 = vadd.f32 0.0, %v1732
      %1734 = vmatmul.bf16.gmra.mxu0 %v1329
      %v1735 = vpop.f32.mrf.mxu0
      %v1736 = vadd.f32 0.0, %v1735
      %v1737 = vpop.f32.mrf.mxu0
      %v1738 = vadd.f32 0.0, %v1737
      %1739 = vmatmul.bf16.gmra.mxu0 %v1330
      %v1740 = vpop.f32.mrf.mxu0
      %v1741 = vadd.f32 0.0, %v1740
      %v1742 = vpop.f32.mrf.mxu0
      %v1743 = vadd.f32 0.0, %v1742
      %1744 = vmatmul.bf16.gmra.mxu0 %v1331
      %v1745 = vpop.f32.mrf.mxu0
      %v1746 = vadd.f32 0.0, %v1745
      %v1747 = vpop.f32.mrf.mxu0
      %v1748 = vadd.f32 0.0, %v1747
      %1749 = vmatmul.bf16.gmra.mxu0 %v1332
      %v1750 = vpop.f32.mrf.mxu0
      %v1751 = vadd.f32 0.0, %v1750
      %v1752 = vpop.f32.mrf.mxu0
      %v1753 = vadd.f32 0.0, %v1752
      %1754 = vmatmul.bf16.gmra.mxu0 %v1333
      %v1755 = vpop.f32.mrf.mxu0
      %v1756 = vadd.f32 0.0, %v1755
      %v1757 = vpop.f32.mrf.mxu0
      %v1758 = vadd.f32 0.0, %v1757
      %1759 = vmatmul.bf16.gmra.mxu0 %v1334
      %v1760 = vpop.f32.mrf.mxu0
      %v1761 = vadd.f32 0.0, %v1760
      %v1762 = vpop.f32.mrf.mxu0
      %v1763 = vadd.f32 0.0, %v1762
      %1764 = vmatmul.bf16.gmra.mxu0 %v1335
      %v1765 = vpop.f32.mrf.mxu0
      %v1766 = vadd.f32 0.0, %v1765
      %v1767 = vpop.f32.mrf.mxu0
      %v1768 = vadd.f32 0.0, %v1767
      %1769 = vdwg.mxu0
      %1770 = vmatpush.bf16.msra.mxu0 %v1688
      %1771 = vmatpush.bf16.msra.mxu0 %v1687
      %1772 = vmatpush.bf16.msra.mxu0 %v1686
      %1773 = vmatpush.bf16.msra.mxu0 %v1685
      %1774 = vmatpush.bf16.msra.mxu0 %v1684
      %1775 = vmatpush.bf16.msra.mxu0 %v1683
      %1776 = vmatpush.bf16.msra.mxu0 %v1682
      %1777 = vmatpush.bf16.msra.mxu0 %v1681
      %1778 = vmatmul.bf16.gmra.mxu0 %v1379
      %v1779 = vpop.f32.mrf.mxu0
      %v1780 = vadd.f32 %v1731, %v1779
      %v1781 = vpop.f32.mrf.mxu0
      %v1782 = vadd.f32 %v1733, %v1781
      %1783 = vmatmul.bf16.gmra.mxu0 %v1391
      %v1784 = vpop.f32.mrf.mxu0
      %v1785 = vadd.f32 %v1736, %v1784
      %v1786 = vpop.f32.mrf.mxu0
      %v1787 = vadd.f32 %v1738, %v1786
      %1788 = vmatmul.bf16.gmra.mxu0 %v1403
      %v1789 = vpop.f32.mrf.mxu0
      %v1790 = vadd.f32 %v1741, %v1789
      %v1791 = vpop.f32.mrf.mxu0
      %v1792 = vadd.f32 %v1743, %v1791
      %1793 = vmatmul.bf16.gmra.mxu0 %v1415
      %v1794 = vpop.f32.mrf.mxu0
      %v1795 = vadd.f32 %v1746, %v1794
      %v1796 = vpop.f32.mrf.mxu0
      %v1797 = vadd.f32 %v1748, %v1796
      %1798 = vmatmul.bf16.gmra.mxu0 %v1427
      %v1799 = vpop.f32.mrf.mxu0
      %v1800 = vadd.f32 %v1751, %v1799
      %v1801 = vpop.f32.mrf.mxu0
      %v1802 = vadd.f32 %v1753, %v1801
      %1803 = vmatmul.bf16.gmra.mxu0 %v1439
      %v1804 = vpop.f32.mrf.mxu0
      %v1805 = vadd.f32 %v1756, %v1804
      %v1806 = vpop.f32.mrf.mxu0
      %v1807 = vadd.f32 %v1758, %v1806
      %1808 = vmatmul.bf16.gmra.mxu0 %v1451
      %v1809 = vpop.f32.mrf.mxu0
      %v1810 = vadd.f32 %v1761, %v1809
      %v1811 = vpop.f32.mrf.mxu0
      %v1812 = vadd.f32 %v1763, %v1811
      %1813 = vmatmul.bf16.gmra.mxu0 %v1463
      %v1814 = vpop.f32.mrf.mxu0
      %v1815 = vadd.f32 %v1766, %v1814
      %v1816 = vpop.f32.mrf.mxu0
      %v1817 = vadd.f32 %v1768, %v1816
      %1818 = vdwg.mxu0
      %1819 = vmatpush.bf16.msra.mxu0 %v1696
      %1820 = vmatpush.bf16.msra.mxu0 %v1695
      %1821 = vmatpush.bf16.msra.mxu0 %v1694
      %1822 = vmatpush.bf16.msra.mxu0 %v1693
      %1823 = vmatpush.bf16.msra.mxu0 %v1692
      %1824 = vmatpush.bf16.msra.mxu0 %v1691
      %1825 = vmatpush.bf16.msra.mxu0 %v1690
      %1826 = vmatpush.bf16.msra.mxu0 %v1689
      %1827 = vmatmul.bf16.gmra.mxu0 %v1498
      %v1828 = vpop.f32.mrf.mxu0
      %v1829 = vadd.f32 %v1780, %v1828
      %v1830 = vpop.f32.mrf.mxu0
      %v1831 = vadd.f32 %v1782, %v1830
      %1832 = vmatmul.bf16.gmra.mxu0 %v1501
      %v1833 = vpop.f32.mrf.mxu0
      %v1834 = vadd.f32 %v1785, %v1833
      %v1835 = vpop.f32.mrf.mxu0
      %v1836 = vadd.f32 %v1787, %v1835
      %1837 = vmatmul.bf16.gmra.mxu0 %v1504
      %v1838 = vpop.f32.mrf.mxu0
      %v1839 = vadd.f32 %v1790, %v1838
      %v1840 = vpop.f32.mrf.mxu0
      %v1841 = vadd.f32 %v1792, %v1840
      %1842 = vmatmul.bf16.gmra.mxu0 %v1507
      %v1843 = vpop.f32.mrf.mxu0
      %v1844 = vadd.f32 %v1795, %v1843
      %v1845 = vpop.f32.mrf.mxu0
      %v1846 = vadd.f32 %v1797, %v1845
      %1847 = vmatmul.bf16.gmra.mxu0 %v1510
      %v1848 = vpop.f32.mrf.mxu0
      %v1849 = vadd.f32 %v1800, %v1848
      %v1850 = vpop.f32.mrf.mxu0
      %v1851 = vadd.f32 %v1802, %v1850
      %1852 = vmatmul.bf16.gmra.mxu0 %v1513
      %v1853 = vpop.f32.mrf.mxu0
      %v1854 = vadd.f32 %v1805, %v1853
      %v1855 = vpop.f32.mrf.mxu0
      %v1856 = vadd.f32 %v1807, %v1855
      %1857 = vmatmul.bf16.gmra.mxu0 %v1516
      %v1858 = vpop.f32.mrf.mxu0
      %v1859 = vadd.f32 %v1810, %v1858
      %v1860 = vpop.f32.mrf.mxu0
      %v1861 = vadd.f32 %v1812, %v1860
      %1862 = vmatmul.bf16.gmra.mxu0 %v1519
      %v1863 = vpop.f32.mrf.mxu0
      %v1864 = vadd.f32 %v1815, %v1863
      %v1865 = vpop.f32.mrf.mxu0
      %v1866 = vadd.f32 %v1817, %v1865
      %1867 = vdwg.mxu0
      %v1916 = vunpack.c.l.b16 %v1216
      %v1917 = vunpack.c.l.b16 %v1217
      %v1918 = vunpack.c.l.b16 %v1218
      %v1919 = vunpack.c.l.b16 %v1219
      %v1920 = vunpack.c.l.b16 %v1220
      %v1921 = vunpack.c.l.b16 %v1221
      %v1922 = vunpack.c.l.b16 %v1222
      %v1923 = vunpack.c.l.b16 %v1223
      %v1924 = vunpack.c.l.b16 %v1224
      %v1925 = vunpack.c.l.b16 %v1225
      %v1926 = vunpack.c.l.b16 %v1226
      %v1927 = vunpack.c.l.b16 %v1227
      %v1928 = vunpack.c.l.b16 %v1228
      %v1929 = vunpack.c.l.b16 %v1229
      %v1930 = vunpack.c.l.b16 %v1230
      %v1931 = vunpack.c.l.b16 %v1231
      %v1932 = vunpack.c.l.b16 %v1232
      %v1933 = vunpack.c.l.b16 %v1233
      %v1934 = vunpack.c.l.b16 %v1234
      %v1935 = vunpack.c.l.b16 %v1235
      %v1936 = vunpack.c.l.b16 %v1236
      %v1937 = vunpack.c.l.b16 %v1237
      %v1938 = vunpack.c.l.b16 %v1238
      %v1939 = vunpack.c.l.b16 %v1239
      %v1940 = vunpack.c.l.b16 %v1240
      %v1941 = vunpack.c.l.b16 %v1241
      %v1942 = vunpack.c.l.b16 %v1242
      %v1943 = vunpack.c.l.b16 %v1243
      %v1944 = vunpack.c.l.b16 %v1244
      %v1945 = vunpack.c.l.b16 %v1245
      %v1946 = vunpack.c.l.b16 %v1246
      %v1947 = vunpack.c.l.b16 %v1247
      %v1948 = vunpack.c.l.b16 %v1248
      %v1949 = vunpack.c.l.b16 %v1249
      %v1950 = vunpack.c.l.b16 %v1250
      %v1951 = vunpack.c.l.b16 %v1251
      %v1952 = vunpack.c.l.b16 %v1252
      %v1953 = vunpack.c.l.b16 %v1253
      %v1954 = vunpack.c.l.b16 %v1254
      %v1955 = vunpack.c.l.b16 %v1255
      %v1956 = vunpack.c.l.b16 %v1256
      %v1957 = vunpack.c.l.b16 %v1257
      %v1958 = vunpack.c.l.b16 %v1258
      %v1959 = vunpack.c.l.b16 %v1259
      %v1960 = vunpack.c.l.b16 %v1260
      %v1961 = vunpack.c.l.b16 %v1261
      %v1962 = vunpack.c.l.b16 %v1262
      %v1963 = vunpack.c.l.b16 %v1263
      %v1964 = vpack.c.b16 %v1917, %v1916
      %v1965 = vpack.c.b16 %v1919, %v1918
      %v1966 = vpack.c.b16 %v1921, %v1920
      %v1967 = vpack.c.b16 %v1923, %v1922
      %v1968 = vpack.c.b16 %v1925, %v1924
      %v1969 = vpack.c.b16 %v1927, %v1926
      %v1970 = vpack.c.b16 %v1929, %v1928
      %v1971 = vpack.c.b16 %v1931, %v1930
      %v1972 = vpack.c.b16 %v1933, %v1932
      %v1973 = vpack.c.b16 %v1935, %v1934
      %v1974 = vpack.c.b16 %v1937, %v1936
      %v1975 = vpack.c.b16 %v1939, %v1938
      %v1976 = vpack.c.b16 %v1941, %v1940
      %v1977 = vpack.c.b16 %v1943, %v1942
      %v1978 = vpack.c.b16 %v1945, %v1944
      %v1979 = vpack.c.b16 %v1947, %v1946
      %v1980 = vpack.c.b16 %v1949, %v1948
      %v1981 = vpack.c.b16 %v1951, %v1950
      %v1982 = vpack.c.b16 %v1953, %v1952
      %v1983 = vpack.c.b16 %v1955, %v1954
      %v1984 = vpack.c.b16 %v1957, %v1956
      %v1985 = vpack.c.b16 %v1959, %v1958
      %v1986 = vpack.c.b16 %v1961, %v1960
      %v1987 = vpack.c.b16 %v1963, %v1962
      %2012 = vmatpush.bf16.msra.mxu0 %v1971
      %2013 = vmatpush.bf16.msra.mxu0 %v1970
      %2014 = vmatpush.bf16.msra.mxu0 %v1969
      %2015 = vmatpush.bf16.msra.mxu0 %v1968
      %2016 = vmatpush.bf16.msra.mxu0 %v1967
      %2017 = vmatpush.bf16.msra.mxu0 %v1966
      %2018 = vmatpush.bf16.msra.mxu0 %v1965
      %2019 = vmatpush.bf16.msra.mxu0 %v1964
      %2020 = vmatmul.bf16.gmra.mxu0 %v1014
      %v2021 = vpop.f32.mrf.mxu0
      %v2022 = vadd.f32 %v1829, %v2021
      %v2023 = vpop.f32.mrf.mxu0
      %v2024 = vadd.f32 %v1831, %v2023
      %2025 = vmatmul.bf16.gmra.mxu0 %v1015
      %v2026 = vpop.f32.mrf.mxu0
      %v2027 = vadd.f32 %v1834, %v2026
      %v2028 = vpop.f32.mrf.mxu0
      %v2029 = vadd.f32 %v1836, %v2028
      %2030 = vmatmul.bf16.gmra.mxu0 %v1016
      %v2031 = vpop.f32.mrf.mxu0
      %v2032 = vadd.f32 %v1839, %v2031
      %v2033 = vpop.f32.mrf.mxu0
      %v2034 = vadd.f32 %v1841, %v2033
      %2035 = vmatmul.bf16.gmra.mxu0 %v1017
      %v2036 = vpop.f32.mrf.mxu0
      %v2037 = vadd.f32 %v1844, %v2036
      %v2038 = vpop.f32.mrf.mxu0
      %v2039 = vadd.f32 %v1846, %v2038
      %2040 = vmatmul.bf16.gmra.mxu0 %v1018
      %v2041 = vpop.f32.mrf.mxu0
      %v2042 = vadd.f32 %v1849, %v2041
      %v2043 = vpop.f32.mrf.mxu0
      %v2044 = vadd.f32 %v1851, %v2043
      %2045 = vmatmul.bf16.gmra.mxu0 %v1019
      %v2046 = vpop.f32.mrf.mxu0
      %v2047 = vadd.f32 %v1854, %v2046
      %v2048 = vpop.f32.mrf.mxu0
      %v2049 = vadd.f32 %v1856, %v2048
      %2050 = vmatmul.bf16.gmra.mxu0 %v1020
      %v2051 = vpop.f32.mrf.mxu0
      %v2052 = vadd.f32 %v1859, %v2051
      %v2053 = vpop.f32.mrf.mxu0
      %v2054 = vadd.f32 %v1861, %v2053
      %2055 = vmatmul.bf16.gmra.mxu0 %v1021
      %v2056 = vpop.f32.mrf.mxu0
      %v2057 = vadd.f32 %v1864, %v2056
      %v2058 = vpop.f32.mrf.mxu0
      %v2059 = vadd.f32 %v1866, %v2058
      %2060 = vdwg.mxu0
      %2061 = vmatpush.bf16.msra.mxu0 %v1979
      %2062 = vmatpush.bf16.msra.mxu0 %v1978
      %2063 = vmatpush.bf16.msra.mxu0 %v1977
      %2064 = vmatpush.bf16.msra.mxu0 %v1976
      %2065 = vmatpush.bf16.msra.mxu0 %v1975
      %2066 = vmatpush.bf16.msra.mxu0 %v1974
      %2067 = vmatpush.bf16.msra.mxu0 %v1973
      %2068 = vmatpush.bf16.msra.mxu0 %v1972
      %2069 = vmatmul.bf16.gmra.mxu0 %v1066
      %v2070 = vpop.f32.mrf.mxu0
      %v2071 = vadd.f32 %v2022, %v2070
      %v2072 = vpop.f32.mrf.mxu0
      %v2073 = vadd.f32 %v2024, %v2072
      %2074 = vmatmul.bf16.gmra.mxu0 %v1078
      %v2075 = vpop.f32.mrf.mxu0
      %v2076 = vadd.f32 %v2027, %v2075
      %v2077 = vpop.f32.mrf.mxu0
      %v2078 = vadd.f32 %v2029, %v2077
      %2079 = vmatmul.bf16.gmra.mxu0 %v1090
      %v2080 = vpop.f32.mrf.mxu0
      %v2081 = vadd.f32 %v2032, %v2080
      %v2082 = vpop.f32.mrf.mxu0
      %v2083 = vadd.f32 %v2034, %v2082
      %2084 = vmatmul.bf16.gmra.mxu0 %v1102
      %v2085 = vpop.f32.mrf.mxu0
      %v2086 = vadd.f32 %v2037, %v2085
      %v2087 = vpop.f32.mrf.mxu0
      %v2088 = vadd.f32 %v2039, %v2087
      %2089 = vmatmul.bf16.gmra.mxu0 %v1114
      %v2090 = vpop.f32.mrf.mxu0
      %v2091 = vadd.f32 %v2042, %v2090
      %v2092 = vpop.f32.mrf.mxu0
      %v2093 = vadd.f32 %v2044, %v2092
      %2094 = vmatmul.bf16.gmra.mxu0 %v1126
      %v2095 = vpop.f32.mrf.mxu0
      %v2096 = vadd.f32 %v2047, %v2095
      %v2097 = vpop.f32.mrf.mxu0
      %v2098 = vadd.f32 %v2049, %v2097
      %2099 = vmatmul.bf16.gmra.mxu0 %v1138
      %v2100 = vpop.f32.mrf.mxu0
      %v2101 = vadd.f32 %v2052, %v2100
      %v2102 = vpop.f32.mrf.mxu0
      %v2103 = vadd.f32 %v2054, %v2102
      %2104 = vmatmul.bf16.gmra.mxu0 %v1150
      %v2105 = vpop.f32.mrf.mxu0
      %v2106 = vadd.f32 %v2057, %v2105
      %v2107 = vpop.f32.mrf.mxu0
      %v2108 = vadd.f32 %v2059, %v2107
      %2109 = vdwg.mxu0
      %2110 = vmatpush.bf16.msra.mxu0 %v1987
      %2111 = vmatpush.bf16.msra.mxu0 %v1986
      %2112 = vmatpush.bf16.msra.mxu0 %v1985
      %2113 = vmatpush.bf16.msra.mxu0 %v1984
      %2114 = vmatpush.bf16.msra.mxu0 %v1983
      %2115 = vmatpush.bf16.msra.mxu0 %v1982
      %2116 = vmatpush.bf16.msra.mxu0 %v1981
      %2117 = vmatpush.bf16.msra.mxu0 %v1980
      %2118 = vmatmul.bf16.gmra.mxu0 %v1186
      %v2119 = vpop.f32.mrf.mxu0
      %v2120 = vadd.f32 %v2071, %v2119
      %v2121 = vpop.f32.mrf.mxu0
      %v2122 = vadd.f32 %v2073, %v2121
      %2123 = vmatmul.bf16.gmra.mxu0 %v1189
      %v2124 = vpop.f32.mrf.mxu0
      %v2125 = vadd.f32 %v2076, %v2124
      %v2126 = vpop.f32.mrf.mxu0
      %v2127 = vadd.f32 %v2078, %v2126
      %2128 = vmatmul.bf16.gmra.mxu0 %v1192
      %v2129 = vpop.f32.mrf.mxu0
      %v2130 = vadd.f32 %v2081, %v2129
      %v2131 = vpop.f32.mrf.mxu0
      %v2132 = vadd.f32 %v2083, %v2131
      %2133 = vmatmul.bf16.gmra.mxu0 %v1195
      %v2134 = vpop.f32.mrf.mxu0
      %v2135 = vadd.f32 %v2086, %v2134
      %v2136 = vpop.f32.mrf.mxu0
      %v2137 = vadd.f32 %v2088, %v2136
      %2138 = vmatmul.bf16.gmra.mxu0 %v1198
      %v2139 = vpop.f32.mrf.mxu0
      %v2140 = vadd.f32 %v2091, %v2139
      %v2141 = vpop.f32.mrf.mxu0
      %v2142 = vadd.f32 %v2093, %v2141
      %2143 = vmatmul.bf16.gmra.mxu0 %v1201
      %v2144 = vpop.f32.mrf.mxu0
      %v2145 = vadd.f32 %v2096, %v2144
      %v2146 = vpop.f32.mrf.mxu0
      %v2147 = vadd.f32 %v2098, %v2146
      %2148 = vmatmul.bf16.gmra.mxu0 %v1204
      %v2149 = vpop.f32.mrf.mxu0
      %v2150 = vadd.f32 %v2101, %v2149
      %v2151 = vpop.f32.mrf.mxu0
      %v2152 = vadd.f32 %v2103, %v2151
      %2153 = vmatmul.bf16.gmra.mxu0 %v1207
      %v2154 = vpop.f32.mrf.mxu0
      %v2155 = vadd.f32 %v2106, %v2154
      %v2156 = vpop.f32.mrf.mxu0
      %v2157 = vadd.f32 %v2108, %v2156
      %2158 = vdwg.mxu0
      %s2159 = scalar_lea.vmem [#allocation2], 24
      %v2160 = vld [vmem:[%s2159] sm:$0xf]
      %v2161 = vld [vmem:[%s2159 + $0x4] sm:$0xf]
      %v2162 = vld [vmem:[%s2159 + $0xc] sm:$0xf]
      %v2163 = vld [vmem:[%s2159 + $0x10] sm:$0xf]
      %v2164 = vld [vmem:[%s2159 + $0x18] sm:$0xf]
      %v2165 = vld [vmem:[%s2159 + $0x1c] sm:$0xf]
      %v2166 = vld [vmem:[%s2159 + $0x24] sm:$0xf]
      %v2167 = vld [vmem:[%s2159 + $0x28] sm:$0xf]
      %v2168 = vld [vmem:[%s2159 + $0x30] sm:$0xf]
      %v2169 = vld [vmem:[%s2159 + $0x34] sm:$0xf]
      %v2170 = vld [vmem:[%s2159 + $0x3c] sm:$0xf]
      %v2171 = vld [vmem:[%s2159 + $0x40] sm:$0xf]
      %v2172 = vld [vmem:[%s2159 + $0x48] sm:$0xf]
      %v2173 = vld [vmem:[%s2159 + $0x4c] sm:$0xf]
      %v2174 = vld [vmem:[%s2159 + $0x54] sm:$0xf]
      %v2175 = vld [vmem:[%s2159 + $0x58] sm:$0xf]
      %v2176 = vld [vmem:[%s2159 + $0x8] sm:$0x1]
      %v2177 = vld [vmem:[%s2159 + $0x14] sm:$0x1]
      %v2178 = vld [vmem:[%s2159 + $0x20] sm:$0x1]
      %v2179 = vld [vmem:[%s2159 + $0x2c] sm:$0x1]
      %v2180 = vld [vmem:[%s2159 + $0x38] sm:$0x1]
      %v2181 = vld [vmem:[%s2159 + $0x44] sm:$0x1]
      %v2182 = vld [vmem:[%s2159 + $0x50] sm:$0x1]
      %v2183 = vld [vmem:[%s2159 + $0x5c] sm:$0x1]
      %v2184 = vld [vmem:[%s2159] sm:$0xe]
      %v2185 = vld [vmem:[%s2159 + $0xc] sm:$0xe]
      %v2186 = vld [vmem:[%s2159 + $0x18] sm:$0xe]
      %v2187 = vld [vmem:[%s2159 + $0x24] sm:$0xe]
      %v2188 = vld [vmem:[%s2159 + $0x30] sm:$0xe]
      %v2189 = vld [vmem:[%s2159 + $0x3c] sm:$0xe]
      %v2190 = vld [vmem:[%s2159 + $0x48] sm:$0xe]
      %v2191 = vld [vmem:[%s2159 + $0x54] sm:$0xe]
      %v2208 = vunpack.c.l.b16 %v2160
      %v2209 = vunpack.c.l.b16 %v2161
      %v2210 = vunpack.c.l.b16 %v2162
      %v2211 = vunpack.c.l.b16 %v2163
      %v2212 = vunpack.c.l.b16 %v2164
      %v2213 = vunpack.c.l.b16 %v2165
      %v2214 = vunpack.c.l.b16 %v2166
      %v2215 = vunpack.c.l.b16 %v2167
      %v2216 = vunpack.c.l.b16 %v2168
      %v2217 = vunpack.c.l.b16 %v2169
      %v2218 = vunpack.c.l.b16 %v2170
      %v2219 = vunpack.c.l.b16 %v2171
      %v2220 = vunpack.c.l.b16 %v2172
      %v2221 = vunpack.c.l.b16 %v2173
      %v2222 = vunpack.c.l.b16 %v2174
      %v2223 = vunpack.c.l.b16 %v2175
      %v2224 = vpack.c.b16 %v2209, %v2208
      %v2225 = vpack.c.b16 %v2211, %v2210
      %v2226 = vpack.c.b16 %v2213, %v2212
      %v2227 = vpack.c.b16 %v2215, %v2214
      %v2228 = vpack.c.b16 %v2217, %v2216
      %v2229 = vpack.c.b16 %v2219, %v2218
      %v2230 = vpack.c.b16 %v2221, %v2220
      %v2231 = vpack.c.b16 %v2223, %v2222
      %v2248 = vunpack.c.l.b16 %v2176
      %v2249 = vunpack.c.l.b16 %v2177
      %v2250 = vunpack.c.l.b16 %v2178
      %v2251 = vunpack.c.l.b16 %v2179
      %v2252 = vunpack.c.l.b16 %v2180
      %v2253 = vunpack.c.l.b16 %v2181
      %v2254 = vunpack.c.l.b16 %v2182
      %v2255 = vunpack.c.l.b16 %v2183
      %v2256 = vpack.c.b16 %v2248, %v2248
      %v2257 = vpack.c.b16 %v2249, %v2249
      %v2258 = vpack.c.b16 %v2250, %v2250
      %v2259 = vpack.c.b16 %v2251, %v2251
      %v2260 = vpack.c.b16 %v2252, %v2252
      %v2261 = vpack.c.b16 %v2253, %v2253
      %v2262 = vpack.c.b16 %v2254, %v2254
      %v2263 = vpack.c.b16 %v2255, %v2255
      %v2265 = vshrl.u32 %v2224, 16
      %v2267 = vshll.u32 %v2224, 16
      %v2269 = vrot.slane %v2267, 1
      %v2270 = vor.u32 %v2265, %v2269
      %v2272 = vshll.u32 %v2256, 16
      %v2274 = vrot.slane %v2272, 1
      %v2275 = vsel %vm1054, %v2270, %v2274
      %v2277 = vshrl.u32 %v2225, 16
      %v2279 = vshll.u32 %v2225, 16
      %v2281 = vrot.slane %v2279, 1
      %v2282 = vor.u32 %v2277, %v2281
      %v2284 = vshll.u32 %v2257, 16
      %v2286 = vrot.slane %v2284, 1
      %v2287 = vsel %vm1054, %v2282, %v2286
      %v2289 = vshrl.u32 %v2226, 16
      %v2291 = vshll.u32 %v2226, 16
      %v2293 = vrot.slane %v2291, 1
      %v2294 = vor.u32 %v2289, %v2293
      %v2296 = vshll.u32 %v2258, 16
      %v2298 = vrot.slane %v2296, 1
      %v2299 = vsel %vm1054, %v2294, %v2298
      %v2301 = vshrl.u32 %v2227, 16
      %v2303 = vshll.u32 %v2227, 16
      %v2305 = vrot.slane %v2303, 1
      %v2306 = vor.u32 %v2301, %v2305
      %v2308 = vshll.u32 %v2259, 16
      %v2310 = vrot.slane %v2308, 1
      %v2311 = vsel %vm1054, %v2306, %v2310
      %v2313 = vshrl.u32 %v2228, 16
      %v2315 = vshll.u32 %v2228, 16
      %v2317 = vrot.slane %v2315, 1
      %v2318 = vor.u32 %v2313, %v2317
      %v2320 = vshll.u32 %v2260, 16
      %v2322 = vrot.slane %v2320, 1
      %v2323 = vsel %vm1054, %v2318, %v2322
      %v2325 = vshrl.u32 %v2229, 16
      %v2327 = vshll.u32 %v2229, 16
      %v2329 = vrot.slane %v2327, 1
      %v2330 = vor.u32 %v2325, %v2329
      %v2332 = vshll.u32 %v2261, 16
      %v2334 = vrot.slane %v2332, 1
      %v2335 = vsel %vm1054, %v2330, %v2334
      %v2337 = vshrl.u32 %v2230, 16
      %v2339 = vshll.u32 %v2230, 16
      %v2341 = vrot.slane %v2339, 1
      %v2342 = vor.u32 %v2337, %v2341
      %v2344 = vshll.u32 %v2262, 16
      %v2346 = vrot.slane %v2344, 1
      %v2347 = vsel %vm1054, %v2342, %v2346
      %v2349 = vshrl.u32 %v2231, 16
      %v2351 = vshll.u32 %v2231, 16
      %v2353 = vrot.slane %v2351, 1
      %v2354 = vor.u32 %v2349, %v2353
      %v2356 = vshll.u32 %v2263, 16
      %v2358 = vrot.slane %v2356, 1
      %v2359 = vsel %vm1054, %v2354, %v2358
      %v2376 = vunpack.c.l.b16 %v2184
      %v2377 = vunpack.c.l.b16 %v2185
      %v2378 = vunpack.c.l.b16 %v2186
      %v2379 = vunpack.c.l.b16 %v2187
      %v2380 = vunpack.c.l.b16 %v2188
      %v2381 = vunpack.c.l.b16 %v2189
      %v2382 = vunpack.c.l.b16 %v2190
      %v2383 = vunpack.c.l.b16 %v2191
      %v2384 = vpack.c.b16 %v2209, %v2376
      %v2385 = vpack.c.b16 %v2211, %v2377
      %v2386 = vpack.c.b16 %v2213, %v2378
      %v2387 = vpack.c.b16 %v2215, %v2379
      %v2388 = vpack.c.b16 %v2217, %v2380
      %v2389 = vpack.c.b16 %v2219, %v2381
      %v2390 = vpack.c.b16 %v2221, %v2382
      %v2391 = vpack.c.b16 %v2223, %v2383
      %v2392 = vrot.slane %v2384, 1
      %v2393 = vrot.slane %v2256, 1
      %v2394 = vsel %vm1183, %v2392, %v2393
      %v2395 = vrot.slane %v2385, 1
      %v2396 = vrot.slane %v2257, 1
      %v2397 = vsel %vm1183, %v2395, %v2396
      %v2398 = vrot.slane %v2386, 1
      %v2399 = vrot.slane %v2258, 1
      %v2400 = vsel %vm1183, %v2398, %v2399
      %v2401 = vrot.slane %v2387, 1
      %v2402 = vrot.slane %v2259, 1
      %v2403 = vsel %vm1183, %v2401, %v2402
      %v2404 = vrot.slane %v2388, 1
      %v2405 = vrot.slane %v2260, 1
      %v2406 = vsel %vm1183, %v2404, %v2405
      %v2407 = vrot.slane %v2389, 1
      %v2408 = vrot.slane %v2261, 1
      %v2409 = vsel %vm1183, %v2407, %v2408
      %v2410 = vrot.slane %v2390, 1
      %v2411 = vrot.slane %v2262, 1
      %v2412 = vsel %vm1183, %v2410, %v2411
      %v2413 = vrot.slane %v2391, 1
      %v2414 = vrot.slane %v2263, 1
      %v2415 = vsel %vm1183, %v2413, %v2414
      %s2424 = scalar_lea.vmem %s2, 384
      %v2425 = vld [vmem:[%s2424] sm:$0xf]
      %v2426 = vld [vmem:[%s2424 + $0x4] sm:$0xf]
      %v2427 = vld [vmem:[%s2424 + $0x8] sm:$0xf]
      %v2428 = vld [vmem:[%s2424 + $0xc] sm:$0xf]
      %v2429 = vld [vmem:[%s2424 + $0x10] sm:$0xf]
      %v2430 = vld [vmem:[%s2424 + $0x14] sm:$0xf]
      %v2431 = vld [vmem:[%s2424 + $0x18] sm:$0xf]
      %v2432 = vld [vmem:[%s2424 + $0x1c] sm:$0xf]
      %v2433 = vld [vmem:[%s2424 + $0x20] sm:$0xf]
      %v2434 = vld [vmem:[%s2424 + $0x24] sm:$0xf]
      %v2435 = vld [vmem:[%s2424 + $0x28] sm:$0xf]
      %v2436 = vld [vmem:[%s2424 + $0x2c] sm:$0xf]
      %v2437 = vld [vmem:[%s2424 + $0x30] sm:$0xf]
      %v2438 = vld [vmem:[%s2424 + $0x34] sm:$0xf]
      %v2439 = vld [vmem:[%s2424 + $0x38] sm:$0xf]
      %v2440 = vld [vmem:[%s2424 + $0x3c] sm:$0xf]
      %v2441 = vld [vmem:[%s2424 + $0x40] sm:$0xf]
      %v2442 = vld [vmem:[%s2424 + $0x44] sm:$0xf]
      %v2443 = vld [vmem:[%s2424 + $0x48] sm:$0xf]
      %v2444 = vld [vmem:[%s2424 + $0x4c] sm:$0xf]
      %v2445 = vld [vmem:[%s2424 + $0x50] sm:$0xf]
      %v2446 = vld [vmem:[%s2424 + $0x54] sm:$0xf]
      %v2447 = vld [vmem:[%s2424 + $0x58] sm:$0xf]
      %v2448 = vld [vmem:[%s2424 + $0x5c] sm:$0xf]
      %v2449 = vld [vmem:[%s2424 + $0x60] sm:$0xf]
      %v2450 = vld [vmem:[%s2424 + $0x64] sm:$0xf]
      %v2451 = vld [vmem:[%s2424 + $0x68] sm:$0xf]
      %v2452 = vld [vmem:[%s2424 + $0x6c] sm:$0xf]
      %v2453 = vld [vmem:[%s2424 + $0x70] sm:$0xf]
      %v2454 = vld [vmem:[%s2424 + $0x74] sm:$0xf]
      %v2455 = vld [vmem:[%s2424 + $0x78] sm:$0xf]
      %v2456 = vld [vmem:[%s2424 + $0x7c] sm:$0xf]
      %v2457 = vld [vmem:[%s2424 + $0x80] sm:$0xf]
      %v2458 = vld [vmem:[%s2424 + $0x84] sm:$0xf]
      %v2459 = vld [vmem:[%s2424 + $0x88] sm:$0xf]
      %v2460 = vld [vmem:[%s2424 + $0x8c] sm:$0xf]
      %v2461 = vld [vmem:[%s2424 + $0x90] sm:$0xf]
      %v2462 = vld [vmem:[%s2424 + $0x94] sm:$0xf]
      %v2463 = vld [vmem:[%s2424 + $0x98] sm:$0xf]
      %v2464 = vld [vmem:[%s2424 + $0x9c] sm:$0xf]
      %v2465 = vld [vmem:[%s2424 + $0xa0] sm:$0xf]
      %v2466 = vld [vmem:[%s2424 + $0xa4] sm:$0xf]
      %v2467 = vld [vmem:[%s2424 + $0xa8] sm:$0xf]
      %v2468 = vld [vmem:[%s2424 + $0xac] sm:$0xf]
      %v2469 = vld [vmem:[%s2424 + $0xb0] sm:$0xf]
      %v2470 = vld [vmem:[%s2424 + $0xb4] sm:$0xf]
      %v2471 = vld [vmem:[%s2424 + $0xb8] sm:$0xf]
      %v2472 = vld [vmem:[%s2424 + $0xbc] sm:$0xf]
      %v2521 = vunpack.c.l.b16 %v2425
      %v2522 = vunpack.c.l.b16 %v2426
      %v2523 = vunpack.c.l.b16 %v2427
      %v2524 = vunpack.c.l.b16 %v2428
      %v2525 = vunpack.c.l.b16 %v2429
      %v2526 = vunpack.c.l.b16 %v2430
      %v2527 = vunpack.c.l.b16 %v2431
      %v2528 = vunpack.c.l.b16 %v2432
      %v2529 = vunpack.c.l.b16 %v2433
      %v2530 = vunpack.c.l.b16 %v2434
      %v2531 = vunpack.c.l.b16 %v2435
      %v2532 = vunpack.c.l.b16 %v2436
      %v2533 = vunpack.c.l.b16 %v2437
      %v2534 = vunpack.c.l.b16 %v2438
      %v2535 = vunpack.c.l.b16 %v2439
      %v2536 = vunpack.c.l.b16 %v2440
      %v2537 = vunpack.c.l.b16 %v2441
      %v2538 = vunpack.c.l.b16 %v2442
      %v2539 = vunpack.c.l.b16 %v2443
      %v2540 = vunpack.c.l.b16 %v2444
      %v2541 = vunpack.c.l.b16 %v2445
      %v2542 = vunpack.c.l.b16 %v2446
      %v2543 = vunpack.c.l.b16 %v2447
      %v2544 = vunpack.c.l.b16 %v2448
      %v2545 = vunpack.c.l.b16 %v2449
      %v2546 = vunpack.c.l.b16 %v2450
      %v2547 = vunpack.c.l.b16 %v2451
      %v2548 = vunpack.c.l.b16 %v2452
      %v2549 = vunpack.c.l.b16 %v2453
      %v2550 = vunpack.c.l.b16 %v2454
      %v2551 = vunpack.c.l.b16 %v2455
      %v2552 = vunpack.c.l.b16 %v2456
      %v2553 = vunpack.c.l.b16 %v2457
      %v2554 = vunpack.c.l.b16 %v2458
      %v2555 = vunpack.c.l.b16 %v2459
      %v2556 = vunpack.c.l.b16 %v2460
      %v2557 = vunpack.c.l.b16 %v2461
      %v2558 = vunpack.c.l.b16 %v2462
      %v2559 = vunpack.c.l.b16 %v2463
      %v2560 = vunpack.c.l.b16 %v2464
      %v2561 = vunpack.c.l.b16 %v2465
      %v2562 = vunpack.c.l.b16 %v2466
      %v2563 = vunpack.c.l.b16 %v2467
      %v2564 = vunpack.c.l.b16 %v2468
      %v2565 = vunpack.c.l.b16 %v2469
      %v2566 = vunpack.c.l.b16 %v2470
      %v2567 = vunpack.c.l.b16 %v2471
      %v2568 = vunpack.c.l.b16 %v2472
      %v2569 = vpack.c.b16 %v2522, %v2521
      %v2570 = vpack.c.b16 %v2524, %v2523
      %v2571 = vpack.c.b16 %v2526, %v2525
      %v2572 = vpack.c.b16 %v2528, %v2527
      %v2573 = vpack.c.b16 %v2530, %v2529
      %v2574 = vpack.c.b16 %v2532, %v2531
      %v2575 = vpack.c.b16 %v2534, %v2533
      %v2576 = vpack.c.b16 %v2536, %v2535
      %v2577 = vpack.c.b16 %v2538, %v2537
      %v2578 = vpack.c.b16 %v2540, %v2539
      %v2579 = vpack.c.b16 %v2542, %v2541
      %v2580 = vpack.c.b16 %v2544, %v2543
      %v2581 = vpack.c.b16 %v2546, %v2545
      %v2582 = vpack.c.b16 %v2548, %v2547
      %v2583 = vpack.c.b16 %v2550, %v2549
      %v2584 = vpack.c.b16 %v2552, %v2551
      %v2585 = vpack.c.b16 %v2554, %v2553
      %v2586 = vpack.c.b16 %v2556, %v2555
      %v2587 = vpack.c.b16 %v2558, %v2557
      %v2588 = vpack.c.b16 %v2560, %v2559
      %v2589 = vpack.c.b16 %v2562, %v2561
      %v2590 = vpack.c.b16 %v2564, %v2563
      %v2591 = vpack.c.b16 %v2566, %v2565
      %v2592 = vpack.c.b16 %v2568, %v2567
      %2617 = vmatpush.bf16.msra.mxu0 %v2576
      %2618 = vmatpush.bf16.msra.mxu0 %v2575
      %2619 = vmatpush.bf16.msra.mxu0 %v2574
      %2620 = vmatpush.bf16.msra.mxu0 %v2573
      %2621 = vmatpush.bf16.msra.mxu0 %v2572
      %2622 = vmatpush.bf16.msra.mxu0 %v2571
      %2623 = vmatpush.bf16.msra.mxu0 %v2570
      %2624 = vmatpush.bf16.msra.mxu0 %v2569
      %2625 = vmatmul.bf16.gmra.mxu0 %v2224
      %v2626 = vpop.f32.mrf.mxu0
      %v2627 = vadd.f32 0.0, %v2626
      %v2628 = vpop.f32.mrf.mxu0
      %v2629 = vadd.f32 0.0, %v2628
      %2630 = vmatmul.bf16.gmra.mxu0 %v2225
      %v2631 = vpop.f32.mrf.mxu0
      %v2632 = vadd.f32 0.0, %v2631
      %v2633 = vpop.f32.mrf.mxu0
      %v2634 = vadd.f32 0.0, %v2633
      %2635 = vmatmul.bf16.gmra.mxu0 %v2226
      %v2636 = vpop.f32.mrf.mxu0
      %v2637 = vadd.f32 0.0, %v2636
      %v2638 = vpop.f32.mrf.mxu0
      %v2639 = vadd.f32 0.0, %v2638
      %2640 = vmatmul.bf16.gmra.mxu0 %v2227
      %v2641 = vpop.f32.mrf.mxu0
      %v2642 = vadd.f32 0.0, %v2641
      %v2643 = vpop.f32.mrf.mxu0
      %v2644 = vadd.f32 0.0, %v2643
      %2645 = vmatmul.bf16.gmra.mxu0 %v2228
      %v2646 = vpop.f32.mrf.mxu0
      %v2647 = vadd.f32 0.0, %v2646
      %v2648 = vpop.f32.mrf.mxu0
      %v2649 = vadd.f32 0.0, %v2648
      %2650 = vmatmul.bf16.gmra.mxu0 %v2229
      %v2651 = vpop.f32.mrf.mxu0
      %v2652 = vadd.f32 0.0, %v2651
      %v2653 = vpop.f32.mrf.mxu0
      %v2654 = vadd.f32 0.0, %v2653
      %2655 = vmatmul.bf16.gmra.mxu0 %v2230
      %v2656 = vpop.f32.mrf.mxu0
      %v2657 = vadd.f32 0.0, %v2656
      %v2658 = vpop.f32.mrf.mxu0
      %v2659 = vadd.f32 0.0, %v2658
      %2660 = vmatmul.bf16.gmra.mxu0 %v2231
      %v2661 = vpop.f32.mrf.mxu0
      %v2662 = vadd.f32 0.0, %v2661
      %v2663 = vpop.f32.mrf.mxu0
      %v2664 = vadd.f32 0.0, %v2663
      %2665 = vdwg.mxu0
      %2666 = vmatpush.bf16.msra.mxu0 %v2584
      %2667 = vmatpush.bf16.msra.mxu0 %v2583
      %2668 = vmatpush.bf16.msra.mxu0 %v2582
      %2669 = vmatpush.bf16.msra.mxu0 %v2581
      %2670 = vmatpush.bf16.msra.mxu0 %v2580
      %2671 = vmatpush.bf16.msra.mxu0 %v2579
      %2672 = vmatpush.bf16.msra.mxu0 %v2578
      %2673 = vmatpush.bf16.msra.mxu0 %v2577
      %2674 = vmatmul.bf16.gmra.mxu0 %v2275
      %v2675 = vpop.f32.mrf.mxu0
      %v2676 = vadd.f32 %v2627, %v2675
      %v2677 = vpop.f32.mrf.mxu0
      %v2678 = vadd.f32 %v2629, %v2677
      %2679 = vmatmul.bf16.gmra.mxu0 %v2287
      %v2680 = vpop.f32.mrf.mxu0
      %v2681 = vadd.f32 %v2632, %v2680
      %v2682 = vpop.f32.mrf.mxu0
      %v2683 = vadd.f32 %v2634, %v2682
      %2684 = vmatmul.bf16.gmra.mxu0 %v2299
      %v2685 = vpop.f32.mrf.mxu0
      %v2686 = vadd.f32 %v2637, %v2685
      %v2687 = vpop.f32.mrf.mxu0
      %v2688 = vadd.f32 %v2639, %v2687
      %2689 = vmatmul.bf16.gmra.mxu0 %v2311
      %v2690 = vpop.f32.mrf.mxu0
      %v2691 = vadd.f32 %v2642, %v2690
      %v2692 = vpop.f32.mrf.mxu0
      %v2693 = vadd.f32 %v2644, %v2692
      %2694 = vmatmul.bf16.gmra.mxu0 %v2323
      %v2695 = vpop.f32.mrf.mxu0
      %v2696 = vadd.f32 %v2647, %v2695
      %v2697 = vpop.f32.mrf.mxu0
      %v2698 = vadd.f32 %v2649, %v2697
      %2699 = vmatmul.bf16.gmra.mxu0 %v2335
      %v2700 = vpop.f32.mrf.mxu0
      %v2701 = vadd.f32 %v2652, %v2700
      %v2702 = vpop.f32.mrf.mxu0
      %v2703 = vadd.f32 %v2654, %v2702
      %2704 = vmatmul.bf16.gmra.mxu0 %v2347
      %v2705 = vpop.f32.mrf.mxu0
      %v2706 = vadd.f32 %v2657, %v2705
      %v2707 = vpop.f32.mrf.mxu0
      %v2708 = vadd.f32 %v2659, %v2707
      %2709 = vmatmul.bf16.gmra.mxu0 %v2359
      %v2710 = vpop.f32.mrf.mxu0
      %v2711 = vadd.f32 %v2662, %v2710
      %v2712 = vpop.f32.mrf.mxu0
      %v2713 = vadd.f32 %v2664, %v2712
      %2714 = vdwg.mxu0
      %2715 = vmatpush.bf16.msra.mxu0 %v2592
      %2716 = vmatpush.bf16.msra.mxu0 %v2591
      %2717 = vmatpush.bf16.msra.mxu0 %v2590
      %2718 = vmatpush.bf16.msra.mxu0 %v2589
      %2719 = vmatpush.bf16.msra.mxu0 %v2588
      %2720 = vmatpush.bf16.msra.mxu0 %v2587
      %2721 = vmatpush.bf16.msra.mxu0 %v2586
      %2722 = vmatpush.bf16.msra.mxu0 %v2585
      %2723 = vmatmul.bf16.gmra.mxu0 %v2394
      %v2724 = vpop.f32.mrf.mxu0
      %v2725 = vadd.f32 %v2676, %v2724
      %v2726 = vpop.f32.mrf.mxu0
      %v2727 = vadd.f32 %v2678, %v2726
      %2728 = vmatmul.bf16.gmra.mxu0 %v2397
      %v2729 = vpop.f32.mrf.mxu0
      %v2730 = vadd.f32 %v2681, %v2729
      %v2731 = vpop.f32.mrf.mxu0
      %v2732 = vadd.f32 %v2683, %v2731
      %2733 = vmatmul.bf16.gmra.mxu0 %v2400
      %v2734 = vpop.f32.mrf.mxu0
      %v2735 = vadd.f32 %v2686, %v2734
      %v2736 = vpop.f32.mrf.mxu0
      %v2737 = vadd.f32 %v2688, %v2736
      %2738 = vmatmul.bf16.gmra.mxu0 %v2403
      %v2739 = vpop.f32.mrf.mxu0
      %v2740 = vadd.f32 %v2691, %v2739
      %v2741 = vpop.f32.mrf.mxu0
      %v2742 = vadd.f32 %v2693, %v2741
      %2743 = vmatmul.bf16.gmra.mxu0 %v2406
      %v2744 = vpop.f32.mrf.mxu0
      %v2745 = vadd.f32 %v2696, %v2744
      %v2746 = vpop.f32.mrf.mxu0
      %v2747 = vadd.f32 %v2698, %v2746
      %2748 = vmatmul.bf16.gmra.mxu0 %v2409
      %v2749 = vpop.f32.mrf.mxu0
      %v2750 = vadd.f32 %v2701, %v2749
      %v2751 = vpop.f32.mrf.mxu0
      %v2752 = vadd.f32 %v2703, %v2751
      %2753 = vmatmul.bf16.gmra.mxu0 %v2412
      %v2754 = vpop.f32.mrf.mxu0
      %v2755 = vadd.f32 %v2706, %v2754
      %v2756 = vpop.f32.mrf.mxu0
      %v2757 = vadd.f32 %v2708, %v2756
      %2758 = vmatmul.bf16.gmra.mxu0 %v2415
      %v2759 = vpop.f32.mrf.mxu0
      %v2760 = vadd.f32 %v2711, %v2759
      %v2761 = vpop.f32.mrf.mxu0
      %v2762 = vadd.f32 %v2713, %v2761
      %2763 = vdwg.mxu0
      %v2764 = vadd.f32 %v2120, %v2725
      %v2765 = vadd.f32 %v2122, %v2727
      %v2766 = vadd.f32 %v2125, %v2730
      %v2767 = vadd.f32 %v2127, %v2732
      %v2768 = vadd.f32 %v2130, %v2735
      %v2769 = vadd.f32 %v2132, %v2737
      %v2770 = vadd.f32 %v2135, %v2740
      %v2771 = vadd.f32 %v2137, %v2742
      %v2772 = vadd.f32 %v2140, %v2745
      %v2773 = vadd.f32 %v2142, %v2747
      %v2774 = vadd.f32 %v2145, %v2750
      %v2775 = vadd.f32 %v2147, %v2752
      %v2776 = vadd.f32 %v2150, %v2755
      %v2777 = vadd.f32 %v2152, %v2757
      %v2778 = vadd.f32 %v2155, %v2760
      %v2779 = vadd.f32 %v2157, %v2762
      %v2780 = vpack.c.bf16 %v2764, %v2764
      %v2781 = vpack.c.bf16 %v2765, %v2765
      %v2782 = vpack.c.bf16 %v2766, %v2766
      %v2783 = vpack.c.bf16 %v2767, %v2767
      %v2784 = vpack.c.bf16 %v2768, %v2768
      %v2785 = vpack.c.bf16 %v2769, %v2769
      %v2786 = vpack.c.bf16 %v2770, %v2770
      %v2787 = vpack.c.bf16 %v2771, %v2771
      %v2788 = vpack.c.bf16 %v2772, %v2772
      %v2789 = vpack.c.bf16 %v2773, %v2773
      %v2790 = vpack.c.bf16 %v2774, %v2774
      %v2791 = vpack.c.bf16 %v2775, %v2775
      %v2792 = vpack.c.bf16 %v2776, %v2776
      %v2793 = vpack.c.bf16 %v2777, %v2777
      %v2794 = vpack.c.bf16 %v2778, %v2778
      %v2795 = vpack.c.bf16 %v2779, %v2779
      %2796 = vst [vmem:[%s281] sm:$0xf] %v2780
      %2797 = vst [vmem:[%s281 + $0x4] sm:$0xf] %v2781
      %2798 = vst [vmem:[%s281 + $0x8] sm:$0xf] %v2782
      %2799 = vst [vmem:[%s281 + $0xc] sm:$0xf] %v2783
      %2800 = vst [vmem:[%s281 + $0x10] sm:$0xf] %v2784
      %2801 = vst [vmem:[%s281 + $0x14] sm:$0xf] %v2785
      %2802 = vst [vmem:[%s281 + $0x18] sm:$0xf] %v2786
      %2803 = vst [vmem:[%s281 + $0x1c] sm:$0xf] %v2787
      %2804 = vst [vmem:[%s281 + $0x20] sm:$0xf] %v2788
      %2805 = vst [vmem:[%s281 + $0x24] sm:$0xf] %v2789
      %2806 = vst [vmem:[%s281 + $0x28] sm:$0xf] %v2790
      %2807 = vst [vmem:[%s281 + $0x2c] sm:$0xf] %v2791
      %2808 = vst [vmem:[%s281 + $0x30] sm:$0xf] %v2792
      %2809 = vst [vmem:[%s281 + $0x34] sm:$0xf] %v2793
      %2810 = vst [vmem:[%s281 + $0x38] sm:$0xf] %v2794
      %2811 = vst [vmem:[%s281 + $0x3c] sm:$0xf] %v2795
      %v2812 = vadd.f32 %v2764, %v2765
      %v2813 = vadd.f32 %v2812, %v2766
      %v2814 = vadd.f32 %v2813, %v2767
      %v2815 = vadd.f32 %v2814, %v2768
      %v2816 = vadd.f32 %v2815, %v2769
      %v2817 = vadd.f32 %v2816, %v2770
      %v2818 = vadd.f32 %v2817, %v2771
      %v2819 = vadd.f32 %v2818, %v2772
      %v2820 = vadd.f32 %v2819, %v2773
      %v2821 = vadd.f32 %v2820, %v2774
      %v2822 = vadd.f32 %v2821, %v2775
      %v2823 = vadd.f32 %v2822, %v2776
      %v2824 = vadd.f32 %v2823, %v2777
      %v2825 = vadd.f32 %v2824, %v2778
      %v2826 = vadd.f32 %v2825, %v2779
      %v2827 = vrot.slane %v2826, 4
      %v2828 = vadd.f32 %v2826, %v2827
      %v2829 = vrot.slane %v2828, 2
      %v2830 = vadd.f32 %v2828, %v2829
      %v2831 = vrot.slane %v2830, 1
      %v2832 = vadd.f32 %v2830, %v2831
      %v2833 = vmul.f32 %v2832, 0.0078125
      %v2834 = vsub.f32 %v2764, %v2833
      %v2835 = vsub.f32 %v2765, %v2833
      %v2836 = vsub.f32 %v2766, %v2833
      %v2837 = vsub.f32 %v2767, %v2833
      %v2838 = vsub.f32 %v2768, %v2833
      %v2839 = vsub.f32 %v2769, %v2833
      %v2840 = vsub.f32 %v2770, %v2833
      %v2841 = vsub.f32 %v2771, %v2833
      %v2842 = vsub.f32 %v2772, %v2833
      %v2843 = vsub.f32 %v2773, %v2833
      %v2844 = vsub.f32 %v2774, %v2833
      %v2845 = vsub.f32 %v2775, %v2833
      %v2846 = vsub.f32 %v2776, %v2833
      %v2847 = vsub.f32 %v2777, %v2833
      %v2848 = vsub.f32 %v2778, %v2833
      %v2849 = vsub.f32 %v2779, %v2833
      %v2850 = vmul.f32 %v2834, %v2834
      %v2851 = vmul.f32 %v2835, %v2835
      %v2852 = vmul.f32 %v2836, %v2836
      %v2853 = vmul.f32 %v2837, %v2837
      %v2854 = vmul.f32 %v2838, %v2838
      %v2855 = vmul.f32 %v2839, %v2839
      %v2856 = vmul.f32 %v2840, %v2840
      %v2857 = vmul.f32 %v2841, %v2841
      %v2858 = vmul.f32 %v2842, %v2842
      %v2859 = vmul.f32 %v2843, %v2843
      %v2860 = vmul.f32 %v2844, %v2844
      %v2861 = vmul.f32 %v2845, %v2845
      %v2862 = vmul.f32 %v2846, %v2846
      %v2863 = vmul.f32 %v2847, %v2847
      %v2864 = vmul.f32 %v2848, %v2848
      %v2865 = vmul.f32 %v2849, %v2849
      %v2866 = vadd.f32 %v2850, %v2851
      %v2867 = vadd.f32 %v2866, %v2852
      %v2868 = vadd.f32 %v2867, %v2853
      %v2869 = vadd.f32 %v2868, %v2854
      %v2870 = vadd.f32 %v2869, %v2855
      %v2871 = vadd.f32 %v2870, %v2856
      %v2872 = vadd.f32 %v2871, %v2857
      %v2873 = vadd.f32 %v2872, %v2858
      %v2874 = vadd.f32 %v2873, %v2859
      %v2875 = vadd.f32 %v2874, %v2860
      %v2876 = vadd.f32 %v2875, %v2861
      %v2877 = vadd.f32 %v2876, %v2862
      %v2878 = vadd.f32 %v2877, %v2863
      %v2879 = vadd.f32 %v2878, %v2864
      %v2880 = vadd.f32 %v2879, %v2865
      %v2881 = vrot.slane %v2880, 4
      %v2882 = vadd.f32 %v2880, %v2881
      %v2883 = vrot.slane %v2882, 2
      %v2884 = vadd.f32 %v2882, %v2883
      %v2885 = vrot.slane %v2884, 1
      %v2886 = vadd.f32 %v2884, %v2885
      %vm2887 = vcmask 1040384
      %v2888 = vsel %vm2887, %v2832, %v2886
      %2889 = vst [vmem:[%s290] sm:$0x3] %v2888
      %s2890 = smul.u32 8, %s23
      %p2891 = scmp.lt.s32.totalorder %s22, 1
      %s2892 = scalar_select %p2891, %s22, 1
      %p2893 = scmp.lt.s32.totalorder %s2890, 15
      %s2894 = scalar_select %p2893, %s2890, 15
      %s2895 = smul.addr %s2894, 2
      %s2896 = smul.addr %s2892, 32
      %s2897 = sadd.s32 %s2895, %s2896
      %s2898 = smul.addr %s2897, 4
      %s2899 = scalar_lea.vmem %s5, %s2898
      %p2900 = scmp.lt.s32.totalorder %s22, 1
      %s2901 = scalar_select %p2900, %s22, 1
      %p2902 = scmp.lt.s32.totalorder %s23, 1
      %s2903 = scalar_select %p2902, %s23, 1
      %s2904 = smul.addr %s2901, 2
      %s2905 = sadd.s32 %s2903, %s2904
      %s2906 = smul.addr %s2905, 2
      %s2907 = scalar_lea.vmem %s6, %s2906
      // Predicated region
      $region129: #{residual_block_forward.4} parent=35 // pred_check
        %p2908 = pneg %p141
      $region130: #{residual_block_forward.4} parent=35 // pred_check_branch
        %2910 = sbr.rel (%p2908) target = $region132
      $region131: #{residual_block_forward.4} parent=35 // pred_region
        %s2911 = smul.u32 8, %s23
      $region132: #{residual_block_forward.4} parent=35 // pred_fallthru
        _
      // Predicated region
      $region133: #{residual_block_forward.4} parent=35 // pred_check
        %p2912 = pneg %p169
      $region134: #{residual_block_forward.4} parent=35 // pred_check_branch
        %2914 = sbr.rel (%p2912) target = $region136
      $region135: #{residual_block_forward.4} parent=35 // pred_region
        _
      $region136: #{residual_block_forward.4} parent=35 // pred_fallthru
        _
    $region36: #{residual_block_forward.4} parent=5 // pred_fallthru
      _
    %p2915 = scmp.le.s32.totalorder 2, %s13
    // Predicated region
    $region137: #{residual_block_forward.4} parent=5 // pred_check
      %p2916 = pneg %p2915
    $region138: #{residual_block_forward.4} parent=5 // pred_check_branch
      %2918 = sbr.rel (%p2916) target = $region140
    $region139: #{residual_block_forward.4} parent=5 // pred_region
      %s2919 = ssub.s32 %s13, 2
      // Predicated region
      $region141: #{residual_block_forward.4} parent=139 // pred_check
        %p2920 = pneg %p147
      $region142: #{residual_block_forward.4} parent=139 // pred_check_branch
        %2922 = sbr.rel (%p2920) target = $region144
      $region143: #{residual_block_forward.4} parent=139 // pred_region
        %s2923 = smul.u32 8, %s25
        %p2924 = scmp.lt.s32.totalorder %s24, 1
        %s2925 = scalar_select %p2924, %s24, 1
        %p2926 = scmp.lt.s32.totalorder %s2923, 15
        %s2927 = scalar_select %p2926, %s2923, 15
        %s2928 = smul.addr %s2927, 2
        %s2929 = smul.addr %s2925, 32
        %s2930 = sadd.s32 %s2928, %s2929
        %s2931 = smul.addr %s2930, 4
        %s2932 = scalar_lea.vmem %s5, %s2931
      $region144: #{residual_block_forward.4} parent=139 // pred_fallthru
        _
      // Predicated region
      $region145: #{residual_block_forward.4} parent=139 // pred_check
        %p2933 = pneg %p175
      $region146: #{residual_block_forward.4} parent=139 // pred_check_branch
        %2935 = sbr.rel (%p2933) target = $region148
      $region147: #{residual_block_forward.4} parent=139 // pred_region
        %p2936 = scmp.lt.s32.totalorder %s24, 1
        %s2937 = scalar_select %p2936, %s24, 1
        %p2938 = scmp.lt.s32.totalorder %s25, 1
        %s2939 = scalar_select %p2938, %s25, 1
        %s2940 = smul.addr %s2937, 2
        %s2941 = sadd.s32 %s2939, %s2940
        %s2942 = smul.addr %s2941, 2
        %s2943 = scalar_lea.vmem %s6, %s2942
      $region148: #{residual_block_forward.4} parent=139 // pred_fallthru
        _
    $region140: #{residual_block_forward.4} parent=5 // pred_fallthru
      _
  $region6: #{residual_block_forward.4} parent=0 // loop_footer
    %s17 = sadd.s32 1, %s13
  $region7: #{residual_block_forward.4} parent=0 // loop_footer_branch
    %12 = sbr.rel target = $region3
  $region8: #{residual_block_forward.4} parent=0 // loop_exit
    _
  %2944 = vsyncmov [#allocation4]
  %s2945 = vpop.sfrf %2944
  %p2946 = scmp.eq.s32.totalorder %s2945, 0
  %p2947 = pneg %p2946
  %2949 = shalt.err (%p2947)
  %s2950 = scalar_lea.sflag [#allocation4], 1
  %2951 = vsyncmov %s2950
  %s2952 = vpop.sfrf %2951
  %p2953 = scmp.eq.s32.totalorder %s2952, 0
  %p2954 = pneg %p2953
  %2956 = shalt.err (%p2954)

</llo_original>
